<compile_context>
chip_gen: v7x
topology: tpu7x:2x2x1
jax: 0.10.0
libtpu: 0.0.40
codegen_flags: <defaults>
</compile_context>

<pallas_src>
import jax
import jax.numpy as jnp
from jax.experimental import pallas as pl
from jax.experimental.pallas import tpu as pltpu

# ---- model hyper-params (small, consistent with the module's structure) ----
DIM = 32          # token hidden size
HEADS = 4
DIM_HEAD = 8
FF_MULT = 4
FF_INNER = FF_MULT * DIM                      # 128
ATTN_INNER = HEADS * DIM_HEAD                 # 32
FUSED_DIM = ATTN_INNER + 2 * DIM_HEAD + 2 * FF_INNER   # 304
SCALE = DIM_HEAD ** -0.5
LN_EPS = 1e-5
LAYERS = 2        # module default is 4; kept small for the demo

BATCH = 2
N_QUERY = 8       # query_tokens sequence length
N_CTX = 16        # context_tokens sequence length


# ----------------------------- shared math helpers -----------------------------
def _layernorm(x, gamma, beta):
    mu = jnp.mean(x, axis=-1, keepdims=True)
    var = jnp.mean(jnp.square(x - mu), axis=-1, keepdims=True)
    return (x - mu) * jax.lax.rsqrt(var + LN_EPS) * gamma + beta


def _softmax_last(sim):          # exact softmax (reference only)
    sim = sim - jnp.max(sim, axis=-1, keepdims=True)
    e = jnp.exp(sim)
    return e / jnp.sum(e, axis=-1, keepdims=True)


# ------------------------------ fused Pallas kernel -----------------------------
def _make_kernel(N, M, n_layers):
    def merge_heads(t):
        # (N, HEADS*DIM_HEAD) -> (HEADS*N, DIM_HEAD); row h*N+n = head h, query n.
        return jnp.concatenate(
            [t[:, h * DIM_HEAD:(h + 1) * DIM_HEAD] for h in range(HEADS)], axis=0)

    def unmerge_heads(t):
        # (HEADS*N, DIM_HEAD) -> (N, HEADS*DIM_HEAD)
        return jnp.concatenate(
            [t[h * N:(h + 1) * N, :] for h in range(HEADS)], axis=-1)

    def kernel(x_ref, ctx_ref, mask_ref, cosq_ref, sinq_ref, cosk_ref, sink_ref,
               c_lng_ref, c_lnb_ref, c_win_ref, c_wkv_ref, c_wout_ref,
               s_lng_ref, s_lnb_ref, s_wf_ref, s_wout_ref, o_ref):
        x = x_ref[...]                 # (N, DIM)       one batch per grid step
        ctx = ctx_ref[...]             # (M, DIM)
        mask = mask_ref[...]           # (HEADS*N, M)   additive, merged-head layout
        cos_q = cosq_ref[...]          # (HEADS*N, DIM_HEAD), SCALE folded in
        sin_q = sinq_ref[...]
        cos_k = cosk_ref[...]          # (N, DIM_HEAD)
        sin_k = sink_ref[...]

        def rope(t, cs, sn):
            # rotate_half via static slices + concat (kept over pltpu.roll for
            # robustness on the 8-wide head axis).
            half = DIM_HEAD // 2
            rot = jnp.concatenate([-t[:, half:], t[:, :half]], axis=-1)
            return t * cs + rot * sn

        def attention(q_m, k, v, mask_add):
            # q_m: (HEADS*N, DIM_HEAD); k, v: (M, DIM_HEAD) shared by all heads.
            sim = jnp.einsum("nd,md->nm", q_m, k,
                             preferred_element_type=jnp.float32)
            if mask_add is not None:
                sim = sim + mask_add
            sim = sim - jnp.max(sim, axis=-1, keepdims=True)
            e = jnp.exp(sim)
            inv = pl.reciprocal(jnp.sum(e, axis=-1, keepdims=True), approx=True)
            attn = e * inv
            out_m = jnp.dot(attn, v, preferred_element_type=jnp.float32)
            return unmerge_heads(out_m)          # (N, ATTN_INNER), in registers

        # Loop-invariant KV projection hoisted: one matmul covers every layer.
        kv_all = jnp.dot(ctx, c_wkv_ref[...],
                         preferred_element_type=jnp.float32)   # (M, L*2*DIM_HEAD)

        for l in range(n_layers):                # static unroll over layers
            # ---------- Residual(CrossAttention, parallel_ff=True) ----------
            xn = _layernorm(x, c_lng_ref[l], c_lnb_ref[l])
            proj = jnp.dot(xn, c_win_ref[l],
                           preferred_element_type=jnp.float32)  # (N, 32 + 256)
            q = proj[:, :ATTN_INNER]                             # already * SCALE
            ffh = proj[:, ATTN_INNER:]
            kv = kv_all[:, l * 2 * DIM_HEAD:(l + 1) * 2 * DIM_HEAD]
            k = kv[:, :DIM_HEAD]
            v = kv[:, DIM_HEAD:]
            att = attention(merge_heads(q), k, v, mask)
            ff = jax.nn.silu(ffh[:, FF_INNER:]) * ffh[:, :FF_INNER]   # SwiGLU
            x = jnp.dot(jnp.concatenate([att, ff], axis=-1), c_wout_ref[l],
                        preferred_element_type=jnp.float32) + x

            # ---------- Residual(ParallelTransformerBlock) ----------
            xn = _layernorm(x, s_lng_ref[l], s_lnb_ref[l])
            fused = jnp.dot(xn, s_wf_ref[l],
                            preferred_element_type=jnp.float32)  # (N, 304)
            q = fused[:, :ATTN_INNER]
            k = fused[:, ATTN_INNER:ATTN_INNER + DIM_HEAD]
            v = fused[:, ATTN_INNER + DIM_HEAD:ATTN_INNER + 2 * DIM_HEAD]
            ffp = fused[:, ATTN_INNER + 2 * DIM_HEAD:]
            q_m = rope(merge_heads(q), cos_q, sin_q)     # RoPE once, SCALE folded
            k_r = rope(k, cos_k, sin_k)
            att = attention(q_m, k_r, v, None)
            ffv = jax.nn.silu(ffp[:, FF_INNER:]) * ffp[:, :FF_INNER]  # SwiGLU
            x = jnp.dot(jnp.concatenate([att, ffv], axis=-1), s_wout_ref[l],
                        preferred_element_type=jnp.float32) + x

        o_ref[...] = x

    return kernel


# ------------------------------ parameter setup -------------------------------
def rotary_cos_sin(n):
    inv_freq = 1.0 / (10000.0 ** (jnp.arange(0, DIM_HEAD, 2, dtype=jnp.float32) / DIM_HEAD))
    seq = jnp.arange(n, dtype=jnp.float32)
    freqs = seq[:, None] * inv_freq[None, :]
    pos = jnp.concatenate([freqs, freqs], axis=-1)          # (n, dim_head)
    return jnp.cos(pos), jnp.sin(pos)


def init_layer_params(key):
    ks = jax.random.split(key, 8)
    std = 0.02
    cross = {
        "ln_g": jnp.ones((1, DIM), jnp.float32),
        "ln_b": jnp.zeros((1, DIM), jnp.float32),
        "wq": jax.random.normal(ks[0], (DIM, ATTN_INNER), jnp.float32) * std,
        "wkv": jax.random.normal(ks[1], (DIM, 2 * DIM_HEAD), jnp.float32) * std,
        "wo": jax.random.normal(ks[2], (ATTN_INNER, DIM), jnp.float32) * std,
        "wff1": jax.random.normal(ks[3], (DIM, 2 * FF_INNER), jnp.float32) * std,
        "wff2": jax.random.normal(ks[4], (FF_INNER, DIM), jnp.float32) * std,
    }
    selfp = {
        "ln_g": jnp.ones((1, DIM), jnp.float32),
        "ln_b": jnp.zeros((1, DIM), jnp.float32),
        "wf": jax.random.normal(ks[5], (DIM, FUSED_DIM), jnp.float32) * std,
        "wao": jax.random.normal(ks[6], (ATTN_INNER, DIM), jnp.float32) * std,
        "wfo": jax.random.normal(ks[7], (FF_INNER, DIM), jnp.float32) * std,
    }
    return cross, selfp


# ------------------------------ fused forward wrapper --------------------------
def cross_model_forward(query_tokens, context_tokens, mask, layers):
    B, N, _ = query_tokens.shape
    M = context_tokens.shape[1]
    n_layers = len(layers)

    cos, sin = rotary_cos_sin(N)                        # (N, DIM_HEAD)
    cos_q = jnp.tile(cos * SCALE, (HEADS, 1))           # merged-head layout, SCALE folded
    sin_q = jnp.tile(sin * SCALE, (HEADS, 1))

    # Additive mask pre-expanded to the merged-head layout (B*HEADS*N, M).
    mask_exp = jnp.broadcast_to(mask[:, None], (B, HEADS, N, M)).reshape(B * HEADS * N, M)

    cross_ps = [c for c, _ in layers]
    self_ps = [s for _, s in layers]

    # Host-side weight fusion / stacking (one-time preprocessing).
    c_ln_g = jnp.stack([p["ln_g"] for p in cross_ps])
    c_ln_b = jnp.stack([p["ln_b"] for p in cross_ps])
    c_w_in = jnp.stack([jnp.concatenate([p["wq"] * SCALE, p["wff1"]], axis=1)
                        for p in cross_ps])                       # (L, DIM, 288)
    c_wkv_all = jnp.concatenate([p["wkv"] for p in cross_ps], axis=1)   # (DIM, L*16)
    c_w_out = jnp.stack([jnp.concatenate([p["wo"], p["wff2"]], axis=0)
                         for p in cross_ps])                      # (L, 160, DIM)
    s_ln_g = jnp.stack([p["ln_g"] for p in self_ps])
    s_ln_b = jnp.stack([p["ln_b"] for p in self_ps])
    s_wf = jnp.stack([p["wf"] for p in self_ps])                  # (L, DIM, 304)
    s_w_out = jnp.stack([jnp.concatenate([p["wao"], p["wfo"]], axis=0)
                         for p in self_ps])                       # (L, 160, DIM)

    inputs = [
        query_tokens.reshape(B * N, DIM),
        context_tokens.reshape(B * M, DIM),
        mask_exp, cos_q, sin_q, cos, sin,
        c_ln_g, c_ln_b, c_w_in, c_wkv_all, c_w_out,
        s_ln_g, s_ln_b, s_wf, s_w_out,
    ]

    def const_spec(a):
        nd = a.ndim
        return pl.BlockSpec(a.shape, lambda b, _nd=nd: (0,) * _nd)

    in_specs = [
        pl.BlockSpec((N, DIM), lambda b: (b, 0)),            # x, per-batch slab
        pl.BlockSpec((M, DIM), lambda b: (b, 0)),            # ctx, per-batch slab
        pl.BlockSpec((HEADS * N, M), lambda b: (b, 0)),      # mask, per-batch slab
        const_spec(cos_q), const_spec(sin_q), const_spec(cos), const_spec(sin),
        const_spec(c_ln_g), const_spec(c_ln_b), const_spec(c_w_in),
        const_spec(c_wkv_all), const_spec(c_w_out),
        const_spec(s_ln_g), const_spec(s_ln_b), const_spec(s_wf), const_spec(s_w_out),
    ]

    out = pl.pallas_call(
        _make_kernel(N, M, n_layers),
        out_shape=jax.ShapeDtypeStruct((B * N, DIM), jnp.float32),
        grid=(B,),                                   # batch-parallel (2 TCs on v7x)
        in_specs=in_specs,
        out_specs=pl.BlockSpec((N, DIM), lambda b: (b, 0)),
        compiler_params=pltpu.CompilerParams(
            dimension_semantics=("parallel",)),
    )(*inputs)
    return out.reshape(B, N, DIM)


# ---------------------------- pure-JAX reference ------------------------------
def _cross_ref(x, ctx, mask, p):
    xn = _layernorm(x, p["ln_g"][0], p["ln_b"][0])
    q = (xn @ p["wq"]) * SCALE
    kv = ctx @ p["wkv"]
    k, v = kv[..., :DIM_HEAD], kv[..., DIM_HEAD:]
    b, n, _ = q.shape
    qh = q.reshape(b, n, HEADS, DIM_HEAD).transpose(0, 2, 1, 3)
    sim = jnp.einsum("bhid,bjd->bhij", qh, k) + mask[:, None]
    attn = _softmax_last(sim)
    out = jnp.einsum("bhij,bjd->bhid", attn, v).transpose(0, 2, 1, 3).reshape(b, n, -1)
    out = out @ p["wo"]
    ffh = xn @ p["wff1"]
    ff = jax.nn.silu(ffh[..., FF_INNER:]) * ffh[..., :FF_INNER]
    return out + ff @ p["wff2"] + x


def _self_ref(x, cos, sin, p):
    xn = _layernorm(x, p["ln_g"][0], p["ln_b"][0])
    fused = xn @ p["wf"]
    q = fused[..., :ATTN_INNER]
    k = fused[..., ATTN_INNER:ATTN_INNER + DIM_HEAD]
    v = fused[..., ATTN_INNER + DIM_HEAD:ATTN_INNER + 2 * DIM_HEAD]
    ff = fused[..., ATTN_INNER + 2 * DIM_HEAD:]

    def rope(t):
        t1 = t[..., :DIM_HEAD // 2]
        t2 = t[..., DIM_HEAD // 2:]
        return t * cos + jnp.concatenate([-t2, t1], axis=-1) * sin

    b, n, _ = q.shape
    qh = rope(q.reshape(b, n, HEADS, DIM_HEAD).transpose(0, 2, 1, 3)) * SCALE
    k = rope(k)
    sim = jnp.einsum("bhid,bjd->bhij", qh, k)
    attn = _softmax_last(sim)
    out = jnp.einsum("bhij,bjd->bhid", attn, v).transpose(0, 2, 1, 3).reshape(b, n, -1)
    ffv = jax.nn.silu(ff[..., FF_INNER:]) * ff[..., :FF_INNER]
    return out @ p["wao"] + ffv @ p["wfo"] + x


def cross_model_reference(query_tokens, context_tokens, mask, layers):
    cos, sin = rotary_cos_sin(query_tokens.shape[1])
    x = query_tokens
    for cross_p, self_p in layers:
        x = _cross_ref(x, context_tokens, mask, cross_p)
        x = _self_ref(x, cos, sin, self_p)
    return x


# ------------------------------------ main ------------------------------------
if __name__ == "__main__":
    key = jax.random.PRNGKey(0)
    k_x, k_c, k_m, k_p = jax.random.split(key, 4)

    query_tokens = jax.random.normal(k_x, (BATCH, N_QUERY, DIM), jnp.float32)
    context_tokens = jax.random.normal(k_c, (BATCH, N_CTX, DIM), jnp.float32)
    # additive attention mask (0 = keep, large negative = drop)
    keep = jax.random.bernoulli(k_m, 0.8, (BATCH, N_QUERY, N_CTX))
    mask = jnp.where(keep, 0.0, -1e4).astype(jnp.float32)

    layer_keys = jax.random.split(k_p, LAYERS)
    layers = [init_layer_params(lk) for lk in layer_keys]

    out = jax.block_until_ready(
        cross_model_forward(query_tokens, context_tokens, mask, layers))
    ref = jax.block_until_ready(
        cross_model_reference(query_tokens, context_tokens, mask, layers))

    assert out.shape == (BATCH, N_QUERY, DIM)
    max_err = float(jnp.max(jnp.abs(out - ref)))
    assert jnp.allclose(out, ref, rtol=2e-3, atol=2e-3), max_err

    print("KERNEL_OK")
</pallas_src>

<mosaic_0001>
module attributes {stable_mosaic.version = 11 : i64} {
  func.func @kernel(%arg0: i32, %arg1: memref<8x32xf32, #tpu.memory_space<vmem>>, %arg2: memref<16x32xf32, #tpu.memory_space<vmem>>, %arg3: memref<32x16xf32, #tpu.memory_space<vmem>>, %arg4: memref<32x8xf32, #tpu.memory_space<vmem>>, %arg5: memref<32x8xf32, #tpu.memory_space<vmem>>, %arg6: memref<8x8xf32, #tpu.memory_space<vmem>>, %arg7: memref<8x8xf32, #tpu.memory_space<vmem>>, %arg8: memref<2x1x32xf32, #tpu.memory_space<vmem>>, %arg9: memref<2x1x32xf32, #tpu.memory_space<vmem>>, %arg10: memref<2x32x288xf32, #tpu.memory_space<vmem>>, %arg11: memref<32x32xf32, #tpu.memory_space<vmem>>, %arg12: memref<2x160x32xf32, #tpu.memory_space<vmem>>, %arg13: memref<2x1x32xf32, #tpu.memory_space<vmem>>, %arg14: memref<2x1x32xf32, #tpu.memory_space<vmem>>, %arg15: memref<2x32x304xf32, #tpu.memory_space<vmem>>, %arg16: memref<2x160x32xf32, #tpu.memory_space<vmem>>, %arg17: memref<8x32xf32, #tpu.memory_space<vmem>>) attributes {dimension_semantics = [#tpu.dimension_semantics<parallel>], iteration_bounds = array<i64: 2>, scalar_prefetch = 0 : i64, scratch_operands = 0 : i64, tpu.core_type = #tpu.core_type<tc>, window_params = [{transform_indices = @transform_0, window_bounds = array<i64: 8, 32>}, {transform_indices = @transform_1, window_bounds = array<i64: 16, 32>}, {transform_indices = @transform_2, window_bounds = array<i64: 32, 16>}, {pipeline_mode = #tpu.pipeline_mode<synchronous>, transform_indices = @transform_3, window_bounds = array<i64: 32, 8>}, {pipeline_mode = #tpu.pipeline_mode<synchronous>, transform_indices = @transform_4, window_bounds = array<i64: 32, 8>}, {pipeline_mode = #tpu.pipeline_mode<synchronous>, transform_indices = @transform_5, window_bounds = array<i64: 8, 8>}, {pipeline_mode = #tpu.pipeline_mode<synchronous>, transform_indices = @transform_6, window_bounds = array<i64: 8, 8>}, {pipeline_mode = #tpu.pipeline_mode<synchronous>, transform_indices = @transform_7, window_bounds = array<i64: 2, 1, 32>}, {pipeline_mode = #tpu.pipeline_mode<synchronous>, transform_indices = @transform_8, window_bounds = array<i64: 2, 1, 32>}, {pipeline_mode = #tpu.pipeline_mode<synchronous>, transform_indices = @transform_9, window_bounds = array<i64: 2, 32, 288>}, {pipeline_mode = #tpu.pipeline_mode<synchronous>, transform_indices = @transform_10, window_bounds = array<i64: 32, 32>}, {pipeline_mode = #tpu.pipeline_mode<synchronous>, transform_indices = @transform_11, window_bounds = array<i64: 2, 160, 32>}, {pipeline_mode = #tpu.pipeline_mode<synchronous>, transform_indices = @transform_12, window_bounds = array<i64: 2, 1, 32>}, {pipeline_mode = #tpu.pipeline_mode<synchronous>, transform_indices = @transform_13, window_bounds = array<i64: 2, 1, 32>}, {pipeline_mode = #tpu.pipeline_mode<synchronous>, transform_indices = @transform_14, window_bounds = array<i64: 2, 32, 304>}, {pipeline_mode = #tpu.pipeline_mode<synchronous>, transform_indices = @transform_15, window_bounds = array<i64: 2, 160, 32>}, {transform_indices = @transform_16, window_bounds = array<i64: 8, 32>}]} {
    %c0 = arith.constant 0 : index
    %c0_0 = arith.constant 0 : index
    %0 = vector.load %arg1[%c0, %c0_0] : memref<8x32xf32, #tpu.memory_space<vmem>>, vector<8x32xf32>
    %c0_1 = arith.constant 0 : index
    %c0_2 = arith.constant 0 : index
    %1 = vector.load %arg2[%c0_1, %c0_2] : memref<16x32xf32, #tpu.memory_space<vmem>>, vector<16x32xf32>
    %c0_3 = arith.constant 0 : index
    %c0_4 = arith.constant 0 : index
    %2 = vector.load %arg3[%c0_3, %c0_4] : memref<32x16xf32, #tpu.memory_space<vmem>>, vector<32x16xf32>
    %c0_5 = arith.constant 0 : index
    %c0_6 = arith.constant 0 : index
    %3 = vector.load %arg4[%c0_5, %c0_6] : memref<32x8xf32, #tpu.memory_space<vmem>>, vector<32x8xf32>
    %c0_7 = arith.constant 0 : index
    %c0_8 = arith.constant 0 : index
    %4 = vector.load %arg5[%c0_7, %c0_8] : memref<32x8xf32, #tpu.memory_space<vmem>>, vector<32x8xf32>
    %c0_9 = arith.constant 0 : index
    %c0_10 = arith.constant 0 : index
    %5 = vector.load %arg6[%c0_9, %c0_10] : memref<8x8xf32, #tpu.memory_space<vmem>>, vector<8x8xf32>
    %c0_11 = arith.constant 0 : index
    %c0_12 = arith.constant 0 : index
    %6 = vector.load %arg7[%c0_11, %c0_12] : memref<8x8xf32, #tpu.memory_space<vmem>>, vector<8x8xf32>
    %c0_13 = arith.constant 0 : index
    %c0_14 = arith.constant 0 : index
    %7 = vector.load %arg11[%c0_13, %c0_14] : memref<32x32xf32, #tpu.memory_space<vmem>>, vector<32x32xf32>
    %cst = arith.constant dense<0.000000e+00> : vector<16x32xf32>
    %8 = tpu.matmul %1, %7, %cst {dimension_numbers = #tpu.dot_dimension_numbers<[1], [0], [0], [1], [0, 0, 1, 1], [], []>} : vector<16x32xf32>, vector<32x32xf32>, vector<16x32xf32> -> vector<16x32xf32>
    %c0_15 = arith.constant 0 : index
    %c0_16 = arith.constant 0 : index
    %c0_17 = arith.constant 0 : index
    %9 = vector.load %arg8[%c0_15, %c0_16, %c0_17] : memref<2x1x32xf32, #tpu.memory_space<vmem>>, vector<1x1x32xf32>
    %10 = vector.shape_cast %9 : vector<1x1x32xf32> to vector<1x32xf32>
    %c0_18 = arith.constant 0 : index
    %c0_19 = arith.constant 0 : index
    %c0_20 = arith.constant 0 : index
    %11 = vector.load %arg9[%c0_18, %c0_19, %c0_20] : memref<2x1x32xf32, #tpu.memory_space<vmem>>, vector<1x1x32xf32>
    %12 = vector.shape_cast %11 : vector<1x1x32xf32> to vector<1x32xf32>
    %cst_21 = arith.constant dense<0.000000e+00> : vector<8xf32>
    %13 = vector.multi_reduction <add>, %0, %cst_21 [1] : vector<8x32xf32> to vector<8xf32>
    %14 = vector.shape_cast %13 : vector<8xf32> to vector<8x1xf32>
    %cst_22 = arith.constant 3.200000e+01 : f32
    %15 = vector.broadcast %cst_22 : f32 to vector<8x1xf32>
    %16 = arith.divf %14, %15 : vector<8x1xf32>
    %17 = vector.broadcast %16 : vector<8x1xf32> to vector<8x32xf32>
    %18 = arith.subf %0, %17 : vector<8x32xf32>
    %19 = arith.mulf %18, %18 : vector<8x32xf32>
    %cst_23 = arith.constant dense<0.000000e+00> : vector<8xf32>
    %20 = vector.multi_reduction <add>, %19, %cst_23 [1] : vector<8x32xf32> to vector<8xf32>
    %21 = vector.shape_cast %20 : vector<8xf32> to vector<8x1xf32>
    %cst_24 = arith.constant 3.200000e+01 : f32
    %22 = vector.broadcast %cst_24 : f32 to vector<8x1xf32>
    %23 = arith.divf %21, %22 : vector<8x1xf32>
    %24 = vector.broadcast %16 : vector<8x1xf32> to vector<8x32xf32>
    %25 = arith.subf %0, %24 : vector<8x32xf32>
    %cst_25 = arith.constant 9.99999974E-6 : f32
    %26 = vector.broadcast %cst_25 : f32 to vector<8x1xf32>
    %27 = arith.addf %23, %26 : vector<8x1xf32>
    %28 = math.rsqrt %27 : vector<8x1xf32>
    %29 = vector.broadcast %28 : vector<8x1xf32> to vector<8x32xf32>
    %30 = arith.mulf %25, %29 : vector<8x32xf32>
    %31 = vector.broadcast %10 : vector<1x32xf32> to vector<8x32xf32>
    %32 = arith.mulf %30, %31 : vector<8x32xf32>
    %33 = vector.broadcast %12 : vector<1x32xf32> to vector<8x32xf32>
    %34 = arith.addf %32, %33 : vector<8x32xf32>
    %c0_26 = arith.constant 0 : index
    %c0_27 = arith.constant 0 : index
    %c0_28 = arith.constant 0 : index
    %35 = vector.load %arg10[%c0_26, %c0_27, %c0_28] : memref<2x32x288xf32, #tpu.memory_space<vmem>>, vector<1x32x288xf32>
    %36 = vector.shape_cast %35 : vector<1x32x288xf32> to vector<32x288xf32>
    %cst_29 = arith.constant dense<0.000000e+00> : vector<8x288xf32>
    %37 = tpu.matmul %34, %36, %cst_29 {dimension_numbers = #tpu.dot_dimension_numbers<[1], [0], [0], [1], [0, 0, 1, 1], [], []>} : vector<8x32xf32>, vector<32x288xf32>, vector<8x288xf32> -> vector<8x288xf32>
    %38 = vector.extract_strided_slice %37 {offsets = [0, 0], sizes = [8, 32], strides = [1, 1]} : vector<8x288xf32> to vector<8x32xf32>
    %39 = vector.extract_strided_slice %37 {offsets = [0, 32], sizes = [8, 256], strides = [1, 1]} : vector<8x288xf32> to vector<8x256xf32>
    %40 = vector.extract_strided_slice %8 {offsets = [0, 0], sizes = [16, 16], strides = [1, 1]} : vector<16x32xf32> to vector<16x16xf32>
    %41 = vector.extract_strided_slice %40 {offsets = [0, 0], sizes = [16, 8], strides = [1, 1]} : vector<16x16xf32> to vector<16x8xf32>
    %42 = vector.extract_strided_slice %40 {offsets = [0, 8], sizes = [16, 8], strides = [1, 1]} : vector<16x16xf32> to vector<16x8xf32>
    %43 = vector.extract_strided_slice %38 {offsets = [0, 0], sizes = [8, 8], strides = [1, 1]} : vector<8x32xf32> to vector<8x8xf32>
    %44 = vector.extract_strided_slice %38 {offsets = [0, 8], sizes = [8, 8], strides = [1, 1]} : vector<8x32xf32> to vector<8x8xf32>
    %45 = vector.extract_strided_slice %38 {offsets = [0, 16], sizes = [8, 8], strides = [1, 1]} : vector<8x32xf32> to vector<8x8xf32>
    %46 = vector.extract_strided_slice %38 {offsets = [0, 24], sizes = [8, 8], strides = [1, 1]} : vector<8x32xf32> to vector<8x8xf32>
    %47 = tpu.concatenate %43, %44, %45, %46 in 0 : vector<8x8xf32>, vector<8x8xf32>, vector<8x8xf32>, vector<8x8xf32> -> vector<32x8xf32>
    "tpu.trace_start"() <{level = 10 : i32, message = "nd,md->nm"}> : () -> ()
    %cst_30 = arith.constant dense<0.000000e+00> : vector<32x16xf32>
    %48 = tpu.matmul %47, %41, %cst_30 {dimension_numbers = #tpu.dot_dimension_numbers<[1], [1], [0], [0], [0, 0, 1, 0], [], []>} : vector<32x8xf32>, vector<16x8xf32>, vector<32x16xf32> -> vector<32x16xf32>
    "tpu.trace_stop"() : () -> ()
    %49 = arith.addf %48, %2 : vector<32x16xf32>
    %cst_31 = arith.constant dense<0xFF800000> : vector<32xf32>
    %50 = vector.multi_reduction <maximumf>, %49, %cst_31 [1] : vector<32x16xf32> to vector<32xf32>
    %51 = vector.shape_cast %50 : vector<32xf32> to vector<32x1xf32>
    %52 = vector.broadcast %51 : vector<32x1xf32> to vector<32x16xf32>
    %53 = arith.subf %49, %52 : vector<32x16xf32>
    %54 = math.exp %53 : vector<32x16xf32>
    %cst_32 = arith.constant dense<0.000000e+00> : vector<32xf32>
    %55 = vector.multi_reduction <add>, %54, %cst_32 [1] : vector<32x16xf32> to vector<32xf32>
    %56 = vector.shape_cast %55 : vector<32xf32> to vector<32x1xf32>
    %57 = tpu.reciprocal %56 {approx = true} : vector<32x1xf32> -> vector<32x1xf32>
    %58 = vector.broadcast %57 : vector<32x1xf32> to vector<32x16xf32>
    %59 = arith.mulf %54, %58 : vector<32x16xf32>
    %cst_33 = arith.constant dense<0.000000e+00> : vector<32x8xf32>
    %60 = tpu.matmul %59, %42, %cst_33 {dimension_numbers = #tpu.dot_dimension_numbers<[1], [0], [0], [1], [0, 0, 1, 1], [], []>} : vector<32x16xf32>, vector<16x8xf32>, vector<32x8xf32> -> vector<32x8xf32>
    %61 = vector.extract_strided_slice %60 {offsets = [0, 0], sizes = [8, 8], strides = [1, 1]} : vector<32x8xf32> to vector<8x8xf32>
    %62 = vector.extract_strided_slice %60 {offsets = [8, 0], sizes = [8, 8], strides = [1, 1]} : vector<32x8xf32> to vector<8x8xf32>
    %63 = vector.extract_strided_slice %60 {offsets = [16, 0], sizes = [8, 8], strides = [1, 1]} : vector<32x8xf32> to vector<8x8xf32>
    %64 = vector.extract_strided_slice %60 {offsets = [24, 0], sizes = [8, 8], strides = [1, 1]} : vector<32x8xf32> to vector<8x8xf32>
    %65 = tpu.concatenate %61, %62, %63, %64 in 1 : vector<8x8xf32>, vector<8x8xf32>, vector<8x8xf32>, vector<8x8xf32> -> vector<8x32xf32>
    %66 = vector.extract_strided_slice %39 {offsets = [0, 128], sizes = [8, 128], strides = [1, 1]} : vector<8x256xf32> to vector<8x128xf32>
    %67 = arith.negf %66 : vector<8x128xf32>
    %68 = math.exp %67 : vector<8x128xf32>
    %cst_34 = arith.constant 1.000000e+00 : f32
    %69 = vector.broadcast %cst_34 : f32 to vector<8x128xf32>
    %70 = arith.addf %69, %68 : vector<8x128xf32>
    %71 = arith.divf %69, %70 : vector<8x128xf32>
    %72 = arith.mulf %66, %71 : vector<8x128xf32>
    %73 = vector.extract_strided_slice %39 {offsets = [0, 0], sizes = [8, 128], strides = [1, 1]} : vector<8x256xf32> to vector<8x128xf32>
    %74 = arith.mulf %72, %73 : vector<8x128xf32>
    %75 = tpu.concatenate %65, %74 in 1 : vector<8x32xf32>, vector<8x128xf32> -> vector<8x160xf32>
    %c0_35 = arith.constant 0 : index
    %c0_36 = arith.constant 0 : index
    %c0_37 = arith.constant 0 : index
    %76 = vector.load %arg12[%c0_35, %c0_36, %c0_37] : memref<2x160x32xf32, #tpu.memory_space<vmem>>, vector<1x160x32xf32>
    %77 = vector.shape_cast %76 : vector<1x160x32xf32> to vector<160x32xf32>
    %cst_38 = arith.constant dense<0.000000e+00> : vector<8x32xf32>
    %78 = tpu.matmul %75, %77, %cst_38 {dimension_numbers = #tpu.dot_dimension_numbers<[1], [0], [0], [1], [0, 0, 1, 1], [], []>} : vector<8x160xf32>, vector<160x32xf32>, vector<8x32xf32> -> vector<8x32xf32>
    %79 = arith.addf %78, %0 : vector<8x32xf32>
    %c0_39 = arith.constant 0 : index
    %c0_40 = arith.constant 0 : index
    %c0_41 = arith.constant 0 : index
    %80 = vector.load %arg13[%c0_39, %c0_40, %c0_41] : memref<2x1x32xf32, #tpu.memory_space<vmem>>, vector<1x1x32xf32>
    %81 = vector.shape_cast %80 : vector<1x1x32xf32> to vector<1x32xf32>
    %c0_42 = arith.constant 0 : index
    %c0_43 = arith.constant 0 : index
    %c0_44 = arith.constant 0 : index
    %82 = vector.load %arg14[%c0_42, %c0_43, %c0_44] : memref<2x1x32xf32, #tpu.memory_space<vmem>>, vector<1x1x32xf32>
    %83 = vector.shape_cast %82 : vector<1x1x32xf32> to vector<1x32xf32>
    %cst_45 = arith.constant dense<0.000000e+00> : vector<8xf32>
    %84 = vector.multi_reduction <add>, %79, %cst_45 [1] : vector<8x32xf32> to vector<8xf32>
    %85 = vector.shape_cast %84 : vector<8xf32> to vector<8x1xf32>
    %cst_46 = arith.constant 3.200000e+01 : f32
    %86 = vector.broadcast %cst_46 : f32 to vector<8x1xf32>
    %87 = arith.divf %85, %86 : vector<8x1xf32>
    %88 = vector.broadcast %87 : vector<8x1xf32> to vector<8x32xf32>
    %89 = arith.subf %79, %88 : vector<8x32xf32>
    %90 = arith.mulf %89, %89 : vector<8x32xf32>
    %cst_47 = arith.constant dense<0.000000e+00> : vector<8xf32>
    %91 = vector.multi_reduction <add>, %90, %cst_47 [1] : vector<8x32xf32> to vector<8xf32>
    %92 = vector.shape_cast %91 : vector<8xf32> to vector<8x1xf32>
    %cst_48 = arith.constant 3.200000e+01 : f32
    %93 = vector.broadcast %cst_48 : f32 to vector<8x1xf32>
    %94 = arith.divf %92, %93 : vector<8x1xf32>
    %95 = vector.broadcast %87 : vector<8x1xf32> to vector<8x32xf32>
    %96 = arith.subf %79, %95 : vector<8x32xf32>
    %cst_49 = arith.constant 9.99999974E-6 : f32
    %97 = vector.broadcast %cst_49 : f32 to vector<8x1xf32>
    %98 = arith.addf %94, %97 : vector<8x1xf32>
    %99 = math.rsqrt %98 : vector<8x1xf32>
    %100 = vector.broadcast %99 : vector<8x1xf32> to vector<8x32xf32>
    %101 = arith.mulf %96, %100 : vector<8x32xf32>
    %102 = vector.broadcast %81 : vector<1x32xf32> to vector<8x32xf32>
    %103 = arith.mulf %101, %102 : vector<8x32xf32>
    %104 = vector.broadcast %83 : vector<1x32xf32> to vector<8x32xf32>
    %105 = arith.addf %103, %104 : vector<8x32xf32>
    %c0_50 = arith.constant 0 : index
    %c0_51 = arith.constant 0 : index
    %c0_52 = arith.constant 0 : index
    %106 = vector.load %arg15[%c0_50, %c0_51, %c0_52] : memref<2x32x304xf32, #tpu.memory_space<vmem>>, vector<1x32x304xf32>
    %107 = vector.shape_cast %106 : vector<1x32x304xf32> to vector<32x304xf32>
    %cst_53 = arith.constant dense<0.000000e+00> : vector<8x304xf32>
    %108 = tpu.matmul %105, %107, %cst_53 {dimension_numbers = #tpu.dot_dimension_numbers<[1], [0], [0], [1], [0, 0, 1, 1], [], []>} : vector<8x32xf32>, vector<32x304xf32>, vector<8x304xf32> -> vector<8x304xf32>
    %109 = vector.extract_strided_slice %108 {offsets = [0, 0], sizes = [8, 32], strides = [1, 1]} : vector<8x304xf32> to vector<8x32xf32>
    %110 = vector.extract_strided_slice %108 {offsets = [0, 32], sizes = [8, 8], strides = [1, 1]} : vector<8x304xf32> to vector<8x8xf32>
    %111 = vector.extract_strided_slice %108 {offsets = [0, 40], sizes = [8, 8], strides = [1, 1]} : vector<8x304xf32> to vector<8x8xf32>
    %112 = vector.extract_strided_slice %108 {offsets = [0, 48], sizes = [8, 256], strides = [1, 1]} : vector<8x304xf32> to vector<8x256xf32>
    %113 = vector.extract_strided_slice %109 {offsets = [0, 0], sizes = [8, 8], strides = [1, 1]} : vector<8x32xf32> to vector<8x8xf32>
    %114 = vector.extract_strided_slice %109 {offsets = [0, 8], sizes = [8, 8], strides = [1, 1]} : vector<8x32xf32> to vector<8x8xf32>
    %115 = vector.extract_strided_slice %109 {offsets = [0, 16], sizes = [8, 8], strides = [1, 1]} : vector<8x32xf32> to vector<8x8xf32>
    %116 = vector.extract_strided_slice %109 {offsets = [0, 24], sizes = [8, 8], strides = [1, 1]} : vector<8x32xf32> to vector<8x8xf32>
    %117 = tpu.concatenate %113, %114, %115, %116 in 0 : vector<8x8xf32>, vector<8x8xf32>, vector<8x8xf32>, vector<8x8xf32> -> vector<32x8xf32>
    %118 = vector.extract_strided_slice %117 {offsets = [0, 4], sizes = [32, 4], strides = [1, 1]} : vector<32x8xf32> to vector<32x4xf32>
    %cst_54 = arith.constant 0.000000e+00 : f32
    %119 = vector.broadcast %cst_54 : f32 to vector<32x4xf32>
    %120 = arith.subf %119, %118 : vector<32x4xf32>
    %121 = vector.extract_strided_slice %117 {offsets = [0, 0], sizes = [32, 4], strides = [1, 1]} : vector<32x8xf32> to vector<32x4xf32>
    %122 = tpu.concatenate %120, %121 in 1 : vector<32x4xf32>, vector<32x4xf32> -> vector<32x8xf32>
    %123 = arith.mulf %117, %3 : vector<32x8xf32>
    %124 = arith.mulf %122, %4 : vector<32x8xf32>
    %125 = arith.addf %123, %124 : vector<32x8xf32>
    %126 = vector.extract_strided_slice %110 {offsets = [0, 4], sizes = [8, 4], strides = [1, 1]} : vector<8x8xf32> to vector<8x4xf32>
    %cst_55 = arith.constant 0.000000e+00 : f32
    %127 = vector.broadcast %cst_55 : f32 to vector<8x4xf32>
    %128 = arith.subf %127, %126 : vector<8x4xf32>
    %129 = vector.extract_strided_slice %110 {offsets = [0, 0], sizes = [8, 4], strides = [1, 1]} : vector<8x8xf32> to vector<8x4xf32>
    %130 = tpu.concatenate %128, %129 in 1 : vector<8x4xf32>, vector<8x4xf32> -> vector<8x8xf32>
    %131 = arith.mulf %110, %5 : vector<8x8xf32>
    %132 = arith.mulf %130, %6 : vector<8x8xf32>
    %133 = arith.addf %131, %132 : vector<8x8xf32>
    "tpu.trace_start"() <{level = 10 : i32, message = "nd,md->nm"}> : () -> ()
    %cst_56 = arith.constant dense<0.000000e+00> : vector<32x8xf32>
    %134 = tpu.matmul %125, %133, %cst_56 {dimension_numbers = #tpu.dot_dimension_numbers<[1], [1], [0], [0], [0, 0, 1, 0], [], []>} : vector<32x8xf32>, vector<8x8xf32>, vector<32x8xf32> -> vector<32x8xf32>
    "tpu.trace_stop"() : () -> ()
    %cst_57 = arith.constant dense<0xFF800000> : vector<32xf32>
    %135 = vector.multi_reduction <maximumf>, %134, %cst_57 [1] : vector<32x8xf32> to vector<32xf32>
    %136 = vector.shape_cast %135 : vector<32xf32> to vector<32x1xf32>
    %137 = vector.broadcast %136 : vector<32x1xf32> to vector<32x8xf32>
    %138 = arith.subf %134, %137 : vector<32x8xf32>
    %139 = math.exp %138 : vector<32x8xf32>
    %cst_58 = arith.constant dense<0.000000e+00> : vector<32xf32>
    %140 = vector.multi_reduction <add>, %139, %cst_58 [1] : vector<32x8xf32> to vector<32xf32>
    %141 = vector.shape_cast %140 : vector<32xf32> to vector<32x1xf32>
    %142 = tpu.reciprocal %141 {approx = true} : vector<32x1xf32> -> vector<32x1xf32>
    %143 = vector.broadcast %142 : vector<32x1xf32> to vector<32x8xf32>
    %144 = arith.mulf %139, %143 : vector<32x8xf32>
    %cst_59 = arith.constant dense<0.000000e+00> : vector<32x8xf32>
    %145 = tpu.matmul %144, %111, %cst_59 {dimension_numbers = #tpu.dot_dimension_numbers<[1], [0], [0], [1], [0, 0, 1, 1], [], []>} : vector<32x8xf32>, vector<8x8xf32>, vector<32x8xf32> -> vector<32x8xf32>
    %146 = vector.extract_strided_slice %145 {offsets = [0, 0], sizes = [8, 8], strides = [1, 1]} : vector<32x8xf32> to vector<8x8xf32>
    %147 = vector.extract_strided_slice %145 {offsets = [8, 0], sizes = [8, 8], strides = [1, 1]} : vector<32x8xf32> to vector<8x8xf32>
    %148 = vector.extract_strided_slice %145 {offsets = [16, 0], sizes = [8, 8], strides = [1, 1]} : vector<32x8xf32> to vector<8x8xf32>
    %149 = vector.extract_strided_slice %145 {offsets = [24, 0], sizes = [8, 8], strides = [1, 1]} : vector<32x8xf32> to vector<8x8xf32>
    %150 = tpu.concatenate %146, %147, %148, %149 in 1 : vector<8x8xf32>, vector<8x8xf32>, vector<8x8xf32>, vector<8x8xf32> -> vector<8x32xf32>
    %151 = vector.extract_strided_slice %112 {offsets = [0, 128], sizes = [8, 128], strides = [1, 1]} : vector<8x256xf32> to vector<8x128xf32>
    %152 = arith.negf %151 : vector<8x128xf32>
    %153 = math.exp %152 : vector<8x128xf32>
    %cst_60 = arith.constant 1.000000e+00 : f32
    %154 = vector.broadcast %cst_60 : f32 to vector<8x128xf32>
    %155 = arith.addf %154, %153 : vector<8x128xf32>
    %156 = arith.divf %154, %155 : vector<8x128xf32>
    %157 = arith.mulf %151, %156 : vector<8x128xf32>
    %158 = vector.extract_strided_slice %112 {offsets = [0, 0], sizes = [8, 128], strides = [1, 1]} : vector<8x256xf32> to vector<8x128xf32>
    %159 = arith.mulf %157, %158 : vector<8x128xf32>
    %160 = tpu.concatenate %150, %159 in 1 : vector<8x32xf32>, vector<8x128xf32> -> vector<8x160xf32>
    %c0_61 = arith.constant 0 : index
    %c0_62 = arith.constant 0 : index
    %c0_63 = arith.constant 0 : index
    %161 = vector.load %arg16[%c0_61, %c0_62, %c0_63] : memref<2x160x32xf32, #tpu.memory_space<vmem>>, vector<1x160x32xf32>
    %162 = vector.shape_cast %161 : vector<1x160x32xf32> to vector<160x32xf32>
    %cst_64 = arith.constant dense<0.000000e+00> : vector<8x32xf32>
    %163 = tpu.matmul %160, %162, %cst_64 {dimension_numbers = #tpu.dot_dimension_numbers<[1], [0], [0], [1], [0, 0, 1, 1], [], []>} : vector<8x160xf32>, vector<160x32xf32>, vector<8x32xf32> -> vector<8x32xf32>
    %164 = arith.addf %163, %79 : vector<8x32xf32>
    %c1 = arith.constant 1 : index
    %c0_65 = arith.constant 0 : index
    %c0_66 = arith.constant 0 : index
    %165 = vector.load %arg8[%c1, %c0_65, %c0_66] : memref<2x1x32xf32, #tpu.memory_space<vmem>>, vector<1x1x32xf32>
    %166 = vector.shape_cast %165 : vector<1x1x32xf32> to vector<1x32xf32>
    %c1_67 = arith.constant 1 : index
    %c0_68 = arith.constant 0 : index
    %c0_69 = arith.constant 0 : index
    %167 = vector.load %arg9[%c1_67, %c0_68, %c0_69] : memref<2x1x32xf32, #tpu.memory_space<vmem>>, vector<1x1x32xf32>
    %168 = vector.shape_cast %167 : vector<1x1x32xf32> to vector<1x32xf32>
    %cst_70 = arith.constant dense<0.000000e+00> : vector<8xf32>
    %169 = vector.multi_reduction <add>, %164, %cst_70 [1] : vector<8x32xf32> to vector<8xf32>
    %170 = vector.shape_cast %169 : vector<8xf32> to vector<8x1xf32>
    %cst_71 = arith.constant 3.200000e+01 : f32
    %171 = vector.broadcast %cst_71 : f32 to vector<8x1xf32>
    %172 = arith.divf %170, %171 : vector<8x1xf32>
    %173 = vector.broadcast %172 : vector<8x1xf32> to vector<8x32xf32>
    %174 = arith.subf %164, %173 : vector<8x32xf32>
    %175 = arith.mulf %174, %174 : vector<8x32xf32>
    %cst_72 = arith.constant dense<0.000000e+00> : vector<8xf32>
    %176 = vector.multi_reduction <add>, %175, %cst_72 [1] : vector<8x32xf32> to vector<8xf32>
    %177 = vector.shape_cast %176 : vector<8xf32> to vector<8x1xf32>
    %cst_73 = arith.constant 3.200000e+01 : f32
    %178 = vector.broadcast %cst_73 : f32 to vector<8x1xf32>
    %179 = arith.divf %177, %178 : vector<8x1xf32>
    %180 = vector.broadcast %172 : vector<8x1xf32> to vector<8x32xf32>
    %181 = arith.subf %164, %180 : vector<8x32xf32>
    %cst_74 = arith.constant 9.99999974E-6 : f32
    %182 = vector.broadcast %cst_74 : f32 to vector<8x1xf32>
    %183 = arith.addf %179, %182 : vector<8x1xf32>
    %184 = math.rsqrt %183 : vector<8x1xf32>
    %185 = vector.broadcast %184 : vector<8x1xf32> to vector<8x32xf32>
    %186 = arith.mulf %181, %185 : vector<8x32xf32>
    %187 = vector.broadcast %166 : vector<1x32xf32> to vector<8x32xf32>
    %188 = arith.mulf %186, %187 : vector<8x32xf32>
    %189 = vector.broadcast %168 : vector<1x32xf32> to vector<8x32xf32>
    %190 = arith.addf %188, %189 : vector<8x32xf32>
    %c1_75 = arith.constant 1 : index
    %c0_76 = arith.constant 0 : index
    %c0_77 = arith.constant 0 : index
    %191 = vector.load %arg10[%c1_75, %c0_76, %c0_77] : memref<2x32x288xf32, #tpu.memory_space<vmem>>, vector<1x32x288xf32>
    %192 = vector.shape_cast %191 : vector<1x32x288xf32> to vector<32x288xf32>
    %cst_78 = arith.constant dense<0.000000e+00> : vector<8x288xf32>
    %193 = tpu.matmul %190, %192, %cst_78 {dimension_numbers = #tpu.dot_dimension_numbers<[1], [0], [0], [1], [0, 0, 1, 1], [], []>} : vector<8x32xf32>, vector<32x288xf32>, vector<8x288xf32> -> vector<8x288xf32>
    %194 = vector.extract_strided_slice %193 {offsets = [0, 0], sizes = [8, 32], strides = [1, 1]} : vector<8x288xf32> to vector<8x32xf32>
    %195 = vector.extract_strided_slice %193 {offsets = [0, 32], sizes = [8, 256], strides = [1, 1]} : vector<8x288xf32> to vector<8x256xf32>
    %196 = vector.extract_strided_slice %8 {offsets = [0, 16], sizes = [16, 16], strides = [1, 1]} : vector<16x32xf32> to vector<16x16xf32>
    %197 = vector.extract_strided_slice %196 {offsets = [0, 0], sizes = [16, 8], strides = [1, 1]} : vector<16x16xf32> to vector<16x8xf32>
    %198 = vector.extract_strided_slice %196 {offsets = [0, 8], sizes = [16, 8], strides = [1, 1]} : vector<16x16xf32> to vector<16x8xf32>
    %199 = vector.extract_strided_slice %194 {offsets = [0, 0], sizes = [8, 8], strides = [1, 1]} : vector<8x32xf32> to vector<8x8xf32>
    %200 = vector.extract_strided_slice %194 {offsets = [0, 8], sizes = [8, 8], strides = [1, 1]} : vector<8x32xf32> to vector<8x8xf32>
    %201 = vector.extract_strided_slice %194 {offsets = [0, 16], sizes = [8, 8], strides = [1, 1]} : vector<8x32xf32> to vector<8x8xf32>
    %202 = vector.extract_strided_slice %194 {offsets = [0, 24], sizes = [8, 8], strides = [1, 1]} : vector<8x32xf32> to vector<8x8xf32>
    %203 = tpu.concatenate %199, %200, %201, %202 in 0 : vector<8x8xf32>, vector<8x8xf32>, vector<8x8xf32>, vector<8x8xf32> -> vector<32x8xf32>
    "tpu.trace_start"() <{level = 10 : i32, message = "nd,md->nm"}> : () -> ()
    %cst_79 = arith.constant dense<0.000000e+00> : vector<32x16xf32>
    %204 = tpu.matmul %203, %197, %cst_79 {dimension_numbers = #tpu.dot_dimension_numbers<[1], [1], [0], [0], [0, 0, 1, 0], [], []>} : vector<32x8xf32>, vector<16x8xf32>, vector<32x16xf32> -> vector<32x16xf32>
    "tpu.trace_stop"() : () -> ()
    %205 = arith.addf %204, %2 : vector<32x16xf32>
    %cst_80 = arith.constant dense<0xFF800000> : vector<32xf32>
    %206 = vector.multi_reduction <maximumf>, %205, %cst_80 [1] : vector<32x16xf32> to vector<32xf32>
    %207 = vector.shape_cast %206 : vector<32xf32> to vector<32x1xf32>
    %208 = vector.broadcast %207 : vector<32x1xf32> to vector<32x16xf32>
    %209 = arith.subf %205, %208 : vector<32x16xf32>
    %210 = math.exp %209 : vector<32x16xf32>
    %cst_81 = arith.constant dense<0.000000e+00> : vector<32xf32>
    %211 = vector.multi_reduction <add>, %210, %cst_81 [1] : vector<32x16xf32> to vector<32xf32>
    %212 = vector.shape_cast %211 : vector<32xf32> to vector<32x1xf32>
    %213 = tpu.reciprocal %212 {approx = true} : vector<32x1xf32> -> vector<32x1xf32>
    %214 = vector.broadcast %213 : vector<32x1xf32> to vector<32x16xf32>
    %215 = arith.mulf %210, %214 : vector<32x16xf32>
    %cst_82 = arith.constant dense<0.000000e+00> : vector<32x8xf32>
    %216 = tpu.matmul %215, %198, %cst_82 {dimension_numbers = #tpu.dot_dimension_numbers<[1], [0], [0], [1], [0, 0, 1, 1], [], []>} : vector<32x16xf32>, vector<16x8xf32>, vector<32x8xf32> -> vector<32x8xf32>
    %217 = vector.extract_strided_slice %216 {offsets = [0, 0], sizes = [8, 8], strides = [1, 1]} : vector<32x8xf32> to vector<8x8xf32>
    %218 = vector.extract_strided_slice %216 {offsets = [8, 0], sizes = [8, 8], strides = [1, 1]} : vector<32x8xf32> to vector<8x8xf32>
    %219 = vector.extract_strided_slice %216 {offsets = [16, 0], sizes = [8, 8], strides = [1, 1]} : vector<32x8xf32> to vector<8x8xf32>
    %220 = vector.extract_strided_slice %216 {offsets = [24, 0], sizes = [8, 8], strides = [1, 1]} : vector<32x8xf32> to vector<8x8xf32>
    %221 = tpu.concatenate %217, %218, %219, %220 in 1 : vector<8x8xf32>, vector<8x8xf32>, vector<8x8xf32>, vector<8x8xf32> -> vector<8x32xf32>
    %222 = vector.extract_strided_slice %195 {offsets = [0, 128], sizes = [8, 128], strides = [1, 1]} : vector<8x256xf32> to vector<8x128xf32>
    %223 = arith.negf %222 : vector<8x128xf32>
    %224 = math.exp %223 : vector<8x128xf32>
    %cst_83 = arith.constant 1.000000e+00 : f32
    %225 = vector.broadcast %cst_83 : f32 to vector<8x128xf32>
    %226 = arith.addf %225, %224 : vector<8x128xf32>
    %227 = arith.divf %225, %226 : vector<8x128xf32>
    %228 = arith.mulf %222, %227 : vector<8x128xf32>
    %229 = vector.extract_strided_slice %195 {offsets = [0, 0], sizes = [8, 128], strides = [1, 1]} : vector<8x256xf32> to vector<8x128xf32>
    %230 = arith.mulf %228, %229 : vector<8x128xf32>
    %231 = tpu.concatenate %221, %230 in 1 : vector<8x32xf32>, vector<8x128xf32> -> vector<8x160xf32>
    %c1_84 = arith.constant 1 : index
    %c0_85 = arith.constant 0 : index
    %c0_86 = arith.constant 0 : index
    %232 = vector.load %arg12[%c1_84, %c0_85, %c0_86] : memref<2x160x32xf32, #tpu.memory_space<vmem>>, vector<1x160x32xf32>
    %233 = vector.shape_cast %232 : vector<1x160x32xf32> to vector<160x32xf32>
    %cst_87 = arith.constant dense<0.000000e+00> : vector<8x32xf32>
    %234 = tpu.matmul %231, %233, %cst_87 {dimension_numbers = #tpu.dot_dimension_numbers<[1], [0], [0], [1], [0, 0, 1, 1], [], []>} : vector<8x160xf32>, vector<160x32xf32>, vector<8x32xf32> -> vector<8x32xf32>
    %235 = arith.addf %234, %164 : vector<8x32xf32>
    %c1_88 = arith.constant 1 : index
    %c0_89 = arith.constant 0 : index
    %c0_90 = arith.constant 0 : index
    %236 = vector.load %arg13[%c1_88, %c0_89, %c0_90] : memref<2x1x32xf32, #tpu.memory_space<vmem>>, vector<1x1x32xf32>
    %237 = vector.shape_cast %236 : vector<1x1x32xf32> to vector<1x32xf32>
    %c1_91 = arith.constant 1 : index
    %c0_92 = arith.constant 0 : index
    %c0_93 = arith.constant 0 : index
    %238 = vector.load %arg14[%c1_91, %c0_92, %c0_93] : memref<2x1x32xf32, #tpu.memory_space<vmem>>, vector<1x1x32xf32>
    %239 = vector.shape_cast %238 : vector<1x1x32xf32> to vector<1x32xf32>
    %cst_94 = arith.constant dense<0.000000e+00> : vector<8xf32>
    %240 = vector.multi_reduction <add>, %235, %cst_94 [1] : vector<8x32xf32> to vector<8xf32>
    %241 = vector.shape_cast %240 : vector<8xf32> to vector<8x1xf32>
    %cst_95 = arith.constant 3.200000e+01 : f32
    %242 = vector.broadcast %cst_95 : f32 to vector<8x1xf32>
    %243 = arith.divf %241, %242 : vector<8x1xf32>
    %244 = vector.broadcast %243 : vector<8x1xf32> to vector<8x32xf32>
    %245 = arith.subf %235, %244 : vector<8x32xf32>
    %246 = arith.mulf %245, %245 : vector<8x32xf32>
    %cst_96 = arith.constant dense<0.000000e+00> : vector<8xf32>
    %247 = vector.multi_reduction <add>, %246, %cst_96 [1] : vector<8x32xf32> to vector<8xf32>
    %248 = vector.shape_cast %247 : vector<8xf32> to vector<8x1xf32>
    %cst_97 = arith.constant 3.200000e+01 : f32
    %249 = vector.broadcast %cst_97 : f32 to vector<8x1xf32>
    %250 = arith.divf %248, %249 : vector<8x1xf32>
    %251 = vector.broadcast %243 : vector<8x1xf32> to vector<8x32xf32>
    %252 = arith.subf %235, %251 : vector<8x32xf32>
    %cst_98 = arith.constant 9.99999974E-6 : f32
    %253 = vector.broadcast %cst_98 : f32 to vector<8x1xf32>
    %254 = arith.addf %250, %253 : vector<8x1xf32>
    %255 = math.rsqrt %254 : vector<8x1xf32>
    %256 = vector.broadcast %255 : vector<8x1xf32> to vector<8x32xf32>
    %257 = arith.mulf %252, %256 : vector<8x32xf32>
    %258 = vector.broadcast %237 : vector<1x32xf32> to vector<8x32xf32>
    %259 = arith.mulf %257, %258 : vector<8x32xf32>
    %260 = vector.broadcast %239 : vector<1x32xf32> to vector<8x32xf32>
    %261 = arith.addf %259, %260 : vector<8x32xf32>
    %c1_99 = arith.constant 1 : index
    %c0_100 = arith.constant 0 : index
    %c0_101 = arith.constant 0 : index
    %262 = vector.load %arg15[%c1_99, %c0_100, %c0_101] : memref<2x32x304xf32, #tpu.memory_space<vmem>>, vector<1x32x304xf32>
    %263 = vector.shape_cast %262 : vector<1x32x304xf32> to vector<32x304xf32>
    %cst_102 = arith.constant dense<0.000000e+00> : vector<8x304xf32>
    %264 = tpu.matmul %261, %263, %cst_102 {dimension_numbers = #tpu.dot_dimension_numbers<[1], [0], [0], [1], [0, 0, 1, 1], [], []>} : vector<8x32xf32>, vector<32x304xf32>, vector<8x304xf32> -> vector<8x304xf32>
    %265 = vector.extract_strided_slice %264 {offsets = [0, 0], sizes = [8, 32], strides = [1, 1]} : vector<8x304xf32> to vector<8x32xf32>
    %266 = vector.extract_strided_slice %264 {offsets = [0, 32], sizes = [8, 8], strides = [1, 1]} : vector<8x304xf32> to vector<8x8xf32>
    %267 = vector.extract_strided_slice %264 {offsets = [0, 40], sizes = [8, 8], strides = [1, 1]} : vector<8x304xf32> to vector<8x8xf32>
    %268 = vector.extract_strided_slice %264 {offsets = [0, 48], sizes = [8, 256], strides = [1, 1]} : vector<8x304xf32> to vector<8x256xf32>
    %269 = vector.extract_strided_slice %265 {offsets = [0, 0], sizes = [8, 8], strides = [1, 1]} : vector<8x32xf32> to vector<8x8xf32>
    %270 = vector.extract_strided_slice %265 {offsets = [0, 8], sizes = [8, 8], strides = [1, 1]} : vector<8x32xf32> to vector<8x8xf32>
    %271 = vector.extract_strided_slice %265 {offsets = [0, 16], sizes = [8, 8], strides = [1, 1]} : vector<8x32xf32> to vector<8x8xf32>
    %272 = vector.extract_strided_slice %265 {offsets = [0, 24], sizes = [8, 8], strides = [1, 1]} : vector<8x32xf32> to vector<8x8xf32>
    %273 = tpu.concatenate %269, %270, %271, %272 in 0 : vector<8x8xf32>, vector<8x8xf32>, vector<8x8xf32>, vector<8x8xf32> -> vector<32x8xf32>
    %274 = vector.extract_strided_slice %273 {offsets = [0, 4], sizes = [32, 4], strides = [1, 1]} : vector<32x8xf32> to vector<32x4xf32>
    %cst_103 = arith.constant 0.000000e+00 : f32
    %275 = vector.broadcast %cst_103 : f32 to vector<32x4xf32>
    %276 = arith.subf %275, %274 : vector<32x4xf32>
    %277 = vector.extract_strided_slice %273 {offsets = [0, 0], sizes = [32, 4], strides = [1, 1]} : vector<32x8xf32> to vector<32x4xf32>
    %278 = tpu.concatenate %276, %277 in 1 : vector<32x4xf32>, vector<32x4xf32> -> vector<32x8xf32>
    %279 = arith.mulf %273, %3 : vector<32x8xf32>
    %280 = arith.mulf %278, %4 : vector<32x8xf32>
    %281 = arith.addf %279, %280 : vector<32x8xf32>
    %282 = vector.extract_strided_slice %266 {offsets = [0, 4], sizes = [8, 4], strides = [1, 1]} : vector<8x8xf32> to vector<8x4xf32>
    %cst_104 = arith.constant 0.000000e+00 : f32
    %283 = vector.broadcast %cst_104 : f32 to vector<8x4xf32>
    %284 = arith.subf %283, %282 : vector<8x4xf32>
    %285 = vector.extract_strided_slice %266 {offsets = [0, 0], sizes = [8, 4], strides = [1, 1]} : vector<8x8xf32> to vector<8x4xf32>
    %286 = tpu.concatenate %284, %285 in 1 : vector<8x4xf32>, vector<8x4xf32> -> vector<8x8xf32>
    %287 = arith.mulf %266, %5 : vector<8x8xf32>
    %288 = arith.mulf %286, %6 : vector<8x8xf32>
    %289 = arith.addf %287, %288 : vector<8x8xf32>
    "tpu.trace_start"() <{level = 10 : i32, message = "nd,md->nm"}> : () -> ()
    %cst_105 = arith.constant dense<0.000000e+00> : vector<32x8xf32>
    %290 = tpu.matmul %281, %289, %cst_105 {dimension_numbers = #tpu.dot_dimension_numbers<[1], [1], [0], [0], [0, 0, 1, 0], [], []>} : vector<32x8xf32>, vector<8x8xf32>, vector<32x8xf32> -> vector<32x8xf32>
    "tpu.trace_stop"() : () -> ()
    %cst_106 = arith.constant dense<0xFF800000> : vector<32xf32>
    %291 = vector.multi_reduction <maximumf>, %290, %cst_106 [1] : vector<32x8xf32> to vector<32xf32>
    %292 = vector.shape_cast %291 : vector<32xf32> to vector<32x1xf32>
    %293 = vector.broadcast %292 : vector<32x1xf32> to vector<32x8xf32>
    %294 = arith.subf %290, %293 : vector<32x8xf32>
    %295 = math.exp %294 : vector<32x8xf32>
    %cst_107 = arith.constant dense<0.000000e+00> : vector<32xf32>
    %296 = vector.multi_reduction <add>, %295, %cst_107 [1] : vector<32x8xf32> to vector<32xf32>
    %297 = vector.shape_cast %296 : vector<32xf32> to vector<32x1xf32>
    %298 = tpu.reciprocal %297 {approx = true} : vector<32x1xf32> -> vector<32x1xf32>
    %299 = vector.broadcast %298 : vector<32x1xf32> to vector<32x8xf32>
    %300 = arith.mulf %295, %299 : vector<32x8xf32>
    %cst_108 = arith.constant dense<0.000000e+00> : vector<32x8xf32>
    %301 = tpu.matmul %300, %267, %cst_108 {dimension_numbers = #tpu.dot_dimension_numbers<[1], [0], [0], [1], [0, 0, 1, 1], [], []>} : vector<32x8xf32>, vector<8x8xf32>, vector<32x8xf32> -> vector<32x8xf32>
    %302 = vector.extract_strided_slice %301 {offsets = [0, 0], sizes = [8, 8], strides = [1, 1]} : vector<32x8xf32> to vector<8x8xf32>
    %303 = vector.extract_strided_slice %301 {offsets = [8, 0], sizes = [8, 8], strides = [1, 1]} : vector<32x8xf32> to vector<8x8xf32>
    %304 = vector.extract_strided_slice %301 {offsets = [16, 0], sizes = [8, 8], strides = [1, 1]} : vector<32x8xf32> to vector<8x8xf32>
    %305 = vector.extract_strided_slice %301 {offsets = [24, 0], sizes = [8, 8], strides = [1, 1]} : vector<32x8xf32> to vector<8x8xf32>
    %306 = tpu.concatenate %302, %303, %304, %305 in 1 : vector<8x8xf32>, vector<8x8xf32>, vector<8x8xf32>, vector<8x8xf32> -> vector<8x32xf32>
    %307 = vector.extract_strided_slice %268 {offsets = [0, 128], sizes = [8, 128], strides = [1, 1]} : vector<8x256xf32> to vector<8x128xf32>
    %308 = arith.negf %307 : vector<8x128xf32>
    %309 = math.exp %308 : vector<8x128xf32>
    %cst_109 = arith.constant 1.000000e+00 : f32
    %310 = vector.broadcast %cst_109 : f32 to vector<8x128xf32>
    %311 = arith.addf %310, %309 : vector<8x128xf32>
    %312 = arith.divf %310, %311 : vector<8x128xf32>
    %313 = arith.mulf %307, %312 : vector<8x128xf32>
    %314 = vector.extract_strided_slice %268 {offsets = [0, 0], sizes = [8, 128], strides = [1, 1]} : vector<8x256xf32> to vector<8x128xf32>
    %315 = arith.mulf %313, %314 : vector<8x128xf32>
    %316 = tpu.concatenate %306, %315 in 1 : vector<8x32xf32>, vector<8x128xf32> -> vector<8x160xf32>
    %c1_110 = arith.constant 1 : index
    %c0_111 = arith.constant 0 : index
    %c0_112 = arith.constant 0 : index
    %317 = vector.load %arg16[%c1_110, %c0_111, %c0_112] : memref<2x160x32xf32, #tpu.memory_space<vmem>>, vector<1x160x32xf32>
    %318 = vector.shape_cast %317 : vector<1x160x32xf32> to vector<160x32xf32>
    %cst_113 = arith.constant dense<0.000000e+00> : vector<8x32xf32>
    %319 = tpu.matmul %316, %318, %cst_113 {dimension_numbers = #tpu.dot_dimension_numbers<[1], [0], [0], [1], [0, 0, 1, 1], [], []>} : vector<8x160xf32>, vector<160x32xf32>, vector<8x32xf32> -> vector<8x32xf32>
    %320 = arith.addf %319, %235 : vector<8x32xf32>
    %c0_114 = arith.constant 0 : index
    %c0_115 = arith.constant 0 : index
    %321 = vector.load %arg17[%c0_114, %c0_115] : memref<8x32xf32, #tpu.memory_space<vmem>>, vector<8x32xf32>
    tpu.vector_store %arg17[%c0_114, %c0_115], %320 {strides = array<i32>} : memref<8x32xf32, #tpu.memory_space<vmem>>, vector<8x32xf32>,
    return
  }
  func.func @transform_0(%arg0: i32) -> (i32, i32) {
    %c0_i32 = arith.constant 0 : i32
    %c0_i32_0 = arith.constant 0 : i32
    return %arg0, %c0_i32 : i32, i32
  }
  func.func @transform_1(%arg0: i32) -> (i32, i32) {
    %c0_i32 = arith.constant 0 : i32
    %c0_i32_0 = arith.constant 0 : i32
    return %arg0, %c0_i32 : i32, i32
  }
  func.func @transform_2(%arg0: i32) -> (i32, i32) {
    %c0_i32 = arith.constant 0 : i32
    %c0_i32_0 = arith.constant 0 : i32
    return %arg0, %c0_i32 : i32, i32
  }
  func.func @transform_3(%arg0: i32) -> (i32, i32) {
    %c0_i32 = arith.constant 0 : i32
    %c0_i32_0 = arith.constant 0 : i32
    %c0_i32_1 = arith.constant 0 : i32
    return %c0_i32, %c0_i32_0 : i32, i32
  }
  func.func @transform_4(%arg0: i32) -> (i32, i32) {
    %c0_i32 = arith.constant 0 : i32
    %c0_i32_0 = arith.constant 0 : i32
    %c0_i32_1 = arith.constant 0 : i32
    return %c0_i32, %c0_i32_0 : i32, i32
  }
  func.func @transform_5(%arg0: i32) -> (i32, i32) {
    %c0_i32 = arith.constant 0 : i32
    %c0_i32_0 = arith.constant 0 : i32
    %c0_i32_1 = arith.constant 0 : i32
    return %c0_i32, %c0_i32_0 : i32, i32
  }
  func.func @transform_6(%arg0: i32) -> (i32, i32) {
    %c0_i32 = arith.constant 0 : i32
    %c0_i32_0 = arith.constant 0 : i32
    %c0_i32_1 = arith.constant 0 : i32
    return %c0_i32, %c0_i32_0 : i32, i32
  }
  func.func @transform_7(%arg0: i32) -> (i32, i32, i32) {
    %c0_i32 = arith.constant 0 : i32
    %c0_i32_0 = arith.constant 0 : i32
    %c0_i32_1 = arith.constant 0 : i32
    %c0_i32_2 = arith.constant 0 : i32
    return %c0_i32, %c0_i32_0, %c0_i32_1 : i32, i32, i32
  }
  func.func @transform_8(%arg0: i32) -> (i32, i32, i32) {
    %c0_i32 = arith.constant 0 : i32
    %c0_i32_0 = arith.constant 0 : i32
    %c0_i32_1 = arith.constant 0 : i32
    %c0_i32_2 = arith.constant 0 : i32
    return %c0_i32, %c0_i32_0, %c0_i32_1 : i32, i32, i32
  }
  func.func @transform_9(%arg0: i32) -> (i32, i32, i32) {
    %c0_i32 = arith.constant 0 : i32
    %c0_i32_0 = arith.constant 0 : i32
    %c0_i32_1 = arith.constant 0 : i32
    %c0_i32_2 = arith.constant 0 : i32
    return %c0_i32, %c0_i32_0, %c0_i32_1 : i32, i32, i32
  }
  func.func @transform_10(%arg0: i32) -> (i32, i32) {
    %c0_i32 = arith.constant 0 : i32
    %c0_i32_0 = arith.constant 0 : i32
    %c0_i32_1 = arith.constant 0 : i32
    return %c0_i32, %c0_i32_0 : i32, i32
  }
  func.func @transform_11(%arg0: i32) -> (i32, i32, i32) {
    %c0_i32 = arith.constant 0 : i32
    %c0_i32_0 = arith.constant 0 : i32
    %c0_i32_1 = arith.constant 0 : i32
    %c0_i32_2 = arith.constant 0 : i32
    return %c0_i32, %c0_i32_0, %c0_i32_1 : i32, i32, i32
  }
  func.func @transform_12(%arg0: i32) -> (i32, i32, i32) {
    %c0_i32 = arith.constant 0 : i32
    %c0_i32_0 = arith.constant 0 : i32
    %c0_i32_1 = arith.constant 0 : i32
    %c0_i32_2 = arith.constant 0 : i32
    return %c0_i32, %c0_i32_0, %c0_i32_1 : i32, i32, i32
  }
  func.func @transform_13(%arg0: i32) -> (i32, i32, i32) {
    %c0_i32 = arith.constant 0 : i32
    %c0_i32_0 = arith.constant 0 : i32
    %c0_i32_1 = arith.constant 0 : i32
    %c0_i32_2 = arith.constant 0 : i32
    return %c0_i32, %c0_i32_0, %c0_i32_1 : i32, i32, i32
  }
  func.func @transform_14(%arg0: i32) -> (i32, i32, i32) {
    %c0_i32 = arith.constant 0 : i32
    %c0_i32_0 = arith.constant 0 : i32
    %c0_i32_1 = arith.constant 0 : i32
    %c0_i32_2 = arith.constant 0 : i32
    return %c0_i32, %c0_i32_0, %c0_i32_1 : i32, i32, i32
  }
  func.func @transform_15(%arg0: i32) -> (i32, i32, i32) {
    %c0_i32 = arith.constant 0 : i32
    %c0_i32_0 = arith.constant 0 : i32
    %c0_i32_1 = arith.constant 0 : i32
    %c0_i32_2 = arith.constant 0 : i32
    return %c0_i32, %c0_i32_0, %c0_i32_1 : i32, i32, i32
  }
  func.func @transform_16(%arg0: i32) -> (i32, i32) {
    %c0_i32 = arith.constant 0 : i32
    %c0_i32_0 = arith.constant 0 : i32
    return %arg0, %c0_i32 : i32, i32
  }
}

</mosaic_0001>

<llo_original>
// kernel: tpu_custom_call.1
$region0: #{tpu_custom_call.1}
  #allocation0 [shape = 'u32[]', space=smem, size = 0x4, offset = 0x4, fixed_abs, tag = 'smem constant byte address 0x4 - core index']
  #allocation1 [shape = 'u32[144,128]{1,0:T(1,128)}', space=vmem, size = 0x12000, scoped, tag = 'internal scratch']
  %s0 = inlined_call_operand.vmem [shape: f32[16,32], index: 0, kind: input, shape index: {}]
  %s1 = inlined_call_operand.vmem [shape: f32[32,32], index: 1, kind: input, shape index: {}]
  %s2 = inlined_call_operand.vmem [shape: f32[64,16], index: 2, kind: input, shape index: {}]
  %s3 = inlined_call_operand.vmem [shape: f32[32,8], index: 3, kind: input, shape index: {}]
  %s4 = inlined_call_operand.vmem [shape: f32[32,8], index: 4, kind: input, shape index: {}]
  %s5 = inlined_call_operand.vmem [shape: f32[8,8], index: 5, kind: input, shape index: {}]
  %s6 = inlined_call_operand.vmem [shape: f32[8,8], index: 6, kind: input, shape index: {}]
  %s7 = inlined_call_operand.vmem [shape: f32[2,1,32], index: 7, kind: input, shape index: {}]
  %s8 = inlined_call_operand.vmem [shape: f32[2,1,32], index: 8, kind: input, shape index: {}]
  %s9 = inlined_call_operand.vmem [shape: f32[2,32,288], index: 9, kind: input, shape index: {}]
  %s10 = inlined_call_operand.vmem [shape: f32[32,32], index: 10, kind: input, shape index: {}]
  %s11 = inlined_call_operand.vmem [shape: f32[2,160,32], index: 11, kind: input, shape index: {}]
  %s12 = inlined_call_operand.vmem [shape: f32[2,1,32], index: 12, kind: input, shape index: {}]
  %s13 = inlined_call_operand.vmem [shape: f32[2,1,32], index: 13, kind: input, shape index: {}]
  %s14 = inlined_call_operand.vmem [shape: f32[2,32,304], index: 14, kind: input, shape index: {}]
  %s15 = inlined_call_operand.vmem [shape: f32[2,160,32], index: 15, kind: input, shape index: {}]
  %s16 = inlined_call_operand.hbm [shape: f32[16,32], index: 16, kind: output, shape index: {}]
  %s17 = sld [smem:[#allocation0]]
  $region97: #{tpu_custom_call.1} parent=0
    _
  %s19 = ssub.s32 1, %s17
  %s20 = scalar_select 0, %s19, %s17
  $region1: #{tpu_custom_call.1} parent=0
    #allocation2 [shape = 'u8[8192]{0}', space=vmem, size = 0x2000, scoped, tag = 'output window, operand 0']
    #allocation3 [shape = 's32[2]{0}', space=sflag, size = 0x8, scoped, tag = 'scoped memory for tpu_custom_call.1']
    %21 = vsyncpa [#allocation3], 0
    %s22 = scalar_lea.sflag [#allocation3], 1
    %23 = vsyncpa %s22, 0
    loop: start=0, step=1, limit=4
    $region2: #{tpu_custom_call.1} parent=1 // loop_pre_header
      _
    $region3: #{tpu_custom_call.1} parent=1 // loop_header
      %s25 = sphi 0, %s29
      %p26 = scmp.ge.s32.totalorder %s25, 4
      %s35 = sphi 0, %s37
      %s38 = sphi 0, %s35
      %s39 = sphi 0, %s38
      %s55 = sphi 0, %s39
      %s61 = sphi 0, %s63
      %s64 = sphi 0, %s61
      %s65 = sphi 0, %s64
      %s81 = sphi 0, %s65
      %s87 = sphi 0, %s89
      %s90 = sphi 0, %s87
      %s91 = sphi 0, %s90
      %s107 = sphi 0, %s91
      %s111 = sphi 0, %s111
      %s113 = sphi 0, %s111
      %s114 = sphi 0, %s113
      %s128 = sphi 0, %s114
      %s132 = sphi 0, %s132
      %s134 = sphi 0, %s132
      %s135 = sphi 0, %s134
      %s149 = sphi 0, %s135
      %s153 = sphi 0, %s153
      %s155 = sphi 0, %s153
      %s156 = sphi 0, %s155
      %s170 = sphi 0, %s156
      %s174 = sphi 0, %s174
      %s176 = sphi 0, %s174
      %s177 = sphi 0, %s176
      %s191 = sphi 0, %s177
      %s195 = sphi 0, %s195
      %s197 = sphi 0, %s195
      %s198 = sphi 0, %s197
      %s212 = sphi 0, %s198
      %s216 = sphi 0, %s216
      %s218 = sphi 0, %s216
      %s219 = sphi 0, %s218
      %s233 = sphi 0, %s219
      %s237 = sphi 0, %s237
      %s239 = sphi 0, %s237
      %s240 = sphi 0, %s239
      %s254 = sphi 0, %s240
      %s258 = sphi 0, %s258
      %s260 = sphi 0, %s258
      %s261 = sphi 0, %s260
      %s275 = sphi 0, %s261
      %s279 = sphi 0, %s279
      %s281 = sphi 0, %s279
      %s282 = sphi 0, %s281
      %s296 = sphi 0, %s282
      %s300 = sphi 0, %s300
      %s302 = sphi 0, %s300
      %s303 = sphi 0, %s302
      %s317 = sphi 0, %s303
      %s321 = sphi 0, %s321
      %s323 = sphi 0, %s321
      %s324 = sphi 0, %s323
      %s338 = sphi 0, %s324
      %s342 = sphi 0, %s342
      %s344 = sphi 0, %s342
      %s345 = sphi 0, %s344
      %s359 = sphi 0, %s345
      %s363 = sphi 0, %s363
      %s365 = sphi 0, %s363
      %s366 = sphi 0, %s365
      %s380 = sphi 0, %s366
      %s386 = sphi 0, %s388
      %s389 = sphi 0, %s386
      %s390 = sphi 0, %s389
      %s406 = sphi 0, %s390
    $region4: #{tpu_custom_call.1} parent=1 // loop_header_branch
      %28 = sbr.rel (%p26) target = $region8
    $region5: #{tpu_custom_call.1} parent=1 // loop_body
      %s30 = ssub.s32 %s25, 1
      %s31 = ssub.s32 %s25, 2
      %s32 = sadd.s32 %s25, 1
      %s33 = ssub.s32 %s25, %s32
      %p34 = scmp.eq.s32.totalorder %s33, 0
      %s36 = sadd.s32 %s35, 1
      %s37 = scalar_select %p34, %s35, %s36
      %p40 = pneg %p34
      %p41 = scmp.eq.s32.totalorder %s25, 1
      %p42 = por %p40, %p41
      %p43 = scmp.ne.s32.totalorder %s35, %s38
      %p44 = scmp.eq.s32.totalorder %s25, 0
      %p45 = por %p43, %p44
      %p46 = scmp.ne.s32.totalorder %s35, %s38
      %p47 = scmp.eq.s32.totalorder %s30, 1
      %p48 = por %p46, %p47
      %p49 = scmp.ne.s32.totalorder %s38, %s39
      %p50 = scmp.eq.s32.totalorder %s30, 0
      %p51 = por %p49, %p50
      %p52 = scmp.ne.s32.totalorder %s38, %s39
      %p53 = scmp.eq.s32.totalorder %s31, 1
      %p54 = por %p52, %p53
      %p56 = scmp.ne.s32.totalorder %s39, %s55
      %p57 = scmp.eq.s32.totalorder %s31, 0
      %p58 = por %p56, %p57
      %s59 = ssub.s32 %s25, %s32
      %p60 = scmp.eq.s32.totalorder %s59, 0
      %s62 = sadd.s32 %s61, 1
      %s63 = scalar_select %p60, %s61, %s62
      %p66 = pneg %p60
      %p67 = scmp.eq.s32.totalorder %s25, 1
      %p68 = por %p66, %p67
      %p69 = scmp.ne.s32.totalorder %s61, %s64
      %p70 = scmp.eq.s32.totalorder %s25, 0
      %p71 = por %p69, %p70
      %p72 = scmp.ne.s32.totalorder %s61, %s64
      %p73 = scmp.eq.s32.totalorder %s30, 1
      %p74 = por %p72, %p73
      %p75 = scmp.ne.s32.totalorder %s64, %s65
      %p76 = scmp.eq.s32.totalorder %s30, 0
      %p77 = por %p75, %p76
      %p78 = scmp.ne.s32.totalorder %s64, %s65
      %p79 = scmp.eq.s32.totalorder %s31, 1
      %p80 = por %p78, %p79
      %p82 = scmp.ne.s32.totalorder %s65, %s81
      %p83 = scmp.eq.s32.totalorder %s31, 0
      %p84 = por %p82, %p83
      %s85 = ssub.s32 %s25, %s32
      %p86 = scmp.eq.s32.totalorder %s85, 0
      %s88 = sadd.s32 %s87, 1
      %s89 = scalar_select %p86, %s87, %s88
      %p92 = pneg %p86
      %p93 = scmp.eq.s32.totalorder %s25, 1
      %p94 = por %p92, %p93
      %p95 = scmp.ne.s32.totalorder %s87, %s90
      %p96 = scmp.eq.s32.totalorder %s25, 0
      %p97 = por %p95, %p96
      %p98 = scmp.ne.s32.totalorder %s87, %s90
      %p99 = scmp.eq.s32.totalorder %s30, 1
      %p100 = por %p98, %p99
      %p101 = scmp.ne.s32.totalorder %s90, %s91
      %p102 = scmp.eq.s32.totalorder %s30, 0
      %p103 = por %p101, %p102
      %p104 = scmp.ne.s32.totalorder %s90, %s91
      %p105 = scmp.eq.s32.totalorder %s31, 1
      %p106 = por %p104, %p105
      %p108 = scmp.ne.s32.totalorder %s91, %s107
      %p109 = scmp.eq.s32.totalorder %s31, 0
      %p110 = por %p108, %p109
      %s112 = sadd.s32 %s111, 1
      %p115 = scmp.eq.s32.totalorder %s25, 1
      %p116 = scmp.ne.s32.totalorder %s111, %s113
      %p117 = scmp.eq.s32.totalorder %s25, 0
      %p118 = por %p116, %p117
      %p119 = scmp.ne.s32.totalorder %s111, %s113
      %p120 = scmp.eq.s32.totalorder %s30, 1
      %p121 = por %p119, %p120
      %p122 = scmp.ne.s32.totalorder %s113, %s114
      %p123 = scmp.eq.s32.totalorder %s30, 0
      %p124 = por %p122, %p123
      %p125 = scmp.ne.s32.totalorder %s113, %s114
      %p126 = scmp.eq.s32.totalorder %s31, 1
      %p127 = por %p125, %p126
      %p129 = scmp.ne.s32.totalorder %s114, %s128
      %p130 = scmp.eq.s32.totalorder %s31, 0
      %p131 = por %p129, %p130
      %s133 = sadd.s32 %s132, 1
      %p136 = scmp.eq.s32.totalorder %s25, 1
      %p137 = scmp.ne.s32.totalorder %s132, %s134
      %p138 = scmp.eq.s32.totalorder %s25, 0
      %p139 = por %p137, %p138
      %p140 = scmp.ne.s32.totalorder %s132, %s134
      %p141 = scmp.eq.s32.totalorder %s30, 1
      %p142 = por %p140, %p141
      %p143 = scmp.ne.s32.totalorder %s134, %s135
      %p144 = scmp.eq.s32.totalorder %s30, 0
      %p145 = por %p143, %p144
      %p146 = scmp.ne.s32.totalorder %s134, %s135
      %p147 = scmp.eq.s32.totalorder %s31, 1
      %p148 = por %p146, %p147
      %p150 = scmp.ne.s32.totalorder %s135, %s149
      %p151 = scmp.eq.s32.totalorder %s31, 0
      %p152 = por %p150, %p151
      %s154 = sadd.s32 %s153, 1
      %p157 = scmp.eq.s32.totalorder %s25, 1
      %p158 = scmp.ne.s32.totalorder %s153, %s155
      %p159 = scmp.eq.s32.totalorder %s25, 0
      %p160 = por %p158, %p159
      %p161 = scmp.ne.s32.totalorder %s153, %s155
      %p162 = scmp.eq.s32.totalorder %s30, 1
      %p163 = por %p161, %p162
      %p164 = scmp.ne.s32.totalorder %s155, %s156
      %p165 = scmp.eq.s32.totalorder %s30, 0
      %p166 = por %p164, %p165
      %p167 = scmp.ne.s32.totalorder %s155, %s156
      %p168 = scmp.eq.s32.totalorder %s31, 1
      %p169 = por %p167, %p168
      %p171 = scmp.ne.s32.totalorder %s156, %s170
      %p172 = scmp.eq.s32.totalorder %s31, 0
      %p173 = por %p171, %p172
      %s175 = sadd.s32 %s174, 1
      %p178 = scmp.eq.s32.totalorder %s25, 1
      %p179 = scmp.ne.s32.totalorder %s174, %s176
      %p180 = scmp.eq.s32.totalorder %s25, 0
      %p181 = por %p179, %p180
      %p182 = scmp.ne.s32.totalorder %s174, %s176
      %p183 = scmp.eq.s32.totalorder %s30, 1
      %p184 = por %p182, %p183
      %p185 = scmp.ne.s32.totalorder %s176, %s177
      %p186 = scmp.eq.s32.totalorder %s30, 0
      %p187 = por %p185, %p186
      %p188 = scmp.ne.s32.totalorder %s176, %s177
      %p189 = scmp.eq.s32.totalorder %s31, 1
      %p190 = por %p188, %p189
      %p192 = scmp.ne.s32.totalorder %s177, %s191
      %p193 = scmp.eq.s32.totalorder %s31, 0
      %p194 = por %p192, %p193
      %s196 = sadd.s32 %s195, 1
      %p199 = scmp.eq.s32.totalorder %s25, 1
      %p200 = scmp.ne.s32.totalorder %s195, %s197
      %p201 = scmp.eq.s32.totalorder %s25, 0
      %p202 = por %p200, %p201
      %p203 = scmp.ne.s32.totalorder %s195, %s197
      %p204 = scmp.eq.s32.totalorder %s30, 1
      %p205 = por %p203, %p204
      %p206 = scmp.ne.s32.totalorder %s197, %s198
      %p207 = scmp.eq.s32.totalorder %s30, 0
      %p208 = por %p206, %p207
      %p209 = scmp.ne.s32.totalorder %s197, %s198
      %p210 = scmp.eq.s32.totalorder %s31, 1
      %p211 = por %p209, %p210
      %p213 = scmp.ne.s32.totalorder %s198, %s212
      %p214 = scmp.eq.s32.totalorder %s31, 0
      %p215 = por %p213, %p214
      %s217 = sadd.s32 %s216, 1
      %p220 = scmp.eq.s32.totalorder %s25, 1
      %p221 = scmp.ne.s32.totalorder %s216, %s218
      %p222 = scmp.eq.s32.totalorder %s25, 0
      %p223 = por %p221, %p222
      %p224 = scmp.ne.s32.totalorder %s216, %s218
      %p225 = scmp.eq.s32.totalorder %s30, 1
      %p226 = por %p224, %p225
      %p227 = scmp.ne.s32.totalorder %s218, %s219
      %p228 = scmp.eq.s32.totalorder %s30, 0
      %p229 = por %p227, %p228
      %p230 = scmp.ne.s32.totalorder %s218, %s219
      %p231 = scmp.eq.s32.totalorder %s31, 1
      %p232 = por %p230, %p231
      %p234 = scmp.ne.s32.totalorder %s219, %s233
      %p235 = scmp.eq.s32.totalorder %s31, 0
      %p236 = por %p234, %p235
      %s238 = sadd.s32 %s237, 1
      %p241 = scmp.eq.s32.totalorder %s25, 1
      %p242 = scmp.ne.s32.totalorder %s237, %s239
      %p243 = scmp.eq.s32.totalorder %s25, 0
      %p244 = por %p242, %p243
      %p245 = scmp.ne.s32.totalorder %s237, %s239
      %p246 = scmp.eq.s32.totalorder %s30, 1
      %p247 = por %p245, %p246
      %p248 = scmp.ne.s32.totalorder %s239, %s240
      %p249 = scmp.eq.s32.totalorder %s30, 0
      %p250 = por %p248, %p249
      %p251 = scmp.ne.s32.totalorder %s239, %s240
      %p252 = scmp.eq.s32.totalorder %s31, 1
      %p253 = por %p251, %p252
      %p255 = scmp.ne.s32.totalorder %s240, %s254
      %p256 = scmp.eq.s32.totalorder %s31, 0
      %p257 = por %p255, %p256
      %s259 = sadd.s32 %s258, 1
      %p262 = scmp.eq.s32.totalorder %s25, 1
      %p263 = scmp.ne.s32.totalorder %s258, %s260
      %p264 = scmp.eq.s32.totalorder %s25, 0
      %p265 = por %p263, %p264
      %p266 = scmp.ne.s32.totalorder %s258, %s260
      %p267 = scmp.eq.s32.totalorder %s30, 1
      %p268 = por %p266, %p267
      %p269 = scmp.ne.s32.totalorder %s260, %s261
      %p270 = scmp.eq.s32.totalorder %s30, 0
      %p271 = por %p269, %p270
      %p272 = scmp.ne.s32.totalorder %s260, %s261
      %p273 = scmp.eq.s32.totalorder %s31, 1
      %p274 = por %p272, %p273
      %p276 = scmp.ne.s32.totalorder %s261, %s275
      %p277 = scmp.eq.s32.totalorder %s31, 0
      %p278 = por %p276, %p277
      %s280 = sadd.s32 %s279, 1
      %p283 = scmp.eq.s32.totalorder %s25, 1
      %p284 = scmp.ne.s32.totalorder %s279, %s281
      %p285 = scmp.eq.s32.totalorder %s25, 0
      %p286 = por %p284, %p285
      %p287 = scmp.ne.s32.totalorder %s279, %s281
      %p288 = scmp.eq.s32.totalorder %s30, 1
      %p289 = por %p287, %p288
      %p290 = scmp.ne.s32.totalorder %s281, %s282
      %p291 = scmp.eq.s32.totalorder %s30, 0
      %p292 = por %p290, %p291
      %p293 = scmp.ne.s32.totalorder %s281, %s282
      %p294 = scmp.eq.s32.totalorder %s31, 1
      %p295 = por %p293, %p294
      %p297 = scmp.ne.s32.totalorder %s282, %s296
      %p298 = scmp.eq.s32.totalorder %s31, 0
      %p299 = por %p297, %p298
      %s301 = sadd.s32 %s300, 1
      %p304 = scmp.eq.s32.totalorder %s25, 1
      %p305 = scmp.ne.s32.totalorder %s300, %s302
      %p306 = scmp.eq.s32.totalorder %s25, 0
      %p307 = por %p305, %p306
      %p308 = scmp.ne.s32.totalorder %s300, %s302
      %p309 = scmp.eq.s32.totalorder %s30, 1
      %p310 = por %p308, %p309
      %p311 = scmp.ne.s32.totalorder %s302, %s303
      %p312 = scmp.eq.s32.totalorder %s30, 0
      %p313 = por %p311, %p312
      %p314 = scmp.ne.s32.totalorder %s302, %s303
      %p315 = scmp.eq.s32.totalorder %s31, 1
      %p316 = por %p314, %p315
      %p318 = scmp.ne.s32.totalorder %s303, %s317
      %p319 = scmp.eq.s32.totalorder %s31, 0
      %p320 = por %p318, %p319
      %s322 = sadd.s32 %s321, 1
      %p325 = scmp.eq.s32.totalorder %s25, 1
      %p326 = scmp.ne.s32.totalorder %s321, %s323
      %p327 = scmp.eq.s32.totalorder %s25, 0
      %p328 = por %p326, %p327
      %p329 = scmp.ne.s32.totalorder %s321, %s323
      %p330 = scmp.eq.s32.totalorder %s30, 1
      %p331 = por %p329, %p330
      %p332 = scmp.ne.s32.totalorder %s323, %s324
      %p333 = scmp.eq.s32.totalorder %s30, 0
      %p334 = por %p332, %p333
      %p335 = scmp.ne.s32.totalorder %s323, %s324
      %p336 = scmp.eq.s32.totalorder %s31, 1
      %p337 = por %p335, %p336
      %p339 = scmp.ne.s32.totalorder %s324, %s338
      %p340 = scmp.eq.s32.totalorder %s31, 0
      %p341 = por %p339, %p340
      %s343 = sadd.s32 %s342, 1
      %p346 = scmp.eq.s32.totalorder %s25, 1
      %p347 = scmp.ne.s32.totalorder %s342, %s344
      %p348 = scmp.eq.s32.totalorder %s25, 0
      %p349 = por %p347, %p348
      %p350 = scmp.ne.s32.totalorder %s342, %s344
      %p351 = scmp.eq.s32.totalorder %s30, 1
      %p352 = por %p350, %p351
      %p353 = scmp.ne.s32.totalorder %s344, %s345
      %p354 = scmp.eq.s32.totalorder %s30, 0
      %p355 = por %p353, %p354
      %p356 = scmp.ne.s32.totalorder %s344, %s345
      %p357 = scmp.eq.s32.totalorder %s31, 1
      %p358 = por %p356, %p357
      %p360 = scmp.ne.s32.totalorder %s345, %s359
      %p361 = scmp.eq.s32.totalorder %s31, 0
      %p362 = por %p360, %p361
      %s364 = sadd.s32 %s363, 1
      %p367 = scmp.eq.s32.totalorder %s25, 1
      %p368 = scmp.ne.s32.totalorder %s363, %s365
      %p369 = scmp.eq.s32.totalorder %s25, 0
      %p370 = por %p368, %p369
      %p371 = scmp.ne.s32.totalorder %s363, %s365
      %p372 = scmp.eq.s32.totalorder %s30, 1
      %p373 = por %p371, %p372
      %p374 = scmp.ne.s32.totalorder %s365, %s366
      %p375 = scmp.eq.s32.totalorder %s30, 0
      %p376 = por %p374, %p375
      %p377 = scmp.ne.s32.totalorder %s365, %s366
      %p378 = scmp.eq.s32.totalorder %s31, 1
      %p379 = por %p377, %p378
      %p381 = scmp.ne.s32.totalorder %s366, %s380
      %p382 = scmp.eq.s32.totalorder %s31, 0
      %p383 = por %p381, %p382
      %s384 = ssub.s32 %s25, %s32
      %p385 = scmp.eq.s32.totalorder %s384, 0
      %s387 = sadd.s32 %s386, 1
      %s388 = scalar_select %p385, %s386, %s387
      %p391 = pneg %p385
      %p392 = scmp.eq.s32.totalorder %s25, 1
      %p393 = por %p391, %p392
      %p394 = scmp.ne.s32.totalorder %s386, %s389
      %p395 = scmp.eq.s32.totalorder %s25, 0
      %p396 = por %p394, %p395
      %p397 = scmp.ne.s32.totalorder %s386, %s389
      %p398 = scmp.eq.s32.totalorder %s30, 1
      %p399 = por %p397, %p398
      %p400 = scmp.ne.s32.totalorder %s389, %s390
      %p401 = scmp.eq.s32.totalorder %s30, 0
      %p402 = por %p400, %p401
      %p403 = scmp.ne.s32.totalorder %s389, %s390
      %p404 = scmp.eq.s32.totalorder %s31, 1
      %p405 = por %p403, %p404
      %p407 = scmp.ne.s32.totalorder %s390, %s406
      %p408 = scmp.eq.s32.totalorder %s31, 0
      %p409 = por %p407, %p408
      %p410 = scmp.le.s32.totalorder 1, %s25
      %p411 = scmp.lt.s32.totalorder %s25, 3
      %p412 = pnand %p410, %p411
      %p413 = pneg %p412
      // Predicated region
      $region9: #{tpu_custom_call.1} parent=5 // pred_check
        _
      $region10: #{tpu_custom_call.1} parent=5 // pred_check_branch
        %415 = sbr.rel (%p412) target = $region12
      $region11: #{tpu_custom_call.1} parent=5 // pred_region
        %s416 = ssub.s32 %s25, 1
        // Predicated region
        $region13: #{tpu_custom_call.1} parent=11 // pred_check
          %p417 = pneg %p124
        $region14: #{tpu_custom_call.1} parent=11 // pred_check_branch
          %419 = sbr.rel (%p417) target = $region16
        $region15: #{tpu_custom_call.1} parent=11 // pred_region
          _
        $region16: #{tpu_custom_call.1} parent=11 // pred_fallthru
          _
        // Predicated region
        $region17: #{tpu_custom_call.1} parent=11 // pred_check
          %p420 = pneg %p145
        $region18: #{tpu_custom_call.1} parent=11 // pred_check_branch
          %422 = sbr.rel (%p420) target = $region20
        $region19: #{tpu_custom_call.1} parent=11 // pred_region
          _
        $region20: #{tpu_custom_call.1} parent=11 // pred_fallthru
          _
        // Predicated region
        $region21: #{tpu_custom_call.1} parent=11 // pred_check
          %p423 = pneg %p166
        $region22: #{tpu_custom_call.1} parent=11 // pred_check_branch
          %425 = sbr.rel (%p423) target = $region24
        $region23: #{tpu_custom_call.1} parent=11 // pred_region
          _
        $region24: #{tpu_custom_call.1} parent=11 // pred_fallthru
          _
        // Predicated region
        $region25: #{tpu_custom_call.1} parent=11 // pred_check
          %p426 = pneg %p187
        $region26: #{tpu_custom_call.1} parent=11 // pred_check_branch
          %428 = sbr.rel (%p426) target = $region28
        $region27: #{tpu_custom_call.1} parent=11 // pred_region
          _
        $region28: #{tpu_custom_call.1} parent=11 // pred_fallthru
          _
        // Predicated region
        $region29: #{tpu_custom_call.1} parent=11 // pred_check
          %p429 = pneg %p208
        $region30: #{tpu_custom_call.1} parent=11 // pred_check_branch
          %431 = sbr.rel (%p429) target = $region32
        $region31: #{tpu_custom_call.1} parent=11 // pred_region
          _
        $region32: #{tpu_custom_call.1} parent=11 // pred_fallthru
          _
        // Predicated region
        $region33: #{tpu_custom_call.1} parent=11 // pred_check
          %p432 = pneg %p229
        $region34: #{tpu_custom_call.1} parent=11 // pred_check_branch
          %434 = sbr.rel (%p432) target = $region36
        $region35: #{tpu_custom_call.1} parent=11 // pred_region
          _
        $region36: #{tpu_custom_call.1} parent=11 // pred_fallthru
          _
        // Predicated region
        $region37: #{tpu_custom_call.1} parent=11 // pred_check
          %p435 = pneg %p250
        $region38: #{tpu_custom_call.1} parent=11 // pred_check_branch
          %437 = sbr.rel (%p435) target = $region40
        $region39: #{tpu_custom_call.1} parent=11 // pred_region
          _
        $region40: #{tpu_custom_call.1} parent=11 // pred_fallthru
          _
        // Predicated region
        $region41: #{tpu_custom_call.1} parent=11 // pred_check
          %p438 = pneg %p271
        $region42: #{tpu_custom_call.1} parent=11 // pred_check_branch
          %440 = sbr.rel (%p438) target = $region44
        $region43: #{tpu_custom_call.1} parent=11 // pred_region
          _
        $region44: #{tpu_custom_call.1} parent=11 // pred_fallthru
          _
        // Predicated region
        $region45: #{tpu_custom_call.1} parent=11 // pred_check
          %p441 = pneg %p292
        $region46: #{tpu_custom_call.1} parent=11 // pred_check_branch
          %443 = sbr.rel (%p441) target = $region48
        $region47: #{tpu_custom_call.1} parent=11 // pred_region
          _
        $region48: #{tpu_custom_call.1} parent=11 // pred_fallthru
          _
        // Predicated region
        $region49: #{tpu_custom_call.1} parent=11 // pred_check
          %p444 = pneg %p313
        $region50: #{tpu_custom_call.1} parent=11 // pred_check_branch
          %446 = sbr.rel (%p444) target = $region52
        $region51: #{tpu_custom_call.1} parent=11 // pred_region
          _
        $region52: #{tpu_custom_call.1} parent=11 // pred_fallthru
          _
        // Predicated region
        $region53: #{tpu_custom_call.1} parent=11 // pred_check
          %p447 = pneg %p334
        $region54: #{tpu_custom_call.1} parent=11 // pred_check_branch
          %449 = sbr.rel (%p447) target = $region56
        $region55: #{tpu_custom_call.1} parent=11 // pred_region
          _
        $region56: #{tpu_custom_call.1} parent=11 // pred_fallthru
          _
        // Predicated region
        $region57: #{tpu_custom_call.1} parent=11 // pred_check
          %p450 = pneg %p355
        $region58: #{tpu_custom_call.1} parent=11 // pred_check_branch
          %452 = sbr.rel (%p450) target = $region60
        $region59: #{tpu_custom_call.1} parent=11 // pred_region
          _
        $region60: #{tpu_custom_call.1} parent=11 // pred_fallthru
          _
        // Predicated region
        $region61: #{tpu_custom_call.1} parent=11 // pred_check
          %p453 = pneg %p376
        $region62: #{tpu_custom_call.1} parent=11 // pred_check_branch
          %455 = sbr.rel (%p453) target = $region64
        $region63: #{tpu_custom_call.1} parent=11 // pred_region
          _
        $region64: #{tpu_custom_call.1} parent=11 // pred_fallthru
          _
      $region12: #{tpu_custom_call.1} parent=5 // pred_fallthru
        _
      %p456 = scmp.lt.s32.totalorder %s25, 2
      // Predicated region
      $region65: #{tpu_custom_call.1} parent=5 // pred_check
        %p457 = pneg %p456
      $region66: #{tpu_custom_call.1} parent=5 // pred_check_branch
        %459 = sbr.rel (%p457) target = $region68
      $region67: #{tpu_custom_call.1} parent=5 // pred_region
        // Predicated region
        $region69: #{tpu_custom_call.1} parent=67 // pred_check
          %p460 = pneg %p45
        $region70: #{tpu_custom_call.1} parent=67 // pred_check_branch
          %462 = sbr.rel (%p460) target = $region72
        $region71: #{tpu_custom_call.1} parent=67 // pred_region
          %p463 = scmp.lt.s32.totalorder %s25, 1
          %s464 = scalar_select %p463, %s25, 1
          %s465 = smul.addr %s464, 8
          %s466 = scalar_lea.vmem %s0, %s465
        $region72: #{tpu_custom_call.1} parent=67 // pred_fallthru
          _
        // Predicated region
        $region73: #{tpu_custom_call.1} parent=67 // pred_check
          %p467 = pneg %p71
        $region74: #{tpu_custom_call.1} parent=67 // pred_check_branch
          %469 = sbr.rel (%p467) target = $region76
        $region75: #{tpu_custom_call.1} parent=67 // pred_region
          %s470 = smul.u32 2, %s25
          %p471 = scmp.lt.s32.totalorder %s470, 3
          %s472 = scalar_select %p471, %s470, 3
          %s473 = smul.addr %s472, 8
          %s474 = scalar_lea.vmem %s1, %s473
          %s475 = smul.u32 2, %s25
        $region76: #{tpu_custom_call.1} parent=67 // pred_fallthru
          _
        // Predicated region
        $region77: #{tpu_custom_call.1} parent=67 // pred_check
          %p476 = pneg %p97
        $region78: #{tpu_custom_call.1} parent=67 // pred_check_branch
          %478 = sbr.rel (%p476) target = $region80
        $region79: #{tpu_custom_call.1} parent=67 // pred_region
          %s479 = smul.u32 4, %s25
          %p480 = scmp.lt.s32.totalorder %s479, 7
          %s481 = scalar_select %p480, %s479, 7
          %s482 = smul.addr %s481, 8
          %s483 = scalar_lea.vmem %s2, %s482
          %s484 = smul.u32 4, %s25
        $region80: #{tpu_custom_call.1} parent=67 // pred_fallthru
          _
      $region68: #{tpu_custom_call.1} parent=5 // pred_fallthru
        _
      %p485 = scmp.le.s32.totalorder 1, %s25
      %p486 = scmp.lt.s32.totalorder %s25, 3
      %p487 = pnand %p485, %p486
      %p488 = pneg %p487
      // Predicated region
      $region81: #{tpu_custom_call.1} parent=5 // pred_check
        _
      $region82: #{tpu_custom_call.1} parent=5 // pred_check_branch
        %490 = sbr.rel (%p487) target = $region84
      $region83: #{tpu_custom_call.1} parent=5 // pred_region
        %s491 = ssub.s32 %s25, 1
        %p492 = scmp.lt.s32.totalorder %s30, 1
        %s493 = scalar_select %p492, %s30, 1
        %s494 = smul.addr %s493, 8
        %s495 = scalar_lea.vmem %s0, %s494
        %p496 = pneg %p51
        %p497 = pneg %p48
        %s498 = smul.u32 2, %s30
        %p499 = scmp.lt.s32.totalorder %s498, 3
        %s500 = scalar_select %p499, %s498, 3
        %s501 = smul.addr %s500, 8
        %s502 = scalar_lea.vmem %s1, %s501
        %p503 = pneg %p77
        %p504 = pneg %p74
        %s505 = smul.u32 4, %s30
        %p506 = scmp.lt.s32.totalorder %s505, 7
        %s507 = scalar_select %p506, %s505, 7
        %s508 = smul.addr %s507, 8
        %s509 = scalar_lea.vmem %s2, %s508
        %p510 = pneg %p103
        %p511 = pneg %p100
        %p512 = pneg %p124
        %p513 = pneg %p121
        %p514 = pneg %p145
        %p515 = pneg %p142
        %p516 = pneg %p166
        %p517 = pneg %p163
        %p518 = pneg %p187
        %p519 = pneg %p184
        %p520 = pneg %p208
        %p521 = pneg %p205
        %p522 = pneg %p229
        %p523 = pneg %p226
        %p524 = pneg %p250
        %p525 = pneg %p247
        %p526 = pneg %p271
        %p527 = pneg %p268
        %p528 = pneg %p292
        %p529 = pneg %p289
        %p530 = pneg %p313
        %p531 = pneg %p310
        %p532 = pneg %p334
        %p533 = pneg %p331
        %p534 = pneg %p355
        %p535 = pneg %p352
        %p536 = pneg %p376
        %p537 = pneg %p373
        %p538 = pneg %p402
        %p539 = pneg %p399
        %s540 = sand.u32 %s389, 1
        %s541 = scalar_lea.sflag [#allocation3], %s540
        %s542 = sand.u32 %s389, 1
        %s543 = smul.addr %s542, 8
        %s544 = scalar_lea.vmem [#allocation2], %s543
        %p545 = scmp.lt.s32.totalorder %s30, 1
        %s546 = scalar_select %p545, %s30, 1
        %s547 = smul.addr %s546, 8
        %s548 = scalar_lea.vmem %s0, %s547
        %s549 = smul.u32 2, %s30
        %p550 = scmp.lt.s32.totalorder %s549, 3
        %s551 = scalar_select %p550, %s549, 3
        %s552 = smul.addr %s551, 8
        %s553 = scalar_lea.vmem %s1, %s552
        %s554 = smul.u32 2, %s30
        %s555 = smul.u32 4, %s30
        %p556 = scmp.lt.s32.totalorder %s555, 7
        %s557 = scalar_select %p556, %s555, 7
        %s558 = smul.addr %s557, 8
        %s559 = scalar_lea.vmem %s2, %s558
        %s560 = smul.u32 4, %s30
        %v561 = vld [vmem:[%s548] sm:$0xff]
        %v562 = vld [vmem:[%s553] sm:$0xff]
        %v563 = vld [vmem:[%s553 + $0x8] sm:$0xff]
        %v564 = vld [vmem:[%s559] sm:$0xff]
        %v565 = vld [vmem:[%s559 + $0x8] sm:$0xff]
        %v566 = vld [vmem:[%s559 + $0x10] sm:$0xff]
        %v567 = vld [vmem:[%s559 + $0x18] sm:$0xff]
        %v568 = vld [vmem:[%s3] sm:$0xff]
        %v569 = vld [vmem:[%s3 + $0x8] sm:$0xff]
        %v570 = vld [vmem:[%s3 + $0x10] sm:$0xff]
        %v571 = vld [vmem:[%s3 + $0x18] sm:$0xff]
        %v572 = vld [vmem:[%s4] sm:$0xff]
        %v573 = vld [vmem:[%s4 + $0x8] sm:$0xff]
        %v574 = vld [vmem:[%s4 + $0x10] sm:$0xff]
        %v575 = vld [vmem:[%s4 + $0x18] sm:$0xff]
        %v576 = vld [vmem:[%s5] sm:$0xff]
        %v577 = vld [vmem:[%s6] sm:$0xff]
        %v578 = vld [vmem:[%s10] sm:$0xff]
        %v579 = vld [vmem:[%s10 + $0x8] sm:$0xff]
        %v580 = vld [vmem:[%s10 + $0x10] sm:$0xff]
        %v581 = vld [vmem:[%s10 + $0x18] sm:$0xff]
        %vm582 = vcmask 261120
        %v584 = vsel %vm582, %v562, 0
        %v587 = vsel %vm582, %v563, 0
        %589 = vmatprep.subr.mxu0 0.0
        %590 = vmatpush1.msra.mxu0 %v578
        %591 = vmatprep.subr.mxu0 0.0
        %592 = vmatpush1.msra.mxu0 %v579
        %593 = vmatprep.subr.mxu0 0.0
        %594 = vmatpush1.msra.mxu0 %v580
        %595 = vmatprep.subr.mxu0 0.0
        %596 = vmatpush1.msra.mxu0 %v581
        %597 = vmatprep.subr.mxu0 0.0
        %598 = vmatpush1.msra.mxu0 0.0
        %599 = vmatprep.subr.mxu0 0.0
        %600 = vmatpush1.msra.mxu0 0.0
        %601 = vmatprep.subr.mxu0 0.0
        %602 = vmatpush1.msra.mxu0 0.0
        %603 = vmatprep.subr.mxu0 0.0
        %604 = vmatpush1.msra.mxu0 0.0
        %605 = vmatprep.subr.mxu0 0.0
        %606 = vmatpush1.msra.mxu0 0.0
        %607 = vmatprep.subr.mxu0 0.0
        %608 = vmatpush1.msra.mxu0 0.0
        %609 = vmatprep.subr.mxu0 0.0
        %610 = vmatpush1.msra.mxu0 0.0
        %611 = vmatprep.subr.mxu0 0.0
        %612 = vmatpush1.msra.mxu0 0.0
        %613 = vmatprep.subr.mxu0 0.0
        %614 = vmatpush1.msra.mxu0 0.0
        %615 = vmatprep.subr.mxu0 0.0
        %616 = vmatpush1.msra.mxu0 0.0
        %617 = vmatprep.subr.mxu0 0.0
        %618 = vmatpush1.msra.mxu0 0.0
        %619 = vmatprep.subr.mxu0 0.0
        %620 = vmatpush1.msra.mxu0 0.0
        %621 = vmatprep.subr.mxu0 0.0
        %622 = vmatpush1.msra.mxu0 0.0
        %623 = vmatprep.subr.mxu0 0.0
        %624 = vmatpush1.msra.mxu0 0.0
        %625 = vmatprep.subr.mxu0 0.0
        %626 = vmatpush1.msra.mxu0 0.0
        %627 = vmatprep.subr.mxu0 0.0
        %628 = vmatpush1.msra.mxu0 0.0
        %629 = vmatprep.subr.mxu0 0.0
        %630 = vmatpush1.msra.mxu0 0.0
        %631 = vmatprep.subr.mxu0 0.0
        %632 = vmatpush1.msra.mxu0 0.0
        %633 = vmatprep.subr.mxu0 0.0
        %634 = vmatpush1.msra.mxu0 0.0
        %635 = vmatprep.subr.mxu0 0.0
        %636 = vmatpush1.msra.mxu0 0.0
        %637 = vmatprep.subr.mxu0 0.0
        %638 = vmatpush1.msra.mxu0 0.0
        %639 = vmatprep.subr.mxu0 0.0
        %640 = vmatpush1.msra.mxu0 0.0
        %641 = vmatprep.subr.mxu0 0.0
        %642 = vmatpush1.msra.mxu0 0.0
        %643 = vmatprep.subr.mxu0 0.0
        %644 = vmatpush1.msra.mxu0 0.0
        %645 = vmatprep.subr.mxu0 0.0
        %646 = vmatpush1.msra.mxu0 0.0
        %647 = vmatprep.subr.mxu0 0.0
        %648 = vmatpush1.msra.mxu0 0.0
        %649 = vmatprep.subr.mxu0 0.0
        %650 = vmatpush1.msra.mxu0 0.0
        %651 = vmatprep.subr.mxu0 0.0
        %652 = vmatpush1.msra.mxu0 0.0
        %653 = vmatprep.mubr.f32.mxu0 0.0
        %654 = vmatmul.mubr.f32.gmra.mrb[0].mxu0 %v584
        %v655 = vpop.f32.mrb[0].mxu0
        %v656 = vadd.f32 0.0, %v655
        %v657 = vpop.f32.mrb[0].mxu0
        %658 = vmatprep.mubr.f32.mxu0 0.0
        %659 = vmatmul.mubr.f32.gmra.mrb[0].mxu0 %v587
        %v660 = vpop.f32.mrb[0].mxu0
        %v661 = vadd.f32 0.0, %v660
        %v662 = vpop.f32.mrb[0].mxu0
        %663 = vdwg.mxu0
        %v664 = vld [vmem:[%s7] sm:$0x1]
        %v665 = vld [vmem:[%s8] sm:$0x1]
        %v666 = vsel %vm582, %v561, 0.0
        %667 = vadd.xlane.f32.xlu0 %v666
        %v668 = vpop.xlane.xlu0 %667
        %v669 = vrcp.pop 32.0
        %v670 = vmul.f32 %v668, %v669
        %v671 = vsub.f32 %v561, %v670
        %v672 = vmul.f32 %v671, %v671
        %v673 = vsel %vm582, %v672, 0.0
        %674 = vadd.xlane.f32.xlu0 %v673
        %v675 = vpop.xlane.xlu0 %674
        %v676 = vmul.f32 %v675, %v669
        %v677 = vadd.f32 %v676, 1e-05
        %v678 = vrsqrt.pop %v677
        %v679 = vmul.f32 %v671, %v678
        %v681 = vlaneseq
        %v682 = vshrl.u32 %v681, 7
        %v683 = vsub.s32 0, %v682
        %v684 = vrot.slane %v664, %v683
        %v686 = vmul.f32 %v679, %v684
        %v688 = vlaneseq
        %v689 = vshrl.u32 %v688, 7
        %v690 = vsub.s32 0, %v689
        %v691 = vrot.slane %v665, %v690
        %v693 = vadd.f32 %v686, %v691
        %v694 = vld [vmem:[%s9] sm:$0xff]
        %v695 = vld [vmem:[%s9 + $0x8] sm:$0xff]
        %v696 = vld [vmem:[%s9 + $0x10] sm:$0xff]
        %v697 = vld [vmem:[%s9 + $0x18] sm:$0xff]
        %v698 = vld [vmem:[%s9 + $0x20] sm:$0xff]
        %v699 = vld [vmem:[%s9 + $0x28] sm:$0xff]
        %v700 = vld [vmem:[%s9 + $0x30] sm:$0xff]
        %v701 = vld [vmem:[%s9 + $0x38] sm:$0xff]
        %v702 = vld [vmem:[%s9 + $0x40] sm:$0xff]
        %v703 = vld [vmem:[%s9 + $0x48] sm:$0xff]
        %v704 = vld [vmem:[%s9 + $0x50] sm:$0xff]
        %v705 = vld [vmem:[%s9 + $0x58] sm:$0xff]
        %v707 = vsel %vm582, %v693, 0
        %709 = vmatprep.subr.mxu0 %v695
        %710 = vmatpush1.msra.mxu0 %v694
        %711 = vmatprep.subr.mxu0 %v698
        %712 = vmatpush1.msra.mxu0 %v697
        %713 = vmatprep.subr.mxu0 %v701
        %714 = vmatpush1.msra.mxu0 %v700
        %715 = vmatprep.subr.mxu0 %v704
        %716 = vmatpush1.msra.mxu0 %v703
        %717 = vmatprep.subr.mxu0 0.0
        %718 = vmatpush1.msra.mxu0 0.0
        %719 = vmatprep.subr.mxu0 0.0
        %720 = vmatpush1.msra.mxu0 0.0
        %721 = vmatprep.subr.mxu0 0.0
        %722 = vmatpush1.msra.mxu0 0.0
        %723 = vmatprep.subr.mxu0 0.0
        %724 = vmatpush1.msra.mxu0 0.0
        %725 = vmatprep.subr.mxu0 0.0
        %726 = vmatpush1.msra.mxu0 0.0
        %727 = vmatprep.subr.mxu0 0.0
        %728 = vmatpush1.msra.mxu0 0.0
        %729 = vmatprep.subr.mxu0 0.0
        %730 = vmatpush1.msra.mxu0 0.0
        %731 = vmatprep.subr.mxu0 0.0
        %732 = vmatpush1.msra.mxu0 0.0
        %733 = vmatprep.subr.mxu0 0.0
        %734 = vmatpush1.msra.mxu0 0.0
        %735 = vmatprep.subr.mxu0 0.0
        %736 = vmatpush1.msra.mxu0 0.0
        %737 = vmatprep.subr.mxu0 0.0
        %738 = vmatpush1.msra.mxu0 0.0
        %739 = vmatprep.subr.mxu0 0.0
        %740 = vmatpush1.msra.mxu0 0.0
        %741 = vmatprep.subr.mxu0 0.0
        %742 = vmatpush1.msra.mxu0 0.0
        %743 = vmatprep.subr.mxu0 0.0
        %744 = vmatpush1.msra.mxu0 0.0
        %745 = vmatprep.subr.mxu0 0.0
        %746 = vmatpush1.msra.mxu0 0.0
        %747 = vmatprep.subr.mxu0 0.0
        %748 = vmatpush1.msra.mxu0 0.0
        %749 = vmatprep.subr.mxu0 0.0
        %750 = vmatpush1.msra.mxu0 0.0
        %751 = vmatprep.subr.mxu0 0.0
        %752 = vmatpush1.msra.mxu0 0.0
        %753 = vmatprep.subr.mxu0 0.0
        %754 = vmatpush1.msra.mxu0 0.0
        %755 = vmatprep.subr.mxu0 0.0
        %756 = vmatpush1.msra.mxu0 0.0
        %757 = vmatprep.subr.mxu0 0.0
        %758 = vmatpush1.msra.mxu0 0.0
        %759 = vmatprep.subr.mxu0 0.0
        %760 = vmatpush1.msra.mxu0 0.0
        %761 = vmatprep.subr.mxu0 0.0
        %762 = vmatpush1.msra.mxu0 0.0
        %763 = vmatprep.subr.mxu0 0.0
        %764 = vmatpush1.msra.mxu0 0.0
        %765 = vmatprep.subr.mxu0 0.0
        %766 = vmatpush1.msra.mxu0 0.0
        %767 = vmatprep.subr.mxu0 0.0
        %768 = vmatpush1.msra.mxu0 0.0
        %769 = vmatprep.subr.mxu0 0.0
        %770 = vmatpush1.msra.mxu0 0.0
        %771 = vmatprep.subr.mxu0 0.0
        %772 = vmatpush1.msra.mxu0 0.0
        %773 = vmatprep.mubr.f32.mxu0 0.0
        %774 = vmatmul.mubr.f32.gmra.mrb[0].mxu0 %v707
        %v775 = vpop.f32.mrb[0].mxu0
        %v776 = vadd.f32 0.0, %v775
        %v777 = vpop.f32.mrb[0].mxu0
        %v778 = vadd.f32 0.0, %v777
        %779 = vdwg.mxu0
        %780 = vmatprep.subr.mxu0 0.0
        %781 = vmatpush1.msra.mxu0 %v696
        %782 = vmatprep.subr.mxu0 0.0
        %783 = vmatpush1.msra.mxu0 %v699
        %784 = vmatprep.subr.mxu0 0.0
        %785 = vmatpush1.msra.mxu0 %v702
        %786 = vmatprep.subr.mxu0 0.0
        %787 = vmatpush1.msra.mxu0 %v705
        %788 = vmatprep.subr.mxu0 0.0
        %789 = vmatpush1.msra.mxu0 0.0
        %790 = vmatprep.subr.mxu0 0.0
        %791 = vmatpush1.msra.mxu0 0.0
        %792 = vmatprep.subr.mxu0 0.0
        %793 = vmatpush1.msra.mxu0 0.0
        %794 = vmatprep.subr.mxu0 0.0
        %795 = vmatpush1.msra.mxu0 0.0
        %796 = vmatprep.subr.mxu0 0.0
        %797 = vmatpush1.msra.mxu0 0.0
        %798 = vmatprep.subr.mxu0 0.0
        %799 = vmatpush1.msra.mxu0 0.0
        %800 = vmatprep.subr.mxu0 0.0
        %801 = vmatpush1.msra.mxu0 0.0
        %802 = vmatprep.subr.mxu0 0.0
        %803 = vmatpush1.msra.mxu0 0.0
        %804 = vmatprep.subr.mxu0 0.0
        %805 = vmatpush1.msra.mxu0 0.0
        %806 = vmatprep.subr.mxu0 0.0
        %807 = vmatpush1.msra.mxu0 0.0
        %808 = vmatprep.subr.mxu0 0.0
        %809 = vmatpush1.msra.mxu0 0.0
        %810 = vmatprep.subr.mxu0 0.0
        %811 = vmatpush1.msra.mxu0 0.0
        %812 = vmatprep.subr.mxu0 0.0
        %813 = vmatpush1.msra.mxu0 0.0
        %814 = vmatprep.subr.mxu0 0.0
        %815 = vmatpush1.msra.mxu0 0.0
        %816 = vmatprep.subr.mxu0 0.0
        %817 = vmatpush1.msra.mxu0 0.0
        %818 = vmatprep.subr.mxu0 0.0
        %819 = vmatpush1.msra.mxu0 0.0
        %820 = vmatprep.subr.mxu0 0.0
        %821 = vmatpush1.msra.mxu0 0.0
        %822 = vmatprep.subr.mxu0 0.0
        %823 = vmatpush1.msra.mxu0 0.0
        %824 = vmatprep.subr.mxu0 0.0
        %825 = vmatpush1.msra.mxu0 0.0
        %826 = vmatprep.subr.mxu0 0.0
        %827 = vmatpush1.msra.mxu0 0.0
        %828 = vmatprep.subr.mxu0 0.0
        %829 = vmatpush1.msra.mxu0 0.0
        %830 = vmatprep.subr.mxu0 0.0
        %831 = vmatpush1.msra.mxu0 0.0
        %832 = vmatprep.subr.mxu0 0.0
        %833 = vmatpush1.msra.mxu0 0.0
        %834 = vmatprep.subr.mxu0 0.0
        %835 = vmatpush1.msra.mxu0 0.0
        %836 = vmatprep.subr.mxu0 0.0
        %837 = vmatpush1.msra.mxu0 0.0
        %838 = vmatprep.subr.mxu0 0.0
        %839 = vmatpush1.msra.mxu0 0.0
        %840 = vmatprep.subr.mxu0 0.0
        %841 = vmatpush1.msra.mxu0 0.0
        %842 = vmatprep.subr.mxu0 0.0
        %843 = vmatpush1.msra.mxu0 0.0
        %844 = vmatprep.mubr.f32.mxu0 0.0
        %845 = vmatmul.mubr.f32.gmra.mrb[0].mxu0 %v707
        %v846 = vpop.f32.mrb[0].mxu0
        %v847 = vadd.f32 0.0, %v846
        %v848 = vpop.f32.mrb[0].mxu0
        %849 = vdwg.mxu0
        %851 = vrot.lane.b32.xlu0 %v776, 120
        %v852 = vpop.permute.xlu0 %851
        %853 = vrot.lane.b32.xlu0 %v776, 112
        %v854 = vpop.permute.xlu0 %853
        %855 = vrot.lane.b32.xlu0 %v776, 104
        %v856 = vpop.permute.xlu0 %855
        %vm857 = vcmask 64512
        %v858 = vsel %vm857, %v776, 0
        %v860 = vsel %vm857, %v852, 0
        %v862 = vsel %vm857, %v854, 0
        %v864 = vsel %vm857, %v856, 0
        %v867 = vsel %vm857, %v656, 0
        %v870 = vsel %vm857, %v661, 0
        %872 = vmatprep.subr.mxu0 0.0
        %873 = vmatpush1.xpose.msra.mxu0 %v867
        %874 = vmatprep.subr.mxu0 0.0
        %875 = vmatpush1.xpose.msra.mxu0 %v870
        %876 = vmatprep.subr.mxu0 0.0
        %877 = vmatpush1.xpose.msra.mxu0 0.0
        %878 = vmatprep.subr.mxu0 0.0
        %879 = vmatpush1.xpose.msra.mxu0 0.0
        %880 = vmatprep.subr.mxu0 0.0
        %881 = vmatpush1.xpose.msra.mxu0 0.0
        %882 = vmatprep.subr.mxu0 0.0
        %883 = vmatpush1.xpose.msra.mxu0 0.0
        %884 = vmatprep.subr.mxu0 0.0
        %885 = vmatpush1.xpose.msra.mxu0 0.0
        %886 = vmatprep.subr.mxu0 0.0
        %887 = vmatpush1.xpose.msra.mxu0 0.0
        %888 = vmatprep.subr.mxu0 0.0
        %889 = vmatpush1.xpose.msra.mxu0 0.0
        %890 = vmatprep.subr.mxu0 0.0
        %891 = vmatpush1.xpose.msra.mxu0 0.0
        %892 = vmatprep.subr.mxu0 0.0
        %893 = vmatpush1.xpose.msra.mxu0 0.0
        %894 = vmatprep.subr.mxu0 0.0
        %895 = vmatpush1.xpose.msra.mxu0 0.0
        %896 = vmatprep.subr.mxu0 0.0
        %897 = vmatpush1.xpose.msra.mxu0 0.0
        %898 = vmatprep.subr.mxu0 0.0
        %899 = vmatpush1.xpose.msra.mxu0 0.0
        %900 = vmatprep.subr.mxu0 0.0
        %901 = vmatpush1.xpose.msra.mxu0 0.0
        %902 = vmatprep.subr.mxu0 0.0
        %903 = vmatpush1.xpose.msra.mxu0 0.0
        %904 = vmatprep.subr.mxu0 0.0
        %905 = vmatpush1.xpose.msra.mxu0 0.0
        %906 = vmatprep.subr.mxu0 0.0
        %907 = vmatpush1.xpose.msra.mxu0 0.0
        %908 = vmatprep.subr.mxu0 0.0
        %909 = vmatpush1.xpose.msra.mxu0 0.0
        %910 = vmatprep.subr.mxu0 0.0
        %911 = vmatpush1.xpose.msra.mxu0 0.0
        %912 = vmatprep.subr.mxu0 0.0
        %913 = vmatpush1.xpose.msra.mxu0 0.0
        %914 = vmatprep.subr.mxu0 0.0
        %915 = vmatpush1.xpose.msra.mxu0 0.0
        %916 = vmatprep.subr.mxu0 0.0
        %917 = vmatpush1.xpose.msra.mxu0 0.0
        %918 = vmatprep.subr.mxu0 0.0
        %919 = vmatpush1.xpose.msra.mxu0 0.0
        %920 = vmatprep.subr.mxu0 0.0
        %921 = vmatpush1.xpose.msra.mxu0 0.0
        %922 = vmatprep.subr.mxu0 0.0
        %923 = vmatpush1.xpose.msra.mxu0 0.0
        %924 = vmatprep.subr.mxu0 0.0
        %925 = vmatpush1.xpose.msra.mxu0 0.0
        %926 = vmatprep.subr.mxu0 0.0
        %927 = vmatpush1.xpose.msra.mxu0 0.0
        %928 = vmatprep.subr.mxu0 0.0
        %929 = vmatpush1.xpose.msra.mxu0 0.0
        %930 = vmatprep.subr.mxu0 0.0
        %931 = vmatpush1.xpose.msra.mxu0 0.0
        %932 = vmatprep.subr.mxu0 0.0
        %933 = vmatpush1.xpose.msra.mxu0 0.0
        %934 = vmatprep.subr.mxu0 0.0
        %935 = vmatpush1.xpose.msra.mxu0 0.0
        %936 = vmatprep.mubr.f32.mxu0 0.0
        %937 = vmatmul.mubr.f32.gmra.mrb[0].mxu0 %v858
        %v938 = vpop.f32.mrb[0].mxu0
        %v939 = vadd.f32 %v564, %v938
        %v940 = vpop.f32.mrb[0].mxu0
        %941 = vmatprep.mubr.f32.mxu0 0.0
        %942 = vmatmul.mubr.f32.gmra.mrb[0].mxu0 %v860
        %v943 = vpop.f32.mrb[0].mxu0
        %v944 = vadd.f32 %v565, %v943
        %v945 = vpop.f32.mrb[0].mxu0
        %946 = vmatprep.mubr.f32.mxu0 0.0
        %947 = vmatmul.mubr.f32.gmra.mrb[0].mxu0 %v862
        %v948 = vpop.f32.mrb[0].mxu0
        %v949 = vadd.f32 %v566, %v948
        %v950 = vpop.f32.mrb[0].mxu0
        %951 = vmatprep.mubr.f32.mxu0 0.0
        %952 = vmatmul.mubr.f32.gmra.mrb[0].mxu0 %v864
        %v953 = vpop.f32.mrb[0].mxu0
        %v954 = vadd.f32 %v567, %v953
        %v955 = vpop.f32.mrb[0].mxu0
        %956 = vdwg.mxu0
        %vm957 = vcmask 130048
        %v958 = vsel %vm957, %v939, -inf
        %959 = vmax.xlane.f32.xlu0 %v958
        %v960 = vpop.xlane.xlu0 %959
        %v961 = vsel %vm957, %v944, -inf
        %962 = vmax.xlane.f32.xlu0 %v961
        %v963 = vpop.xlane.xlu0 %962
        %v964 = vsel %vm957, %v949, -inf
        %965 = vmax.xlane.f32.xlu0 %v964
        %v966 = vpop.xlane.xlu0 %965
        %v967 = vsel %vm957, %v954, -inf
        %968 = vmax.xlane.f32.xlu0 %v967
        %v969 = vpop.xlane.xlu0 %968
        %v970 = vsub.f32 %v939, %v960
        %v971 = vsub.f32 %v944, %v963
        %v972 = vsub.f32 %v949, %v966
        %v973 = vsub.f32 %v954, %v969
        %v974 = vmul.f32 %v970, 1.442695
        %v975 = vpow.pop %v974
        %v976 = vmul.f32 %v971, 1.442695
        %v977 = vpow.pop %v976
        %v978 = vmul.f32 %v972, 1.442695
        %v979 = vpow.pop %v978
        %v980 = vmul.f32 %v973, 1.442695
        %v981 = vpow.pop %v980
        %v982 = vsel %vm957, %v975, 0.0
        %983 = vadd.xlane.f32.xlu0 %v982
        %v984 = vpop.xlane.xlu0 %983
        %v985 = vsel %vm957, %v977, 0.0
        %986 = vadd.xlane.f32.xlu0 %v985
        %v987 = vpop.xlane.xlu0 %986
        %v988 = vsel %vm957, %v979, 0.0
        %989 = vadd.xlane.f32.xlu0 %v988
        %v990 = vpop.xlane.xlu0 %989
        %v991 = vsel %vm957, %v981, 0.0
        %992 = vadd.xlane.f32.xlu0 %v991
        %v993 = vpop.xlane.xlu0 %992
        %v994 = vrcp.pop %v984
        %v995 = vrcp.pop %v987
        %v996 = vrcp.pop %v990
        %v997 = vrcp.pop %v993
        %v998 = vmul.f32 %v975, %v994
        %v999 = vmul.f32 %v977, %v995
        %v1000 = vmul.f32 %v979, %v996
        %v1001 = vmul.f32 %v981, %v997
        %1002 = vrot.lane.b32.xlu0 %v656, 120
        %v1003 = vpop.permute.xlu0 %1002
        %1004 = vrot.lane.b32.xlu0 %v661, 120
        %v1005 = vpop.permute.xlu0 %1004
        %v1009 = vsel %vm957, %v998, 0
        %v1012 = vsel %vm957, %v999, 0
        %v1015 = vsel %vm957, %v1000, 0
        %v1018 = vsel %vm957, %v1001, 0
        %1020 = vmatprep.subr.mxu0 0.0
        %1021 = vmatpush1.msra.mxu0 %v1003
        %1022 = vmatprep.subr.mxu0 0.0
        %1023 = vmatpush1.msra.mxu0 %v1005
        %1024 = vmatprep.subr.mxu0 0.0
        %1025 = vmatpush1.msra.mxu0 0.0
        %1026 = vmatprep.subr.mxu0 0.0
        %1027 = vmatpush1.msra.mxu0 0.0
        %1028 = vmatprep.subr.mxu0 0.0
        %1029 = vmatpush1.msra.mxu0 0.0
        %1030 = vmatprep.subr.mxu0 0.0
        %1031 = vmatpush1.msra.mxu0 0.0
        %1032 = vmatprep.subr.mxu0 0.0
        %1033 = vmatpush1.msra.mxu0 0.0
        %1034 = vmatprep.subr.mxu0 0.0
        %1035 = vmatpush1.msra.mxu0 0.0
        %1036 = vmatprep.subr.mxu0 0.0
        %1037 = vmatpush1.msra.mxu0 0.0
        %1038 = vmatprep.subr.mxu0 0.0
        %1039 = vmatpush1.msra.mxu0 0.0
        %1040 = vmatprep.subr.mxu0 0.0
        %1041 = vmatpush1.msra.mxu0 0.0
        %1042 = vmatprep.subr.mxu0 0.0
        %1043 = vmatpush1.msra.mxu0 0.0
        %1044 = vmatprep.subr.mxu0 0.0
        %1045 = vmatpush1.msra.mxu0 0.0
        %1046 = vmatprep.subr.mxu0 0.0
        %1047 = vmatpush1.msra.mxu0 0.0
        %1048 = vmatprep.subr.mxu0 0.0
        %1049 = vmatpush1.msra.mxu0 0.0
        %1050 = vmatprep.subr.mxu0 0.0
        %1051 = vmatpush1.msra.mxu0 0.0
        %1052 = vmatprep.subr.mxu0 0.0
        %1053 = vmatpush1.msra.mxu0 0.0
        %1054 = vmatprep.subr.mxu0 0.0
        %1055 = vmatpush1.msra.mxu0 0.0
        %1056 = vmatprep.subr.mxu0 0.0
        %1057 = vmatpush1.msra.mxu0 0.0
        %1058 = vmatprep.subr.mxu0 0.0
        %1059 = vmatpush1.msra.mxu0 0.0
        %1060 = vmatprep.subr.mxu0 0.0
        %1061 = vmatpush1.msra.mxu0 0.0
        %1062 = vmatprep.subr.mxu0 0.0
        %1063 = vmatpush1.msra.mxu0 0.0
        %1064 = vmatprep.subr.mxu0 0.0
        %1065 = vmatpush1.msra.mxu0 0.0
        %1066 = vmatprep.subr.mxu0 0.0
        %1067 = vmatpush1.msra.mxu0 0.0
        %1068 = vmatprep.subr.mxu0 0.0
        %1069 = vmatpush1.msra.mxu0 0.0
        %1070 = vmatprep.subr.mxu0 0.0
        %1071 = vmatpush1.msra.mxu0 0.0
        %1072 = vmatprep.subr.mxu0 0.0
        %1073 = vmatpush1.msra.mxu0 0.0
        %1074 = vmatprep.subr.mxu0 0.0
        %1075 = vmatpush1.msra.mxu0 0.0
        %1076 = vmatprep.subr.mxu0 0.0
        %1077 = vmatpush1.msra.mxu0 0.0
        %1078 = vmatprep.subr.mxu0 0.0
        %1079 = vmatpush1.msra.mxu0 0.0
        %1080 = vmatprep.subr.mxu0 0.0
        %1081 = vmatpush1.msra.mxu0 0.0
        %1082 = vmatprep.subr.mxu0 0.0
        %1083 = vmatpush1.msra.mxu0 0.0
        %1084 = vmatprep.mubr.f32.mxu0 0.0
        %1085 = vmatmul.mubr.f32.gmra.mrb[0].mxu0 %v1009
        %v1086 = vpop.f32.mrb[0].mxu0
        %v1087 = vadd.f32 0.0, %v1086
        %v1088 = vpop.f32.mrb[0].mxu0
        %1089 = vmatprep.mubr.f32.mxu0 0.0
        %1090 = vmatmul.mubr.f32.gmra.mrb[0].mxu0 %v1012
        %v1091 = vpop.f32.mrb[0].mxu0
        %v1092 = vadd.f32 0.0, %v1091
        %v1093 = vpop.f32.mrb[0].mxu0
        %1094 = vmatprep.mubr.f32.mxu0 0.0
        %1095 = vmatmul.mubr.f32.gmra.mrb[0].mxu0 %v1015
        %v1096 = vpop.f32.mrb[0].mxu0
        %v1097 = vadd.f32 0.0, %v1096
        %v1098 = vpop.f32.mrb[0].mxu0
        %1099 = vmatprep.mubr.f32.mxu0 0.0
        %1100 = vmatmul.mubr.f32.gmra.mrb[0].mxu0 %v1018
        %v1101 = vpop.f32.mrb[0].mxu0
        %v1102 = vadd.f32 0.0, %v1101
        %v1103 = vpop.f32.mrb[0].mxu0
        %1104 = vdwg.mxu0
        %1106 = vrot.lane.b32.xlu0 %v1092, 8
        %v1107 = vpop.permute.xlu0 %1106
        %1110 = vrot.lane.b32.xlu0 %v1097, 16
        %v1111 = vpop.permute.xlu0 %1110
        %1114 = vrot.lane.b32.xlu0 %v1102, 24
        %v1115 = vpop.permute.xlu0 %1114
        %v1117 = vsel %vm857, %v1087, %v1107
        %v1118 = vsel %vm957, %v1117, %v1111
        %vm1119 = vcmask 195584
        %v1120 = vsel %vm1119, %v1118, %v1115
        %v1121 = vxor.u32 %v778, 2147483648
        %v1122 = vxor.u32 %v847, 2147483648
        %v1123 = vmul.f32 %v1121, 1.442695
        %v1124 = vpow.pop %v1123
        %v1125 = vmul.f32 %v1122, 1.442695
        %v1126 = vpow.pop %v1125
        %v1127 = vadd.f32 %v1124, 1.0
        %v1128 = vadd.f32 %v1126, 1.0
        %v1129 = vrcp.pop %v1127
        %v1130 = vmul.f32 1.0, %v1129
        %v1131 = vrcp.pop %v1128
        %v1132 = vmul.f32 1.0, %v1131
        %v1133 = vmul.f32 %v778, %v1130
        %v1134 = vmul.f32 %v847, %v1132
        %v1135 = vmul.f32 %v1133, %v776
        %v1136 = vmul.f32 %v1134, %v778
        %v1137 = vsel %vm582, %v1120, %v1135
        %v1138 = vld [vmem:[%s11] sm:$0xff]
        %v1139 = vld [vmem:[%s11 + $0x8] sm:$0xff]
        %v1140 = vld [vmem:[%s11 + $0x10] sm:$0xff]
        %v1141 = vld [vmem:[%s11 + $0x18] sm:$0xff]
        %v1142 = vld [vmem:[%s11 + $0x20] sm:$0xff]
        %v1143 = vld [vmem:[%s11 + $0x28] sm:$0xff]
        %v1144 = vld [vmem:[%s11 + $0x30] sm:$0xff]
        %v1145 = vld [vmem:[%s11 + $0x38] sm:$0xff]
        %v1146 = vld [vmem:[%s11 + $0x40] sm:$0xff]
        %v1147 = vld [vmem:[%s11 + $0x48] sm:$0xff]
        %v1148 = vld [vmem:[%s11 + $0x50] sm:$0xff]
        %v1149 = vld [vmem:[%s11 + $0x58] sm:$0xff]
        %v1150 = vld [vmem:[%s11 + $0x60] sm:$0xff]
        %v1151 = vld [vmem:[%s11 + $0x68] sm:$0xff]
        %v1152 = vld [vmem:[%s11 + $0x70] sm:$0xff]
        %v1153 = vld [vmem:[%s11 + $0x78] sm:$0xff]
        %v1154 = vld [vmem:[%s11 + $0x80] sm:$0xff]
        %v1155 = vld [vmem:[%s11 + $0x88] sm:$0xff]
        %v1156 = vld [vmem:[%s11 + $0x90] sm:$0xff]
        %v1157 = vld [vmem:[%s11 + $0x98] sm:$0xff]
        %v1159 = vsel %vm582, %v1136, 0
        %1161 = vmatprep.subr.mxu0 0.0
        %1162 = vmatpush1.msra.mxu0 %v1138
        %1163 = vmatprep.subr.mxu0 0.0
        %1164 = vmatpush1.msra.mxu0 %v1139
        %1165 = vmatprep.subr.mxu0 0.0
        %1166 = vmatpush1.msra.mxu0 %v1140
        %1167 = vmatprep.subr.mxu0 0.0
        %1168 = vmatpush1.msra.mxu0 %v1141
        %1169 = vmatprep.subr.mxu0 0.0
        %1170 = vmatpush1.msra.mxu0 %v1142
        %1171 = vmatprep.subr.mxu0 0.0
        %1172 = vmatpush1.msra.mxu0 %v1143
        %1173 = vmatprep.subr.mxu0 0.0
        %1174 = vmatpush1.msra.mxu0 %v1144
        %1175 = vmatprep.subr.mxu0 0.0
        %1176 = vmatpush1.msra.mxu0 %v1145
        %1177 = vmatprep.subr.mxu0 0.0
        %1178 = vmatpush1.msra.mxu0 %v1146
        %1179 = vmatprep.subr.mxu0 0.0
        %1180 = vmatpush1.msra.mxu0 %v1147
        %1181 = vmatprep.subr.mxu0 0.0
        %1182 = vmatpush1.msra.mxu0 %v1148
        %1183 = vmatprep.subr.mxu0 0.0
        %1184 = vmatpush1.msra.mxu0 %v1149
        %1185 = vmatprep.subr.mxu0 0.0
        %1186 = vmatpush1.msra.mxu0 %v1150
        %1187 = vmatprep.subr.mxu0 0.0
        %1188 = vmatpush1.msra.mxu0 %v1151
        %1189 = vmatprep.subr.mxu0 0.0
        %1190 = vmatpush1.msra.mxu0 %v1152
        %1191 = vmatprep.subr.mxu0 0.0
        %1192 = vmatpush1.msra.mxu0 %v1153
        %1193 = vmatprep.subr.mxu0 0.0
        %1194 = vmatpush1.msra.mxu0 %v1154
        %1195 = vmatprep.subr.mxu0 0.0
        %1196 = vmatpush1.msra.mxu0 %v1155
        %1197 = vmatprep.subr.mxu0 0.0
        %1198 = vmatpush1.msra.mxu0 %v1156
        %1199 = vmatprep.subr.mxu0 0.0
        %1200 = vmatpush1.msra.mxu0 %v1157
        %1201 = vmatprep.subr.mxu0 0.0
        %1202 = vmatpush1.msra.mxu0 0.0
        %1203 = vmatprep.subr.mxu0 0.0
        %1204 = vmatpush1.msra.mxu0 0.0
        %1205 = vmatprep.subr.mxu0 0.0
        %1206 = vmatpush1.msra.mxu0 0.0
        %1207 = vmatprep.subr.mxu0 0.0
        %1208 = vmatpush1.msra.mxu0 0.0
        %1209 = vmatprep.subr.mxu0 0.0
        %1210 = vmatpush1.msra.mxu0 0.0
        %1211 = vmatprep.subr.mxu0 0.0
        %1212 = vmatpush1.msra.mxu0 0.0
        %1213 = vmatprep.subr.mxu0 0.0
        %1214 = vmatpush1.msra.mxu0 0.0
        %1215 = vmatprep.subr.mxu0 0.0
        %1216 = vmatpush1.msra.mxu0 0.0
        %1217 = vmatprep.subr.mxu0 0.0
        %1218 = vmatpush1.msra.mxu0 0.0
        %1219 = vmatprep.subr.mxu0 0.0
        %1220 = vmatpush1.msra.mxu0 0.0
        %1221 = vmatprep.subr.mxu0 0.0
        %1222 = vmatpush1.msra.mxu0 0.0
        %1223 = vmatprep.subr.mxu0 0.0
        %1224 = vmatpush1.msra.mxu0 0.0
        %1225 = vmatprep.mubr.f32.mxu0 %v1159
        %1226 = vmatmul.mubr.f32.gmra.mrb[0].mxu0 %v1137
        %v1227 = vpop.f32.mrb[0].mxu0
        %v1228 = vadd.f32 %v561, %v1227
        %v1229 = vpop.f32.mrb[0].mxu0
        %1230 = vdwg.mxu0
        %v1231 = vld [vmem:[%s12] sm:$0x1]
        %v1232 = vld [vmem:[%s13] sm:$0x1]
        %v1233 = vsel %vm582, %v1228, 0.0
        %1234 = vadd.xlane.f32.xlu0 %v1233
        %v1235 = vpop.xlane.xlu0 %1234
        %v1236 = vmul.f32 %v1235, %v669
        %v1237 = vsub.f32 %v1228, %v1236
        %v1238 = vmul.f32 %v1237, %v1237
        %v1239 = vsel %vm582, %v1238, 0.0
        %1240 = vadd.xlane.f32.xlu0 %v1239
        %v1241 = vpop.xlane.xlu0 %1240
        %v1242 = vmul.f32 %v1241, %v669
        %v1243 = vadd.f32 %v1242, 1e-05
        %v1244 = vrsqrt.pop %v1243
        %v1245 = vmul.f32 %v1237, %v1244
        %v1247 = vlaneseq
        %v1248 = vshrl.u32 %v1247, 7
        %v1249 = vsub.s32 0, %v1248
        %v1250 = vrot.slane %v1231, %v1249
        %v1252 = vmul.f32 %v1245, %v1250
        %v1254 = vlaneseq
        %v1255 = vshrl.u32 %v1254, 7
        %v1256 = vsub.s32 0, %v1255
        %v1257 = vrot.slane %v1232, %v1256
        %v1259 = vadd.f32 %v1252, %v1257
        %v1260 = vld [vmem:[%s14] sm:$0xff]
        %v1261 = vld [vmem:[%s14 + $0x8] sm:$0xff]
        %v1262 = vld [vmem:[%s14 + $0x10] sm:$0xff]
        %v1263 = vld [vmem:[%s14 + $0x18] sm:$0xff]
        %v1264 = vld [vmem:[%s14 + $0x20] sm:$0xff]
        %v1265 = vld [vmem:[%s14 + $0x28] sm:$0xff]
        %v1266 = vld [vmem:[%s14 + $0x30] sm:$0xff]
        %v1267 = vld [vmem:[%s14 + $0x38] sm:$0xff]
        %v1268 = vld [vmem:[%s14 + $0x40] sm:$0xff]
        %v1269 = vld [vmem:[%s14 + $0x48] sm:$0xff]
        %v1270 = vld [vmem:[%s14 + $0x50] sm:$0xff]
        %v1271 = vld [vmem:[%s14 + $0x58] sm:$0xff]
        %v1273 = vsel %vm582, %v1259, 0
        %1275 = vmatprep.subr.mxu0 %v1261
        %1276 = vmatpush1.msra.mxu0 %v1260
        %1277 = vmatprep.subr.mxu0 %v1264
        %1278 = vmatpush1.msra.mxu0 %v1263
        %1279 = vmatprep.subr.mxu0 %v1267
        %1280 = vmatpush1.msra.mxu0 %v1266
        %1281 = vmatprep.subr.mxu0 %v1270
        %1282 = vmatpush1.msra.mxu0 %v1269
        %1283 = vmatprep.subr.mxu0 0.0
        %1284 = vmatpush1.msra.mxu0 0.0
        %1285 = vmatprep.subr.mxu0 0.0
        %1286 = vmatpush1.msra.mxu0 0.0
        %1287 = vmatprep.subr.mxu0 0.0
        %1288 = vmatpush1.msra.mxu0 0.0
        %1289 = vmatprep.subr.mxu0 0.0
        %1290 = vmatpush1.msra.mxu0 0.0
        %1291 = vmatprep.subr.mxu0 0.0
        %1292 = vmatpush1.msra.mxu0 0.0
        %1293 = vmatprep.subr.mxu0 0.0
        %1294 = vmatpush1.msra.mxu0 0.0
        %1295 = vmatprep.subr.mxu0 0.0
        %1296 = vmatpush1.msra.mxu0 0.0
        %1297 = vmatprep.subr.mxu0 0.0
        %1298 = vmatpush1.msra.mxu0 0.0
        %1299 = vmatprep.subr.mxu0 0.0
        %1300 = vmatpush1.msra.mxu0 0.0
        %1301 = vmatprep.subr.mxu0 0.0
        %1302 = vmatpush1.msra.mxu0 0.0
        %1303 = vmatprep.subr.mxu0 0.0
        %1304 = vmatpush1.msra.mxu0 0.0
        %1305 = vmatprep.subr.mxu0 0.0
        %1306 = vmatpush1.msra.mxu0 0.0
        %1307 = vmatprep.subr.mxu0 0.0
        %1308 = vmatpush1.msra.mxu0 0.0
        %1309 = vmatprep.subr.mxu0 0.0
        %1310 = vmatpush1.msra.mxu0 0.0
        %1311 = vmatprep.subr.mxu0 0.0
        %1312 = vmatpush1.msra.mxu0 0.0
        %1313 = vmatprep.subr.mxu0 0.0
        %1314 = vmatpush1.msra.mxu0 0.0
        %1315 = vmatprep.subr.mxu0 0.0
        %1316 = vmatpush1.msra.mxu0 0.0
        %1317 = vmatprep.subr.mxu0 0.0
        %1318 = vmatpush1.msra.mxu0 0.0
        %1319 = vmatprep.subr.mxu0 0.0
        %1320 = vmatpush1.msra.mxu0 0.0
        %1321 = vmatprep.subr.mxu0 0.0
        %1322 = vmatpush1.msra.mxu0 0.0
        %1323 = vmatprep.subr.mxu0 0.0
        %1324 = vmatpush1.msra.mxu0 0.0
        %1325 = vmatprep.subr.mxu0 0.0
        %1326 = vmatpush1.msra.mxu0 0.0
        %1327 = vmatprep.subr.mxu0 0.0
        %1328 = vmatpush1.msra.mxu0 0.0
        %1329 = vmatprep.subr.mxu0 0.0
        %1330 = vmatpush1.msra.mxu0 0.0
        %1331 = vmatprep.subr.mxu0 0.0
        %1332 = vmatpush1.msra.mxu0 0.0
        %1333 = vmatprep.subr.mxu0 0.0
        %1334 = vmatpush1.msra.mxu0 0.0
        %1335 = vmatprep.subr.mxu0 0.0
        %1336 = vmatpush1.msra.mxu0 0.0
        %1337 = vmatprep.subr.mxu0 0.0
        %1338 = vmatpush1.msra.mxu0 0.0
        %1339 = vmatprep.mubr.f32.mxu0 0.0
        %1340 = vmatmul.mubr.f32.gmra.mrb[0].mxu0 %v1273
        %v1341 = vpop.f32.mrb[0].mxu0
        %v1342 = vadd.f32 0.0, %v1341
        %v1343 = vpop.f32.mrb[0].mxu0
        %v1344 = vadd.f32 0.0, %v1343
        %1345 = vdwg.mxu0
        %1346 = vmatprep.subr.mxu0 0.0
        %1347 = vmatpush1.msra.mxu0 %v1262
        %1348 = vmatprep.subr.mxu0 0.0
        %1349 = vmatpush1.msra.mxu0 %v1265
        %1350 = vmatprep.subr.mxu0 0.0
        %1351 = vmatpush1.msra.mxu0 %v1268
        %1352 = vmatprep.subr.mxu0 0.0
        %1353 = vmatpush1.msra.mxu0 %v1271
        %1354 = vmatprep.subr.mxu0 0.0
        %1355 = vmatpush1.msra.mxu0 0.0
        %1356 = vmatprep.subr.mxu0 0.0
        %1357 = vmatpush1.msra.mxu0 0.0
        %1358 = vmatprep.subr.mxu0 0.0
        %1359 = vmatpush1.msra.mxu0 0.0
        %1360 = vmatprep.subr.mxu0 0.0
        %1361 = vmatpush1.msra.mxu0 0.0
        %1362 = vmatprep.subr.mxu0 0.0
        %1363 = vmatpush1.msra.mxu0 0.0
        %1364 = vmatprep.subr.mxu0 0.0
        %1365 = vmatpush1.msra.mxu0 0.0
        %1366 = vmatprep.subr.mxu0 0.0
        %1367 = vmatpush1.msra.mxu0 0.0
        %1368 = vmatprep.subr.mxu0 0.0
        %1369 = vmatpush1.msra.mxu0 0.0
        %1370 = vmatprep.subr.mxu0 0.0
        %1371 = vmatpush1.msra.mxu0 0.0
        %1372 = vmatprep.subr.mxu0 0.0
        %1373 = vmatpush1.msra.mxu0 0.0
        %1374 = vmatprep.subr.mxu0 0.0
        %1375 = vmatpush1.msra.mxu0 0.0
        %1376 = vmatprep.subr.mxu0 0.0
        %1377 = vmatpush1.msra.mxu0 0.0
        %1378 = vmatprep.subr.mxu0 0.0
        %1379 = vmatpush1.msra.mxu0 0.0
        %1380 = vmatprep.subr.mxu0 0.0
        %1381 = vmatpush1.msra.mxu0 0.0
        %1382 = vmatprep.subr.mxu0 0.0
        %1383 = vmatpush1.msra.mxu0 0.0
        %1384 = vmatprep.subr.mxu0 0.0
        %1385 = vmatpush1.msra.mxu0 0.0
        %1386 = vmatprep.subr.mxu0 0.0
        %1387 = vmatpush1.msra.mxu0 0.0
        %1388 = vmatprep.subr.mxu0 0.0
        %1389 = vmatpush1.msra.mxu0 0.0
        %1390 = vmatprep.subr.mxu0 0.0
        %1391 = vmatpush1.msra.mxu0 0.0
        %1392 = vmatprep.subr.mxu0 0.0
        %1393 = vmatpush1.msra.mxu0 0.0
        %1394 = vmatprep.subr.mxu0 0.0
        %1395 = vmatpush1.msra.mxu0 0.0
        %1396 = vmatprep.subr.mxu0 0.0
        %1397 = vmatpush1.msra.mxu0 0.0
        %1398 = vmatprep.subr.mxu0 0.0
        %1399 = vmatpush1.msra.mxu0 0.0
        %1400 = vmatprep.subr.mxu0 0.0
        %1401 = vmatpush1.msra.mxu0 0.0
        %1402 = vmatprep.subr.mxu0 0.0
        %1403 = vmatpush1.msra.mxu0 0.0
        %1404 = vmatprep.subr.mxu0 0.0
        %1405 = vmatpush1.msra.mxu0 0.0
        %1406 = vmatprep.subr.mxu0 0.0
        %1407 = vmatpush1.msra.mxu0 0.0
        %1408 = vmatprep.subr.mxu0 0.0
        %1409 = vmatpush1.msra.mxu0 0.0
        %1410 = vmatprep.mubr.f32.mxu0 0.0
        %1411 = vmatmul.mubr.f32.gmra.mrb[0].mxu0 %v1273
        %v1412 = vpop.f32.mrb[0].mxu0
        %v1413 = vadd.f32 0.0, %v1412
        %v1414 = vpop.f32.mrb[0].mxu0
        %1415 = vdwg.mxu0
        %1417 = vrot.lane.b32.xlu0 %v1342, 120
        %v1418 = vpop.permute.xlu0 %1417
        %1420 = vrot.lane.b32.xlu0 %v1342, 112
        %v1421 = vpop.permute.xlu0 %1420
        %1423 = vrot.lane.b32.xlu0 %v1342, 104
        %v1424 = vpop.permute.xlu0 %1423
        %v1426 = vsub.f32 0.0, %v1342
        %v1427 = vsub.f32 0.0, %v1418
        %v1428 = vsub.f32 0.0, %v1421
        %v1429 = vsub.f32 0.0, %v1424
        %1434 = vrot.lane.b32.xlu0 %v1426, 124
        %v1435 = vpop.permute.xlu0 %1434
        %1436 = vrot.lane.b32.xlu0 %v1427, 124
        %v1437 = vpop.permute.xlu0 %1436
        %1438 = vrot.lane.b32.xlu0 %v1428, 124
        %v1439 = vpop.permute.xlu0 %1438
        %1440 = vrot.lane.b32.xlu0 %v1429, 124
        %v1441 = vpop.permute.xlu0 %1440
        %1446 = vrot.lane.b32.xlu0 %v1342, 4
        %v1447 = vpop.permute.xlu0 %1446
        %1448 = vrot.lane.b32.xlu0 %v1418, 4
        %v1449 = vpop.permute.xlu0 %1448
        %1450 = vrot.lane.b32.xlu0 %v1421, 4
        %v1451 = vpop.permute.xlu0 %1450
        %1452 = vrot.lane.b32.xlu0 %v1424, 4
        %v1453 = vpop.permute.xlu0 %1452
        %vm1458 = vcmask 31744
        %v1459 = vsel %vm1458, %v1435, %v1447
        %v1460 = vsel %vm1458, %v1437, %v1449
        %v1461 = vsel %vm1458, %v1439, %v1451
        %v1462 = vsel %vm1458, %v1441, %v1453
        %v1463 = vmul.f32 %v1342, %v568
        %v1464 = vmul.f32 %v1418, %v569
        %v1465 = vmul.f32 %v1421, %v570
        %v1466 = vmul.f32 %v1424, %v571
        %v1467 = vmul.f32 %v1459, %v572
        %v1468 = vmul.f32 %v1460, %v573
        %v1469 = vmul.f32 %v1461, %v574
        %v1470 = vmul.f32 %v1462, %v575
        %v1471 = vadd.f32 %v1463, %v1467
        %v1472 = vadd.f32 %v1464, %v1468
        %v1473 = vadd.f32 %v1465, %v1469
        %v1474 = vadd.f32 %v1466, %v1470
        %1475 = vrot.lane.b32.xlu0 %v1426, 92
        %v1476 = vpop.permute.xlu0 %1475
        %1478 = vrot.lane.b32.xlu0 %v1342, 100
        %v1479 = vpop.permute.xlu0 %1478
        %v1481 = vsel %vm1458, %v1476, %v1479
        %1483 = vrot.lane.b32.xlu0 %v576, 32
        %v1484 = vpop.permute.xlu0 %1483
        %v1486 = vmul.f32 %v1342, %v1484
        %v1487 = vmul.f32 %v1481, %v577
        %1489 = vrot.lane.b32.xlu0 %v1487, 32
        %v1490 = vpop.permute.xlu0 %1489
        %v1492 = vadd.f32 %v1486, %v1490
        %1494 = vrot.lane.b32.xlu0 %v1492, 96
        %v1495 = vpop.permute.xlu0 %1494
        %v1497 = vsel %vm857, %v1471, 0
        %v1500 = vsel %vm857, %v1472, 0
        %v1503 = vsel %vm857, %v1473, 0
        %v1506 = vsel %vm857, %v1474, 0
        %v1508 = vsel %vm857, %v1495, 0
        %1510 = vmatprep.subr.mxu0 0.0
        %1511 = vmatpush1.xpose.msra.mxu0 %v1508
        %1512 = vmatprep.subr.mxu0 0.0
        %1513 = vmatpush1.xpose.msra.mxu0 0.0
        %1514 = vmatprep.subr.mxu0 0.0
        %1515 = vmatpush1.xpose.msra.mxu0 0.0
        %1516 = vmatprep.subr.mxu0 0.0
        %1517 = vmatpush1.xpose.msra.mxu0 0.0
        %1518 = vmatprep.subr.mxu0 0.0
        %1519 = vmatpush1.xpose.msra.mxu0 0.0
        %1520 = vmatprep.subr.mxu0 0.0
        %1521 = vmatpush1.xpose.msra.mxu0 0.0
        %1522 = vmatprep.subr.mxu0 0.0
        %1523 = vmatpush1.xpose.msra.mxu0 0.0
        %1524 = vmatprep.subr.mxu0 0.0
        %1525 = vmatpush1.xpose.msra.mxu0 0.0
        %1526 = vmatprep.subr.mxu0 0.0
        %1527 = vmatpush1.xpose.msra.mxu0 0.0
        %1528 = vmatprep.subr.mxu0 0.0
        %1529 = vmatpush1.xpose.msra.mxu0 0.0
        %1530 = vmatprep.subr.mxu0 0.0
        %1531 = vmatpush1.xpose.msra.mxu0 0.0
        %1532 = vmatprep.subr.mxu0 0.0
        %1533 = vmatpush1.xpose.msra.mxu0 0.0
        %1534 = vmatprep.subr.mxu0 0.0
        %1535 = vmatpush1.xpose.msra.mxu0 0.0
        %1536 = vmatprep.subr.mxu0 0.0
        %1537 = vmatpush1.xpose.msra.mxu0 0.0
        %1538 = vmatprep.subr.mxu0 0.0
        %1539 = vmatpush1.xpose.msra.mxu0 0.0
        %1540 = vmatprep.subr.mxu0 0.0
        %1541 = vmatpush1.xpose.msra.mxu0 0.0
        %1542 = vmatprep.subr.mxu0 0.0
        %1543 = vmatpush1.xpose.msra.mxu0 0.0
        %1544 = vmatprep.subr.mxu0 0.0
        %1545 = vmatpush1.xpose.msra.mxu0 0.0
        %1546 = vmatprep.subr.mxu0 0.0
        %1547 = vmatpush1.xpose.msra.mxu0 0.0
        %1548 = vmatprep.subr.mxu0 0.0
        %1549 = vmatpush1.xpose.msra.mxu0 0.0
        %1550 = vmatprep.subr.mxu0 0.0
        %1551 = vmatpush1.xpose.msra.mxu0 0.0
        %1552 = vmatprep.subr.mxu0 0.0
        %1553 = vmatpush1.xpose.msra.mxu0 0.0
        %1554 = vmatprep.subr.mxu0 0.0
        %1555 = vmatpush1.xpose.msra.mxu0 0.0
        %1556 = vmatprep.subr.mxu0 0.0
        %1557 = vmatpush1.xpose.msra.mxu0 0.0
        %1558 = vmatprep.subr.mxu0 0.0
        %1559 = vmatpush1.xpose.msra.mxu0 0.0
        %1560 = vmatprep.subr.mxu0 0.0
        %1561 = vmatpush1.xpose.msra.mxu0 0.0
        %1562 = vmatprep.subr.mxu0 0.0
        %1563 = vmatpush1.xpose.msra.mxu0 0.0
        %1564 = vmatprep.subr.mxu0 0.0
        %1565 = vmatpush1.xpose.msra.mxu0 0.0
        %1566 = vmatprep.subr.mxu0 0.0
        %1567 = vmatpush1.xpose.msra.mxu0 0.0
        %1568 = vmatprep.subr.mxu0 0.0
        %1569 = vmatpush1.xpose.msra.mxu0 0.0
        %1570 = vmatprep.subr.mxu0 0.0
        %1571 = vmatpush1.xpose.msra.mxu0 0.0
        %1572 = vmatprep.subr.mxu0 0.0
        %1573 = vmatpush1.xpose.msra.mxu0 0.0
        %1574 = vmatprep.mubr.f32.mxu0 0.0
        %1575 = vmatmul.mubr.f32.gmra.mrb[0].mxu0 %v1497
        %v1576 = vpop.f32.mrb[0].mxu0
        %v1577 = vadd.f32 0.0, %v1576
        %v1578 = vpop.f32.mrb[0].mxu0
        %1579 = vmatprep.mubr.f32.mxu0 0.0
        %1580 = vmatmul.mubr.f32.gmra.mrb[0].mxu0 %v1500
        %v1581 = vpop.f32.mrb[0].mxu0
        %v1582 = vadd.f32 0.0, %v1581
        %v1583 = vpop.f32.mrb[0].mxu0
        %1584 = vmatprep.mubr.f32.mxu0 0.0
        %1585 = vmatmul.mubr.f32.gmra.mrb[0].mxu0 %v1503
        %v1586 = vpop.f32.mrb[0].mxu0
        %v1587 = vadd.f32 0.0, %v1586
        %v1588 = vpop.f32.mrb[0].mxu0
        %1589 = vmatprep.mubr.f32.mxu0 0.0
        %1590 = vmatmul.mubr.f32.gmra.mrb[0].mxu0 %v1506
        %v1591 = vpop.f32.mrb[0].mxu0
        %v1592 = vadd.f32 0.0, %v1591
        %v1593 = vpop.f32.mrb[0].mxu0
        %1594 = vdwg.mxu0
        %v1595 = vsel %vm857, %v1577, -inf
        %1596 = vmax.xlane.f32.xlu0 %v1595
        %v1597 = vpop.xlane.xlu0 %1596
        %v1598 = vsel %vm857, %v1582, -inf
        %1599 = vmax.xlane.f32.xlu0 %v1598
        %v1600 = vpop.xlane.xlu0 %1599
        %v1601 = vsel %vm857, %v1587, -inf
        %1602 = vmax.xlane.f32.xlu0 %v1601
        %v1603 = vpop.xlane.xlu0 %1602
        %v1604 = vsel %vm857, %v1592, -inf
        %1605 = vmax.xlane.f32.xlu0 %v1604
        %v1606 = vpop.xlane.xlu0 %1605
        %v1607 = vsub.f32 %v1577, %v1597
        %v1608 = vsub.f32 %v1582, %v1600
        %v1609 = vsub.f32 %v1587, %v1603
        %v1610 = vsub.f32 %v1592, %v1606
        %v1611 = vmul.f32 %v1607, 1.442695
        %v1612 = vpow.pop %v1611
        %v1613 = vmul.f32 %v1608, 1.442695
        %v1614 = vpow.pop %v1613
        %v1615 = vmul.f32 %v1609, 1.442695
        %v1616 = vpow.pop %v1615
        %v1617 = vmul.f32 %v1610, 1.442695
        %v1618 = vpow.pop %v1617
        %v1619 = vsel %vm857, %v1612, 0.0
        %1620 = vadd.xlane.f32.xlu0 %v1619
        %v1621 = vpop.xlane.xlu0 %1620
        %v1622 = vsel %vm857, %v1614, 0.0
        %1623 = vadd.xlane.f32.xlu0 %v1622
        %v1624 = vpop.xlane.xlu0 %1623
        %v1625 = vsel %vm857, %v1616, 0.0
        %1626 = vadd.xlane.f32.xlu0 %v1625
        %v1627 = vpop.xlane.xlu0 %1626
        %v1628 = vsel %vm857, %v1618, 0.0
        %1629 = vadd.xlane.f32.xlu0 %v1628
        %v1630 = vpop.xlane.xlu0 %1629
        %v1631 = vrcp.pop %v1621
        %v1632 = vrcp.pop %v1624
        %v1633 = vrcp.pop %v1627
        %v1634 = vrcp.pop %v1630
        %v1635 = vmul.f32 %v1612, %v1631
        %v1636 = vmul.f32 %v1614, %v1632
        %v1637 = vmul.f32 %v1616, %v1633
        %v1638 = vmul.f32 %v1618, %v1634
        %1639 = vrot.lane.b32.xlu0 %v1342, 88
        %v1640 = vpop.permute.xlu0 %1639
        %v1643 = vsel %vm857, %v1635, 0
        %v1646 = vsel %vm857, %v1636, 0
        %v1649 = vsel %vm857, %v1637, 0
        %v1652 = vsel %vm857, %v1638, 0
        %1654 = vmatprep.subr.mxu0 0.0
        %1655 = vmatpush1.msra.mxu0 %v1640
        %1656 = vmatprep.subr.mxu0 0.0
        %1657 = vmatpush1.msra.mxu0 0.0
        %1658 = vmatprep.subr.mxu0 0.0
        %1659 = vmatpush1.msra.mxu0 0.0
        %1660 = vmatprep.subr.mxu0 0.0
        %1661 = vmatpush1.msra.mxu0 0.0
        %1662 = vmatprep.subr.mxu0 0.0
        %1663 = vmatpush1.msra.mxu0 0.0
        %1664 = vmatprep.subr.mxu0 0.0
        %1665 = vmatpush1.msra.mxu0 0.0
        %1666 = vmatprep.subr.mxu0 0.0
        %1667 = vmatpush1.msra.mxu0 0.0
        %1668 = vmatprep.subr.mxu0 0.0
        %1669 = vmatpush1.msra.mxu0 0.0
        %1670 = vmatprep.subr.mxu0 0.0
        %1671 = vmatpush1.msra.mxu0 0.0
        %1672 = vmatprep.subr.mxu0 0.0
        %1673 = vmatpush1.msra.mxu0 0.0
        %1674 = vmatprep.subr.mxu0 0.0
        %1675 = vmatpush1.msra.mxu0 0.0
        %1676 = vmatprep.subr.mxu0 0.0
        %1677 = vmatpush1.msra.mxu0 0.0
        %1678 = vmatprep.subr.mxu0 0.0
        %1679 = vmatpush1.msra.mxu0 0.0
        %1680 = vmatprep.subr.mxu0 0.0
        %1681 = vmatpush1.msra.mxu0 0.0
        %1682 = vmatprep.subr.mxu0 0.0
        %1683 = vmatpush1.msra.mxu0 0.0
        %1684 = vmatprep.subr.mxu0 0.0
        %1685 = vmatpush1.msra.mxu0 0.0
        %1686 = vmatprep.subr.mxu0 0.0
        %1687 = vmatpush1.msra.mxu0 0.0
        %1688 = vmatprep.subr.mxu0 0.0
        %1689 = vmatpush1.msra.mxu0 0.0
        %1690 = vmatprep.subr.mxu0 0.0
        %1691 = vmatpush1.msra.mxu0 0.0
        %1692 = vmatprep.subr.mxu0 0.0
        %1693 = vmatpush1.msra.mxu0 0.0
        %1694 = vmatprep.subr.mxu0 0.0
        %1695 = vmatpush1.msra.mxu0 0.0
        %1696 = vmatprep.subr.mxu0 0.0
        %1697 = vmatpush1.msra.mxu0 0.0
        %1698 = vmatprep.subr.mxu0 0.0
        %1699 = vmatpush1.msra.mxu0 0.0
        %1700 = vmatprep.subr.mxu0 0.0
        %1701 = vmatpush1.msra.mxu0 0.0
        %1702 = vmatprep.subr.mxu0 0.0
        %1703 = vmatpush1.msra.mxu0 0.0
        %1704 = vmatprep.subr.mxu0 0.0
        %1705 = vmatpush1.msra.mxu0 0.0
        %1706 = vmatprep.subr.mxu0 0.0
        %1707 = vmatpush1.msra.mxu0 0.0
        %1708 = vmatprep.subr.mxu0 0.0
        %1709 = vmatpush1.msra.mxu0 0.0
        %1710 = vmatprep.subr.mxu0 0.0
        %1711 = vmatpush1.msra.mxu0 0.0
        %1712 = vmatprep.subr.mxu0 0.0
        %1713 = vmatpush1.msra.mxu0 0.0
        %1714 = vmatprep.subr.mxu0 0.0
        %1715 = vmatpush1.msra.mxu0 0.0
        %1716 = vmatprep.subr.mxu0 0.0
        %1717 = vmatpush1.msra.mxu0 0.0
        %1718 = vmatprep.mubr.f32.mxu0 0.0
        %1719 = vmatmul.mubr.f32.gmra.mrb[0].mxu0 %v1643
        %v1720 = vpop.f32.mrb[0].mxu0
        %v1721 = vadd.f32 0.0, %v1720
        %v1722 = vpop.f32.mrb[0].mxu0
        %1723 = vmatprep.mubr.f32.mxu0 0.0
        %1724 = vmatmul.mubr.f32.gmra.mrb[0].mxu0 %v1646
        %v1725 = vpop.f32.mrb[0].mxu0
        %v1726 = vadd.f32 0.0, %v1725
        %v1727 = vpop.f32.mrb[0].mxu0
        %1728 = vmatprep.mubr.f32.mxu0 0.0
        %1729 = vmatmul.mubr.f32.gmra.mrb[0].mxu0 %v1649
        %v1730 = vpop.f32.mrb[0].mxu0
        %v1731 = vadd.f32 0.0, %v1730
        %v1732 = vpop.f32.mrb[0].mxu0
        %1733 = vmatprep.mubr.f32.mxu0 0.0
        %1734 = vmatmul.mubr.f32.gmra.mrb[0].mxu0 %v1652
        %v1735 = vpop.f32.mrb[0].mxu0
        %v1736 = vadd.f32 0.0, %v1735
        %v1737 = vpop.f32.mrb[0].mxu0
        %1738 = vdwg.mxu0
        %1740 = vrot.lane.b32.xlu0 %v1726, 8
        %v1741 = vpop.permute.xlu0 %1740
        %1744 = vrot.lane.b32.xlu0 %v1731, 16
        %v1745 = vpop.permute.xlu0 %1744
        %1748 = vrot.lane.b32.xlu0 %v1736, 24
        %v1749 = vpop.permute.xlu0 %1748
        %v1751 = vsel %vm857, %v1721, %v1741
        %v1752 = vsel %vm957, %v1751, %v1745
        %v1753 = vsel %vm1119, %v1752, %v1749
        %v1754 = vxor.u32 %v1344, 2147483648
        %v1755 = vxor.u32 %v1413, 2147483648
        %v1756 = vmul.f32 %v1754, 1.442695
        %v1757 = vpow.pop %v1756
        %v1758 = vmul.f32 %v1755, 1.442695
        %v1759 = vpow.pop %v1758
        %v1760 = vadd.f32 %v1757, 1.0
        %v1761 = vadd.f32 %v1759, 1.0
        %v1762 = vrcp.pop %v1760
        %v1763 = vmul.f32 1.0, %v1762
        %v1764 = vrcp.pop %v1761
        %v1765 = vmul.f32 1.0, %v1764
        %v1766 = vmul.f32 %v1344, %v1763
        %v1767 = vmul.f32 %v1413, %v1765
        %v1768 = vmul.f32 %v1766, %v1342
        %v1769 = vmul.f32 %v1767, %v1344
        %1772 = vrot.lane.b32.xlu0 %v1768, 112
        %v1773 = vpop.permute.xlu0 %1772
        %1774 = vrot.lane.b32.xlu0 %v1769, 112
        %v1775 = vpop.permute.xlu0 %1774
        %vm1776 = vcmask 916480
        %v1777 = vsel %vm1776, %v1773, %v1775
        %v1779 = vsel %vm582, %v1753, %v1777
        %v1780 = vld [vmem:[%s15] sm:$0xff]
        %v1781 = vld [vmem:[%s15 + $0x8] sm:$0xff]
        %v1782 = vld [vmem:[%s15 + $0x10] sm:$0xff]
        %v1783 = vld [vmem:[%s15 + $0x18] sm:$0xff]
        %v1784 = vld [vmem:[%s15 + $0x20] sm:$0xff]
        %v1785 = vld [vmem:[%s15 + $0x28] sm:$0xff]
        %v1786 = vld [vmem:[%s15 + $0x30] sm:$0xff]
        %v1787 = vld [vmem:[%s15 + $0x38] sm:$0xff]
        %v1788 = vld [vmem:[%s15 + $0x40] sm:$0xff]
        %v1789 = vld [vmem:[%s15 + $0x48] sm:$0xff]
        %v1790 = vld [vmem:[%s15 + $0x50] sm:$0xff]
        %v1791 = vld [vmem:[%s15 + $0x58] sm:$0xff]
        %v1792 = vld [vmem:[%s15 + $0x60] sm:$0xff]
        %v1793 = vld [vmem:[%s15 + $0x68] sm:$0xff]
        %v1794 = vld [vmem:[%s15 + $0x70] sm:$0xff]
        %v1795 = vld [vmem:[%s15 + $0x78] sm:$0xff]
        %v1796 = vld [vmem:[%s15 + $0x80] sm:$0xff]
        %v1797 = vld [vmem:[%s15 + $0x88] sm:$0xff]
        %v1798 = vld [vmem:[%s15 + $0x90] sm:$0xff]
        %v1799 = vld [vmem:[%s15 + $0x98] sm:$0xff]
        %v1800 = vsel %vm582, %v1775, 0
        %1802 = vmatprep.subr.mxu0 0.0
        %1803 = vmatpush1.msra.mxu0 %v1780
        %1804 = vmatprep.subr.mxu0 0.0
        %1805 = vmatpush1.msra.mxu0 %v1781
        %1806 = vmatprep.subr.mxu0 0.0
        %1807 = vmatpush1.msra.mxu0 %v1782
        %1808 = vmatprep.subr.mxu0 0.0
        %1809 = vmatpush1.msra.mxu0 %v1783
        %1810 = vmatprep.subr.mxu0 0.0
        %1811 = vmatpush1.msra.mxu0 %v1784
        %1812 = vmatprep.subr.mxu0 0.0
        %1813 = vmatpush1.msra.mxu0 %v1785
        %1814 = vmatprep.subr.mxu0 0.0
        %1815 = vmatpush1.msra.mxu0 %v1786
        %1816 = vmatprep.subr.mxu0 0.0
        %1817 = vmatpush1.msra.mxu0 %v1787
        %1818 = vmatprep.subr.mxu0 0.0
        %1819 = vmatpush1.msra.mxu0 %v1788
        %1820 = vmatprep.subr.mxu0 0.0
        %1821 = vmatpush1.msra.mxu0 %v1789
        %1822 = vmatprep.subr.mxu0 0.0
        %1823 = vmatpush1.msra.mxu0 %v1790
        %1824 = vmatprep.subr.mxu0 0.0
        %1825 = vmatpush1.msra.mxu0 %v1791
        %1826 = vmatprep.subr.mxu0 0.0
        %1827 = vmatpush1.msra.mxu0 %v1792
        %1828 = vmatprep.subr.mxu0 0.0
        %1829 = vmatpush1.msra.mxu0 %v1793
        %1830 = vmatprep.subr.mxu0 0.0
        %1831 = vmatpush1.msra.mxu0 %v1794
        %1832 = vmatprep.subr.mxu0 0.0
        %1833 = vmatpush1.msra.mxu0 %v1795
        %1834 = vmatprep.subr.mxu0 0.0
        %1835 = vmatpush1.msra.mxu0 %v1796
        %1836 = vmatprep.subr.mxu0 0.0
        %1837 = vmatpush1.msra.mxu0 %v1797
        %1838 = vmatprep.subr.mxu0 0.0
        %1839 = vmatpush1.msra.mxu0 %v1798
        %1840 = vmatprep.subr.mxu0 0.0
        %1841 = vmatpush1.msra.mxu0 %v1799
        %1842 = vmatprep.subr.mxu0 0.0
        %1843 = vmatpush1.msra.mxu0 0.0
        %1844 = vmatprep.subr.mxu0 0.0
        %1845 = vmatpush1.msra.mxu0 0.0
        %1846 = vmatprep.subr.mxu0 0.0
        %1847 = vmatpush1.msra.mxu0 0.0
        %1848 = vmatprep.subr.mxu0 0.0
        %1849 = vmatpush1.msra.mxu0 0.0
        %1850 = vmatprep.subr.mxu0 0.0
        %1851 = vmatpush1.msra.mxu0 0.0
        %1852 = vmatprep.subr.mxu0 0.0
        %1853 = vmatpush1.msra.mxu0 0.0
        %1854 = vmatprep.subr.mxu0 0.0
        %1855 = vmatpush1.msra.mxu0 0.0
        %1856 = vmatprep.subr.mxu0 0.0
        %1857 = vmatpush1.msra.mxu0 0.0
        %1858 = vmatprep.subr.mxu0 0.0
        %1859 = vmatpush1.msra.mxu0 0.0
        %1860 = vmatprep.subr.mxu0 0.0
        %1861 = vmatpush1.msra.mxu0 0.0
        %1862 = vmatprep.subr.mxu0 0.0
        %1863 = vmatpush1.msra.mxu0 0.0
        %1864 = vmatprep.subr.mxu0 0.0
        %1865 = vmatpush1.msra.mxu0 0.0
        %1866 = vmatprep.mubr.f32.mxu0 %v1800
        %1867 = vmatmul.mubr.f32.gmra.mrb[0].mxu0 %v1779
        %v1868 = vpop.f32.mrb[0].mxu0
        %v1869 = vadd.f32 %v1228, %v1868
        %v1870 = vpop.f32.mrb[0].mxu0
        %1871 = vdwg.mxu0
        %s1872 = scalar_lea.vmem %s7, 1
        %v1873 = vld [vmem:[%s1872] sm:$0x1]
        %s1874 = scalar_lea.vmem %s8, 1
        %v1875 = vld [vmem:[%s1874] sm:$0x1]
        %v1876 = vsel %vm582, %v1869, 0.0
        %1877 = vadd.xlane.f32.xlu0 %v1876
        %v1878 = vpop.xlane.xlu0 %1877
        %v1879 = vmul.f32 %v1878, %v669
        %v1880 = vsub.f32 %v1869, %v1879
        %v1881 = vmul.f32 %v1880, %v1880
        %v1882 = vsel %vm582, %v1881, 0.0
        %1883 = vadd.xlane.f32.xlu0 %v1882
        %v1884 = vpop.xlane.xlu0 %1883
        %v1885 = vmul.f32 %v1884, %v669
        %v1886 = vadd.f32 %v1885, 1e-05
        %v1887 = vrsqrt.pop %v1886
        %v1888 = vmul.f32 %v1880, %v1887
        %v1890 = vlaneseq
        %v1891 = vshrl.u32 %v1890, 7
        %v1892 = vsub.s32 0, %v1891
        %v1893 = vrot.slane %v1873, %v1892
        %v1895 = vmul.f32 %v1888, %v1893
        %v1897 = vlaneseq
        %v1898 = vshrl.u32 %v1897, 7
        %v1899 = vsub.s32 0, %v1898
        %v1900 = vrot.slane %v1875, %v1899
        %v1902 = vadd.f32 %v1895, %v1900
        %s1903 = scalar_lea.vmem %s9, 96
        %v1904 = vld [vmem:[%s1903] sm:$0xff]
        %v1905 = vld [vmem:[%s1903 + $0x8] sm:$0xff]
        %v1906 = vld [vmem:[%s1903 + $0x10] sm:$0xff]
        %v1907 = vld [vmem:[%s1903 + $0x18] sm:$0xff]
        %v1908 = vld [vmem:[%s1903 + $0x20] sm:$0xff]
        %v1909 = vld [vmem:[%s1903 + $0x28] sm:$0xff]
        %v1910 = vld [vmem:[%s1903 + $0x30] sm:$0xff]
        %v1911 = vld [vmem:[%s1903 + $0x38] sm:$0xff]
        %v1912 = vld [vmem:[%s1903 + $0x40] sm:$0xff]
        %v1913 = vld [vmem:[%s1903 + $0x48] sm:$0xff]
        %v1914 = vld [vmem:[%s1903 + $0x50] sm:$0xff]
        %v1915 = vld [vmem:[%s1903 + $0x58] sm:$0xff]
        %v1917 = vsel %vm582, %v1902, 0
        %1919 = vmatprep.subr.mxu0 %v1905
        %1920 = vmatpush1.msra.mxu0 %v1904
        %1921 = vmatprep.subr.mxu0 %v1908
        %1922 = vmatpush1.msra.mxu0 %v1907
        %1923 = vmatprep.subr.mxu0 %v1911
        %1924 = vmatpush1.msra.mxu0 %v1910
        %1925 = vmatprep.subr.mxu0 %v1914
        %1926 = vmatpush1.msra.mxu0 %v1913
        %1927 = vmatprep.subr.mxu0 0.0
        %1928 = vmatpush1.msra.mxu0 0.0
        %1929 = vmatprep.subr.mxu0 0.0
        %1930 = vmatpush1.msra.mxu0 0.0
        %1931 = vmatprep.subr.mxu0 0.0
        %1932 = vmatpush1.msra.mxu0 0.0
        %1933 = vmatprep.subr.mxu0 0.0
        %1934 = vmatpush1.msra.mxu0 0.0
        %1935 = vmatprep.subr.mxu0 0.0
        %1936 = vmatpush1.msra.mxu0 0.0
        %1937 = vmatprep.subr.mxu0 0.0
        %1938 = vmatpush1.msra.mxu0 0.0
        %1939 = vmatprep.subr.mxu0 0.0
        %1940 = vmatpush1.msra.mxu0 0.0
        %1941 = vmatprep.subr.mxu0 0.0
        %1942 = vmatpush1.msra.mxu0 0.0
        %1943 = vmatprep.subr.mxu0 0.0
        %1944 = vmatpush1.msra.mxu0 0.0
        %1945 = vmatprep.subr.mxu0 0.0
        %1946 = vmatpush1.msra.mxu0 0.0
        %1947 = vmatprep.subr.mxu0 0.0
        %1948 = vmatpush1.msra.mxu0 0.0
        %1949 = vmatprep.subr.mxu0 0.0
        %1950 = vmatpush1.msra.mxu0 0.0
        %1951 = vmatprep.subr.mxu0 0.0
        %1952 = vmatpush1.msra.mxu0 0.0
        %1953 = vmatprep.subr.mxu0 0.0
        %1954 = vmatpush1.msra.mxu0 0.0
        %1955 = vmatprep.subr.mxu0 0.0
        %1956 = vmatpush1.msra.mxu0 0.0
        %1957 = vmatprep.subr.mxu0 0.0
        %1958 = vmatpush1.msra.mxu0 0.0
        %1959 = vmatprep.subr.mxu0 0.0
        %1960 = vmatpush1.msra.mxu0 0.0
        %1961 = vmatprep.subr.mxu0 0.0
        %1962 = vmatpush1.msra.mxu0 0.0
        %1963 = vmatprep.subr.mxu0 0.0
        %1964 = vmatpush1.msra.mxu0 0.0
        %1965 = vmatprep.subr.mxu0 0.0
        %1966 = vmatpush1.msra.mxu0 0.0
        %1967 = vmatprep.subr.mxu0 0.0
        %1968 = vmatpush1.msra.mxu0 0.0
        %1969 = vmatprep.subr.mxu0 0.0
        %1970 = vmatpush1.msra.mxu0 0.0
        %1971 = vmatprep.subr.mxu0 0.0
        %1972 = vmatpush1.msra.mxu0 0.0
        %1973 = vmatprep.subr.mxu0 0.0
        %1974 = vmatpush1.msra.mxu0 0.0
        %1975 = vmatprep.subr.mxu0 0.0
        %1976 = vmatpush1.msra.mxu0 0.0
        %1977 = vmatprep.subr.mxu0 0.0
        %1978 = vmatpush1.msra.mxu0 0.0
        %1979 = vmatprep.subr.mxu0 0.0
        %1980 = vmatpush1.msra.mxu0 0.0
        %1981 = vmatprep.subr.mxu0 0.0
        %1982 = vmatpush1.msra.mxu0 0.0
        %1983 = vmatprep.mubr.f32.mxu0 0.0
        %1984 = vmatmul.mubr.f32.gmra.mrb[0].mxu0 %v1917
        %v1985 = vpop.f32.mrb[0].mxu0
        %v1986 = vadd.f32 0.0, %v1985
        %v1987 = vpop.f32.mrb[0].mxu0
        %v1988 = vadd.f32 0.0, %v1987
        %1989 = vdwg.mxu0
        %1990 = vmatprep.subr.mxu0 0.0
        %1991 = vmatpush1.msra.mxu0 %v1906
        %1992 = vmatprep.subr.mxu0 0.0
        %1993 = vmatpush1.msra.mxu0 %v1909
        %1994 = vmatprep.subr.mxu0 0.0
        %1995 = vmatpush1.msra.mxu0 %v1912
        %1996 = vmatprep.subr.mxu0 0.0
        %1997 = vmatpush1.msra.mxu0 %v1915
        %1998 = vmatprep.subr.mxu0 0.0
        %1999 = vmatpush1.msra.mxu0 0.0
        %2000 = vmatprep.subr.mxu0 0.0
        %2001 = vmatpush1.msra.mxu0 0.0
        %2002 = vmatprep.subr.mxu0 0.0
        %2003 = vmatpush1.msra.mxu0 0.0
        %2004 = vmatprep.subr.mxu0 0.0
        %2005 = vmatpush1.msra.mxu0 0.0
        %2006 = vmatprep.subr.mxu0 0.0
        %2007 = vmatpush1.msra.mxu0 0.0
        %2008 = vmatprep.subr.mxu0 0.0
        %2009 = vmatpush1.msra.mxu0 0.0
        %2010 = vmatprep.subr.mxu0 0.0
        %2011 = vmatpush1.msra.mxu0 0.0
        %2012 = vmatprep.subr.mxu0 0.0
        %2013 = vmatpush1.msra.mxu0 0.0
        %2014 = vmatprep.subr.mxu0 0.0
        %2015 = vmatpush1.msra.mxu0 0.0
        %2016 = vmatprep.subr.mxu0 0.0
        %2017 = vmatpush1.msra.mxu0 0.0
        %2018 = vmatprep.subr.mxu0 0.0
        %2019 = vmatpush1.msra.mxu0 0.0
        %2020 = vmatprep.subr.mxu0 0.0
        %2021 = vmatpush1.msra.mxu0 0.0
        %2022 = vmatprep.subr.mxu0 0.0
        %2023 = vmatpush1.msra.mxu0 0.0
        %2024 = vmatprep.subr.mxu0 0.0
        %2025 = vmatpush1.msra.mxu0 0.0
        %2026 = vmatprep.subr.mxu0 0.0
        %2027 = vmatpush1.msra.mxu0 0.0
        %2028 = vmatprep.subr.mxu0 0.0
        %2029 = vmatpush1.msra.mxu0 0.0
        %2030 = vmatprep.subr.mxu0 0.0
        %2031 = vmatpush1.msra.mxu0 0.0
        %2032 = vmatprep.subr.mxu0 0.0
        %2033 = vmatpush1.msra.mxu0 0.0
        %2034 = vmatprep.subr.mxu0 0.0
        %2035 = vmatpush1.msra.mxu0 0.0
        %2036 = vmatprep.subr.mxu0 0.0
        %2037 = vmatpush1.msra.mxu0 0.0
        %2038 = vmatprep.subr.mxu0 0.0
        %2039 = vmatpush1.msra.mxu0 0.0
        %2040 = vmatprep.subr.mxu0 0.0
        %2041 = vmatpush1.msra.mxu0 0.0
        %2042 = vmatprep.subr.mxu0 0.0
        %2043 = vmatpush1.msra.mxu0 0.0
        %2044 = vmatprep.subr.mxu0 0.0
        %2045 = vmatpush1.msra.mxu0 0.0
        %2046 = vmatprep.subr.mxu0 0.0
        %2047 = vmatpush1.msra.mxu0 0.0
        %2048 = vmatprep.subr.mxu0 0.0
        %2049 = vmatpush1.msra.mxu0 0.0
        %2050 = vmatprep.subr.mxu0 0.0
        %2051 = vmatpush1.msra.mxu0 0.0
        %2052 = vmatprep.subr.mxu0 0.0
        %2053 = vmatpush1.msra.mxu0 0.0
        %2054 = vmatprep.mubr.f32.mxu0 0.0
        %2055 = vmatmul.mubr.f32.gmra.mrb[0].mxu0 %v1917
        %v2056 = vpop.f32.mrb[0].mxu0
        %v2057 = vadd.f32 0.0, %v2056
        %v2058 = vpop.f32.mrb[0].mxu0
        %2059 = vdwg.mxu0
        %2061 = vrot.lane.b32.xlu0 %v1986, 120
        %v2062 = vpop.permute.xlu0 %2061
        %2063 = vrot.lane.b32.xlu0 %v1986, 112
        %v2064 = vpop.permute.xlu0 %2063
        %2065 = vrot.lane.b32.xlu0 %v1986, 104
        %v2066 = vpop.permute.xlu0 %2065
        %2067 = vrot.lane.b32.xlu0 %v656, 112
        %v2068 = vpop.permute.xlu0 %2067
        %2069 = vrot.lane.b32.xlu0 %v661, 112
        %v2070 = vpop.permute.xlu0 %2069
        %v2071 = vsel %vm857, %v1986, 0
        %v2073 = vsel %vm857, %v2062, 0
        %v2075 = vsel %vm857, %v2064, 0
        %v2077 = vsel %vm857, %v2066, 0
        %v2079 = vsel %vm857, %v2068, 0
        %v2081 = vsel %vm857, %v2070, 0
        %2083 = vmatprep.subr.mxu0 0.0
        %2084 = vmatpush1.xpose.msra.mxu0 %v2079
        %2085 = vmatprep.subr.mxu0 0.0
        %2086 = vmatpush1.xpose.msra.mxu0 %v2081
        %2087 = vmatprep.subr.mxu0 0.0
        %2088 = vmatpush1.xpose.msra.mxu0 0.0
        %2089 = vmatprep.subr.mxu0 0.0
        %2090 = vmatpush1.xpose.msra.mxu0 0.0
        %2091 = vmatprep.subr.mxu0 0.0
        %2092 = vmatpush1.xpose.msra.mxu0 0.0
        %2093 = vmatprep.subr.mxu0 0.0
        %2094 = vmatpush1.xpose.msra.mxu0 0.0
        %2095 = vmatprep.subr.mxu0 0.0
        %2096 = vmatpush1.xpose.msra.mxu0 0.0
        %2097 = vmatprep.subr.mxu0 0.0
        %2098 = vmatpush1.xpose.msra.mxu0 0.0
        %2099 = vmatprep.subr.mxu0 0.0
        %2100 = vmatpush1.xpose.msra.mxu0 0.0
        %2101 = vmatprep.subr.mxu0 0.0
        %2102 = vmatpush1.xpose.msra.mxu0 0.0
        %2103 = vmatprep.subr.mxu0 0.0
        %2104 = vmatpush1.xpose.msra.mxu0 0.0
        %2105 = vmatprep.subr.mxu0 0.0
        %2106 = vmatpush1.xpose.msra.mxu0 0.0
        %2107 = vmatprep.subr.mxu0 0.0
        %2108 = vmatpush1.xpose.msra.mxu0 0.0
        %2109 = vmatprep.subr.mxu0 0.0
        %2110 = vmatpush1.xpose.msra.mxu0 0.0
        %2111 = vmatprep.subr.mxu0 0.0
        %2112 = vmatpush1.xpose.msra.mxu0 0.0
        %2113 = vmatprep.subr.mxu0 0.0
        %2114 = vmatpush1.xpose.msra.mxu0 0.0
        %2115 = vmatprep.subr.mxu0 0.0
        %2116 = vmatpush1.xpose.msra.mxu0 0.0
        %2117 = vmatprep.subr.mxu0 0.0
        %2118 = vmatpush1.xpose.msra.mxu0 0.0
        %2119 = vmatprep.subr.mxu0 0.0
        %2120 = vmatpush1.xpose.msra.mxu0 0.0
        %2121 = vmatprep.subr.mxu0 0.0
        %2122 = vmatpush1.xpose.msra.mxu0 0.0
        %2123 = vmatprep.subr.mxu0 0.0
        %2124 = vmatpush1.xpose.msra.mxu0 0.0
        %2125 = vmatprep.subr.mxu0 0.0
        %2126 = vmatpush1.xpose.msra.mxu0 0.0
        %2127 = vmatprep.subr.mxu0 0.0
        %2128 = vmatpush1.xpose.msra.mxu0 0.0
        %2129 = vmatprep.subr.mxu0 0.0
        %2130 = vmatpush1.xpose.msra.mxu0 0.0
        %2131 = vmatprep.subr.mxu0 0.0
        %2132 = vmatpush1.xpose.msra.mxu0 0.0
        %2133 = vmatprep.subr.mxu0 0.0
        %2134 = vmatpush1.xpose.msra.mxu0 0.0
        %2135 = vmatprep.subr.mxu0 0.0
        %2136 = vmatpush1.xpose.msra.mxu0 0.0
        %2137 = vmatprep.subr.mxu0 0.0
        %2138 = vmatpush1.xpose.msra.mxu0 0.0
        %2139 = vmatprep.subr.mxu0 0.0
        %2140 = vmatpush1.xpose.msra.mxu0 0.0
        %2141 = vmatprep.subr.mxu0 0.0
        %2142 = vmatpush1.xpose.msra.mxu0 0.0
        %2143 = vmatprep.subr.mxu0 0.0
        %2144 = vmatpush1.xpose.msra.mxu0 0.0
        %2145 = vmatprep.subr.mxu0 0.0
        %2146 = vmatpush1.xpose.msra.mxu0 0.0
        %2147 = vmatprep.mubr.f32.mxu0 0.0
        %2148 = vmatmul.mubr.f32.gmra.mrb[0].mxu0 %v2071
        %v2149 = vpop.f32.mrb[0].mxu0
        %v2150 = vadd.f32 %v564, %v2149
        %v2151 = vpop.f32.mrb[0].mxu0
        %2152 = vmatprep.mubr.f32.mxu0 0.0
        %2153 = vmatmul.mubr.f32.gmra.mrb[0].mxu0 %v2073
        %v2154 = vpop.f32.mrb[0].mxu0
        %v2155 = vadd.f32 %v565, %v2154
        %v2156 = vpop.f32.mrb[0].mxu0
        %2157 = vmatprep.mubr.f32.mxu0 0.0
        %2158 = vmatmul.mubr.f32.gmra.mrb[0].mxu0 %v2075
        %v2159 = vpop.f32.mrb[0].mxu0
        %v2160 = vadd.f32 %v566, %v2159
        %v2161 = vpop.f32.mrb[0].mxu0
        %2162 = vmatprep.mubr.f32.mxu0 0.0
        %2163 = vmatmul.mubr.f32.gmra.mrb[0].mxu0 %v2077
        %v2164 = vpop.f32.mrb[0].mxu0
        %v2165 = vadd.f32 %v567, %v2164
        %v2166 = vpop.f32.mrb[0].mxu0
        %2167 = vdwg.mxu0
        %v2168 = vsel %vm957, %v2150, -inf
        %2169 = vmax.xlane.f32.xlu0 %v2168
        %v2170 = vpop.xlane.xlu0 %2169
        %v2171 = vsel %vm957, %v2155, -inf
        %2172 = vmax.xlane.f32.xlu0 %v2171
        %v2173 = vpop.xlane.xlu0 %2172
        %v2174 = vsel %vm957, %v2160, -inf
        %2175 = vmax.xlane.f32.xlu0 %v2174
        %v2176 = vpop.xlane.xlu0 %2175
        %v2177 = vsel %vm957, %v2165, -inf
        %2178 = vmax.xlane.f32.xlu0 %v2177
        %v2179 = vpop.xlane.xlu0 %2178
        %v2180 = vsub.f32 %v2150, %v2170
        %v2181 = vsub.f32 %v2155, %v2173
        %v2182 = vsub.f32 %v2160, %v2176
        %v2183 = vsub.f32 %v2165, %v2179
        %v2184 = vmul.f32 %v2180, 1.442695
        %v2185 = vpow.pop %v2184
        %v2186 = vmul.f32 %v2181, 1.442695
        %v2187 = vpow.pop %v2186
        %v2188 = vmul.f32 %v2182, 1.442695
        %v2189 = vpow.pop %v2188
        %v2190 = vmul.f32 %v2183, 1.442695
        %v2191 = vpow.pop %v2190
        %v2192 = vsel %vm957, %v2185, 0.0
        %2193 = vadd.xlane.f32.xlu0 %v2192
        %v2194 = vpop.xlane.xlu0 %2193
        %v2195 = vsel %vm957, %v2187, 0.0
        %2196 = vadd.xlane.f32.xlu0 %v2195
        %v2197 = vpop.xlane.xlu0 %2196
        %v2198 = vsel %vm957, %v2189, 0.0
        %2199 = vadd.xlane.f32.xlu0 %v2198
        %v2200 = vpop.xlane.xlu0 %2199
        %v2201 = vsel %vm957, %v2191, 0.0
        %2202 = vadd.xlane.f32.xlu0 %v2201
        %v2203 = vpop.xlane.xlu0 %2202
        %v2204 = vrcp.pop %v2194
        %v2205 = vrcp.pop %v2197
        %v2206 = vrcp.pop %v2200
        %v2207 = vrcp.pop %v2203
        %v2208 = vmul.f32 %v2185, %v2204
        %v2209 = vmul.f32 %v2187, %v2205
        %v2210 = vmul.f32 %v2189, %v2206
        %v2211 = vmul.f32 %v2191, %v2207
        %2212 = vrot.lane.b32.xlu0 %v656, 104
        %v2213 = vpop.permute.xlu0 %2212
        %2214 = vrot.lane.b32.xlu0 %v661, 104
        %v2215 = vpop.permute.xlu0 %2214
        %v2219 = vsel %vm957, %v2208, 0
        %v2222 = vsel %vm957, %v2209, 0
        %v2225 = vsel %vm957, %v2210, 0
        %v2228 = vsel %vm957, %v2211, 0
        %2230 = vmatprep.subr.mxu0 0.0
        %2231 = vmatpush1.msra.mxu0 %v2213
        %2232 = vmatprep.subr.mxu0 0.0
        %2233 = vmatpush1.msra.mxu0 %v2215
        %2234 = vmatprep.subr.mxu0 0.0
        %2235 = vmatpush1.msra.mxu0 0.0
        %2236 = vmatprep.subr.mxu0 0.0
        %2237 = vmatpush1.msra.mxu0 0.0
        %2238 = vmatprep.subr.mxu0 0.0
        %2239 = vmatpush1.msra.mxu0 0.0
        %2240 = vmatprep.subr.mxu0 0.0
        %2241 = vmatpush1.msra.mxu0 0.0
        %2242 = vmatprep.subr.mxu0 0.0
        %2243 = vmatpush1.msra.mxu0 0.0
        %2244 = vmatprep.subr.mxu0 0.0
        %2245 = vmatpush1.msra.mxu0 0.0
        %2246 = vmatprep.subr.mxu0 0.0
        %2247 = vmatpush1.msra.mxu0 0.0
        %2248 = vmatprep.subr.mxu0 0.0
        %2249 = vmatpush1.msra.mxu0 0.0
        %2250 = vmatprep.subr.mxu0 0.0
        %2251 = vmatpush1.msra.mxu0 0.0
        %2252 = vmatprep.subr.mxu0 0.0
        %2253 = vmatpush1.msra.mxu0 0.0
        %2254 = vmatprep.subr.mxu0 0.0
        %2255 = vmatpush1.msra.mxu0 0.0
        %2256 = vmatprep.subr.mxu0 0.0
        %2257 = vmatpush1.msra.mxu0 0.0
        %2258 = vmatprep.subr.mxu0 0.0
        %2259 = vmatpush1.msra.mxu0 0.0
        %2260 = vmatprep.subr.mxu0 0.0
        %2261 = vmatpush1.msra.mxu0 0.0
        %2262 = vmatprep.subr.mxu0 0.0
        %2263 = vmatpush1.msra.mxu0 0.0
        %2264 = vmatprep.subr.mxu0 0.0
        %2265 = vmatpush1.msra.mxu0 0.0
        %2266 = vmatprep.subr.mxu0 0.0
        %2267 = vmatpush1.msra.mxu0 0.0
        %2268 = vmatprep.subr.mxu0 0.0
        %2269 = vmatpush1.msra.mxu0 0.0
        %2270 = vmatprep.subr.mxu0 0.0
        %2271 = vmatpush1.msra.mxu0 0.0
        %2272 = vmatprep.subr.mxu0 0.0
        %2273 = vmatpush1.msra.mxu0 0.0
        %2274 = vmatprep.subr.mxu0 0.0
        %2275 = vmatpush1.msra.mxu0 0.0
        %2276 = vmatprep.subr.mxu0 0.0
        %2277 = vmatpush1.msra.mxu0 0.0
        %2278 = vmatprep.subr.mxu0 0.0
        %2279 = vmatpush1.msra.mxu0 0.0
        %2280 = vmatprep.subr.mxu0 0.0
        %2281 = vmatpush1.msra.mxu0 0.0
        %2282 = vmatprep.subr.mxu0 0.0
        %2283 = vmatpush1.msra.mxu0 0.0
        %2284 = vmatprep.subr.mxu0 0.0
        %2285 = vmatpush1.msra.mxu0 0.0
        %2286 = vmatprep.subr.mxu0 0.0
        %2287 = vmatpush1.msra.mxu0 0.0
        %2288 = vmatprep.subr.mxu0 0.0
        %2289 = vmatpush1.msra.mxu0 0.0
        %2290 = vmatprep.subr.mxu0 0.0
        %2291 = vmatpush1.msra.mxu0 0.0
        %2292 = vmatprep.subr.mxu0 0.0
        %2293 = vmatpush1.msra.mxu0 0.0
        %2294 = vmatprep.mubr.f32.mxu0 0.0
        %2295 = vmatmul.mubr.f32.gmra.mrb[0].mxu0 %v2219
        %v2296 = vpop.f32.mrb[0].mxu0
        %v2297 = vadd.f32 0.0, %v2296
        %v2298 = vpop.f32.mrb[0].mxu0
        %2299 = vmatprep.mubr.f32.mxu0 0.0
        %2300 = vmatmul.mubr.f32.gmra.mrb[0].mxu0 %v2222
        %v2301 = vpop.f32.mrb[0].mxu0
        %v2302 = vadd.f32 0.0, %v2301
        %v2303 = vpop.f32.mrb[0].mxu0
        %2304 = vmatprep.mubr.f32.mxu0 0.0
        %2305 = vmatmul.mubr.f32.gmra.mrb[0].mxu0 %v2225
        %v2306 = vpop.f32.mrb[0].mxu0
        %v2307 = vadd.f32 0.0, %v2306
        %v2308 = vpop.f32.mrb[0].mxu0
        %2309 = vmatprep.mubr.f32.mxu0 0.0
        %2310 = vmatmul.mubr.f32.gmra.mrb[0].mxu0 %v2228
        %v2311 = vpop.f32.mrb[0].mxu0
        %v2312 = vadd.f32 0.0, %v2311
        %v2313 = vpop.f32.mrb[0].mxu0
        %2314 = vdwg.mxu0
        %2316 = vrot.lane.b32.xlu0 %v2302, 8
        %v2317 = vpop.permute.xlu0 %2316
        %2320 = vrot.lane.b32.xlu0 %v2307, 16
        %v2321 = vpop.permute.xlu0 %2320
        %2324 = vrot.lane.b32.xlu0 %v2312, 24
        %v2325 = vpop.permute.xlu0 %2324
        %v2327 = vsel %vm857, %v2297, %v2317
        %v2328 = vsel %vm957, %v2327, %v2321
        %v2329 = vsel %vm1119, %v2328, %v2325
        %v2330 = vxor.u32 %v1988, 2147483648
        %v2331 = vxor.u32 %v2057, 2147483648
        %v2332 = vmul.f32 %v2330, 1.442695
        %v2333 = vpow.pop %v2332
        %v2334 = vmul.f32 %v2331, 1.442695
        %v2335 = vpow.pop %v2334
        %v2336 = vadd.f32 %v2333, 1.0
        %v2337 = vadd.f32 %v2335, 1.0
        %v2338 = vrcp.pop %v2336
        %v2339 = vmul.f32 1.0, %v2338
        %v2340 = vrcp.pop %v2337
        %v2341 = vmul.f32 1.0, %v2340
        %v2342 = vmul.f32 %v1988, %v2339
        %v2343 = vmul.f32 %v2057, %v2341
        %v2344 = vmul.f32 %v2342, %v1986
        %v2345 = vmul.f32 %v2343, %v1988
        %v2346 = vsel %vm582, %v2329, %v2344
        %s2347 = scalar_lea.vmem %s11, 160
        %v2348 = vld [vmem:[%s2347] sm:$0xff]
        %v2349 = vld [vmem:[%s2347 + $0x8] sm:$0xff]
        %v2350 = vld [vmem:[%s2347 + $0x10] sm:$0xff]
        %v2351 = vld [vmem:[%s2347 + $0x18] sm:$0xff]
        %v2352 = vld [vmem:[%s2347 + $0x20] sm:$0xff]
        %v2353 = vld [vmem:[%s2347 + $0x28] sm:$0xff]
        %v2354 = vld [vmem:[%s2347 + $0x30] sm:$0xff]
        %v2355 = vld [vmem:[%s2347 + $0x38] sm:$0xff]
        %v2356 = vld [vmem:[%s2347 + $0x40] sm:$0xff]
        %v2357 = vld [vmem:[%s2347 + $0x48] sm:$0xff]
        %v2358 = vld [vmem:[%s2347 + $0x50] sm:$0xff]
        %v2359 = vld [vmem:[%s2347 + $0x58] sm:$0xff]
        %v2360 = vld [vmem:[%s2347 + $0x60] sm:$0xff]
        %v2361 = vld [vmem:[%s2347 + $0x68] sm:$0xff]
        %v2362 = vld [vmem:[%s2347 + $0x70] sm:$0xff]
        %v2363 = vld [vmem:[%s2347 + $0x78] sm:$0xff]
        %v2364 = vld [vmem:[%s2347 + $0x80] sm:$0xff]
        %v2365 = vld [vmem:[%s2347 + $0x88] sm:$0xff]
        %v2366 = vld [vmem:[%s2347 + $0x90] sm:$0xff]
        %v2367 = vld [vmem:[%s2347 + $0x98] sm:$0xff]
        %v2369 = vsel %vm582, %v2345, 0
        %2371 = vmatprep.subr.mxu0 0.0
        %2372 = vmatpush1.msra.mxu0 %v2348
        %2373 = vmatprep.subr.mxu0 0.0
        %2374 = vmatpush1.msra.mxu0 %v2349
        %2375 = vmatprep.subr.mxu0 0.0
        %2376 = vmatpush1.msra.mxu0 %v2350
        %2377 = vmatprep.subr.mxu0 0.0
        %2378 = vmatpush1.msra.mxu0 %v2351
        %2379 = vmatprep.subr.mxu0 0.0
        %2380 = vmatpush1.msra.mxu0 %v2352
        %2381 = vmatprep.subr.mxu0 0.0
        %2382 = vmatpush1.msra.mxu0 %v2353
        %2383 = vmatprep.subr.mxu0 0.0
        %2384 = vmatpush1.msra.mxu0 %v2354
        %2385 = vmatprep.subr.mxu0 0.0
        %2386 = vmatpush1.msra.mxu0 %v2355
        %2387 = vmatprep.subr.mxu0 0.0
        %2388 = vmatpush1.msra.mxu0 %v2356
        %2389 = vmatprep.subr.mxu0 0.0
        %2390 = vmatpush1.msra.mxu0 %v2357
        %2391 = vmatprep.subr.mxu0 0.0
        %2392 = vmatpush1.msra.mxu0 %v2358
        %2393 = vmatprep.subr.mxu0 0.0
        %2394 = vmatpush1.msra.mxu0 %v2359
        %2395 = vmatprep.subr.mxu0 0.0
        %2396 = vmatpush1.msra.mxu0 %v2360
        %2397 = vmatprep.subr.mxu0 0.0
        %2398 = vmatpush1.msra.mxu0 %v2361
        %2399 = vmatprep.subr.mxu0 0.0
        %2400 = vmatpush1.msra.mxu0 %v2362
        %2401 = vmatprep.subr.mxu0 0.0
        %2402 = vmatpush1.msra.mxu0 %v2363
        %2403 = vmatprep.subr.mxu0 0.0
        %2404 = vmatpush1.msra.mxu0 %v2364
        %2405 = vmatprep.subr.mxu0 0.0
        %2406 = vmatpush1.msra.mxu0 %v2365
        %2407 = vmatprep.subr.mxu0 0.0
        %2408 = vmatpush1.msra.mxu0 %v2366
        %2409 = vmatprep.subr.mxu0 0.0
        %2410 = vmatpush1.msra.mxu0 %v2367
        %2411 = vmatprep.subr.mxu0 0.0
        %2412 = vmatpush1.msra.mxu0 0.0
        %2413 = vmatprep.subr.mxu0 0.0
        %2414 = vmatpush1.msra.mxu0 0.0
        %2415 = vmatprep.subr.mxu0 0.0
        %2416 = vmatpush1.msra.mxu0 0.0
        %2417 = vmatprep.subr.mxu0 0.0
        %2418 = vmatpush1.msra.mxu0 0.0
        %2419 = vmatprep.subr.mxu0 0.0
        %2420 = vmatpush1.msra.mxu0 0.0
        %2421 = vmatprep.subr.mxu0 0.0
        %2422 = vmatpush1.msra.mxu0 0.0
        %2423 = vmatprep.subr.mxu0 0.0
        %2424 = vmatpush1.msra.mxu0 0.0
        %2425 = vmatprep.subr.mxu0 0.0
        %2426 = vmatpush1.msra.mxu0 0.0
        %2427 = vmatprep.subr.mxu0 0.0
        %2428 = vmatpush1.msra.mxu0 0.0
        %2429 = vmatprep.subr.mxu0 0.0
        %2430 = vmatpush1.msra.mxu0 0.0
        %2431 = vmatprep.subr.mxu0 0.0
        %2432 = vmatpush1.msra.mxu0 0.0
        %2433 = vmatprep.subr.mxu0 0.0
        %2434 = vmatpush1.msra.mxu0 0.0
        %2435 = vmatprep.mubr.f32.mxu0 %v2369
        %2436 = vmatmul.mubr.f32.gmra.mrb[0].mxu0 %v2346
        %v2437 = vpop.f32.mrb[0].mxu0
        %v2438 = vadd.f32 %v1869, %v2437
        %v2439 = vpop.f32.mrb[0].mxu0
        %2440 = vdwg.mxu0
        %s2441 = scalar_lea.vmem %s12, 1
        %v2442 = vld [vmem:[%s2441] sm:$0x1]
        %s2443 = scalar_lea.vmem %s13, 1
        %v2444 = vld [vmem:[%s2443] sm:$0x1]
        %v2445 = vsel %vm582, %v2438, 0.0
        %2446 = vadd.xlane.f32.xlu0 %v2445
        %v2447 = vpop.xlane.xlu0 %2446
        %v2448 = vmul.f32 %v2447, %v669
        %v2449 = vsub.f32 %v2438, %v2448
        %v2450 = vmul.f32 %v2449, %v2449
        %v2451 = vsel %vm582, %v2450, 0.0
        %2452 = vadd.xlane.f32.xlu0 %v2451
        %v2453 = vpop.xlane.xlu0 %2452
        %v2454 = vmul.f32 %v2453, %v669
        %v2455 = vadd.f32 %v2454, 1e-05
        %v2456 = vrsqrt.pop %v2455
        %v2457 = vmul.f32 %v2449, %v2456
        %v2459 = vlaneseq
        %v2460 = vshrl.u32 %v2459, 7
        %v2461 = vsub.s32 0, %v2460
        %v2462 = vrot.slane %v2442, %v2461
        %v2464 = vmul.f32 %v2457, %v2462
        %v2466 = vlaneseq
        %v2467 = vshrl.u32 %v2466, 7
        %v2468 = vsub.s32 0, %v2467
        %v2469 = vrot.slane %v2444, %v2468
        %v2471 = vadd.f32 %v2464, %v2469
        %s2472 = scalar_lea.vmem %s14, 96
        %v2473 = vld [vmem:[%s2472] sm:$0xff]
        %v2474 = vld [vmem:[%s2472 + $0x8] sm:$0xff]
        %v2475 = vld [vmem:[%s2472 + $0x10] sm:$0xff]
        %v2476 = vld [vmem:[%s2472 + $0x18] sm:$0xff]
        %v2477 = vld [vmem:[%s2472 + $0x20] sm:$0xff]
        %v2478 = vld [vmem:[%s2472 + $0x28] sm:$0xff]
        %v2479 = vld [vmem:[%s2472 + $0x30] sm:$0xff]
        %v2480 = vld [vmem:[%s2472 + $0x38] sm:$0xff]
        %v2481 = vld [vmem:[%s2472 + $0x40] sm:$0xff]
        %v2482 = vld [vmem:[%s2472 + $0x48] sm:$0xff]
        %v2483 = vld [vmem:[%s2472 + $0x50] sm:$0xff]
        %v2484 = vld [vmem:[%s2472 + $0x58] sm:$0xff]
        %v2486 = vsel %vm582, %v2471, 0
        %2488 = vmatprep.subr.mxu0 %v2474
        %2489 = vmatpush1.msra.mxu0 %v2473
        %2490 = vmatprep.subr.mxu0 %v2477
        %2491 = vmatpush1.msra.mxu0 %v2476
        %2492 = vmatprep.subr.mxu0 %v2480
        %2493 = vmatpush1.msra.mxu0 %v2479
        %2494 = vmatprep.subr.mxu0 %v2483
        %2495 = vmatpush1.msra.mxu0 %v2482
        %2496 = vmatprep.subr.mxu0 0.0
        %2497 = vmatpush1.msra.mxu0 0.0
        %2498 = vmatprep.subr.mxu0 0.0
        %2499 = vmatpush1.msra.mxu0 0.0
        %2500 = vmatprep.subr.mxu0 0.0
        %2501 = vmatpush1.msra.mxu0 0.0
        %2502 = vmatprep.subr.mxu0 0.0
        %2503 = vmatpush1.msra.mxu0 0.0
        %2504 = vmatprep.subr.mxu0 0.0
        %2505 = vmatpush1.msra.mxu0 0.0
        %2506 = vmatprep.subr.mxu0 0.0
        %2507 = vmatpush1.msra.mxu0 0.0
        %2508 = vmatprep.subr.mxu0 0.0
        %2509 = vmatpush1.msra.mxu0 0.0
        %2510 = vmatprep.subr.mxu0 0.0
        %2511 = vmatpush1.msra.mxu0 0.0
        %2512 = vmatprep.subr.mxu0 0.0
        %2513 = vmatpush1.msra.mxu0 0.0
        %2514 = vmatprep.subr.mxu0 0.0
        %2515 = vmatpush1.msra.mxu0 0.0
        %2516 = vmatprep.subr.mxu0 0.0
        %2517 = vmatpush1.msra.mxu0 0.0
        %2518 = vmatprep.subr.mxu0 0.0
        %2519 = vmatpush1.msra.mxu0 0.0
        %2520 = vmatprep.subr.mxu0 0.0
        %2521 = vmatpush1.msra.mxu0 0.0
        %2522 = vmatprep.subr.mxu0 0.0
        %2523 = vmatpush1.msra.mxu0 0.0
        %2524 = vmatprep.subr.mxu0 0.0
        %2525 = vmatpush1.msra.mxu0 0.0
        %2526 = vmatprep.subr.mxu0 0.0
        %2527 = vmatpush1.msra.mxu0 0.0
        %2528 = vmatprep.subr.mxu0 0.0
        %2529 = vmatpush1.msra.mxu0 0.0
        %2530 = vmatprep.subr.mxu0 0.0
        %2531 = vmatpush1.msra.mxu0 0.0
        %2532 = vmatprep.subr.mxu0 0.0
        %2533 = vmatpush1.msra.mxu0 0.0
        %2534 = vmatprep.subr.mxu0 0.0
        %2535 = vmatpush1.msra.mxu0 0.0
        %2536 = vmatprep.subr.mxu0 0.0
        %2537 = vmatpush1.msra.mxu0 0.0
        %2538 = vmatprep.subr.mxu0 0.0
        %2539 = vmatpush1.msra.mxu0 0.0
        %2540 = vmatprep.subr.mxu0 0.0
        %2541 = vmatpush1.msra.mxu0 0.0
        %2542 = vmatprep.subr.mxu0 0.0
        %2543 = vmatpush1.msra.mxu0 0.0
        %2544 = vmatprep.subr.mxu0 0.0
        %2545 = vmatpush1.msra.mxu0 0.0
        %2546 = vmatprep.subr.mxu0 0.0
        %2547 = vmatpush1.msra.mxu0 0.0
        %2548 = vmatprep.subr.mxu0 0.0
        %2549 = vmatpush1.msra.mxu0 0.0
        %2550 = vmatprep.subr.mxu0 0.0
        %2551 = vmatpush1.msra.mxu0 0.0
        %2552 = vmatprep.mubr.f32.mxu0 0.0
        %2553 = vmatmul.mubr.f32.gmra.mrb[0].mxu0 %v2486
        %v2554 = vpop.f32.mrb[0].mxu0
        %v2555 = vadd.f32 0.0, %v2554
        %v2556 = vpop.f32.mrb[0].mxu0
        %v2557 = vadd.f32 0.0, %v2556
        %2558 = vdwg.mxu0
        %2559 = vmatprep.subr.mxu0 0.0
        %2560 = vmatpush1.msra.mxu0 %v2475
        %2561 = vmatprep.subr.mxu0 0.0
        %2562 = vmatpush1.msra.mxu0 %v2478
        %2563 = vmatprep.subr.mxu0 0.0
        %2564 = vmatpush1.msra.mxu0 %v2481
        %2565 = vmatprep.subr.mxu0 0.0
        %2566 = vmatpush1.msra.mxu0 %v2484
        %2567 = vmatprep.subr.mxu0 0.0
        %2568 = vmatpush1.msra.mxu0 0.0
        %2569 = vmatprep.subr.mxu0 0.0
        %2570 = vmatpush1.msra.mxu0 0.0
        %2571 = vmatprep.subr.mxu0 0.0
        %2572 = vmatpush1.msra.mxu0 0.0
        %2573 = vmatprep.subr.mxu0 0.0
        %2574 = vmatpush1.msra.mxu0 0.0
        %2575 = vmatprep.subr.mxu0 0.0
        %2576 = vmatpush1.msra.mxu0 0.0
        %2577 = vmatprep.subr.mxu0 0.0
        %2578 = vmatpush1.msra.mxu0 0.0
        %2579 = vmatprep.subr.mxu0 0.0
        %2580 = vmatpush1.msra.mxu0 0.0
        %2581 = vmatprep.subr.mxu0 0.0
        %2582 = vmatpush1.msra.mxu0 0.0
        %2583 = vmatprep.subr.mxu0 0.0
        %2584 = vmatpush1.msra.mxu0 0.0
        %2585 = vmatprep.subr.mxu0 0.0
        %2586 = vmatpush1.msra.mxu0 0.0
        %2587 = vmatprep.subr.mxu0 0.0
        %2588 = vmatpush1.msra.mxu0 0.0
        %2589 = vmatprep.subr.mxu0 0.0
        %2590 = vmatpush1.msra.mxu0 0.0
        %2591 = vmatprep.subr.mxu0 0.0
        %2592 = vmatpush1.msra.mxu0 0.0
        %2593 = vmatprep.subr.mxu0 0.0
        %2594 = vmatpush1.msra.mxu0 0.0
        %2595 = vmatprep.subr.mxu0 0.0
        %2596 = vmatpush1.msra.mxu0 0.0
        %2597 = vmatprep.subr.mxu0 0.0
        %2598 = vmatpush1.msra.mxu0 0.0
        %2599 = vmatprep.subr.mxu0 0.0
        %2600 = vmatpush1.msra.mxu0 0.0
        %2601 = vmatprep.subr.mxu0 0.0
        %2602 = vmatpush1.msra.mxu0 0.0
        %2603 = vmatprep.subr.mxu0 0.0
        %2604 = vmatpush1.msra.mxu0 0.0
        %2605 = vmatprep.subr.mxu0 0.0
        %2606 = vmatpush1.msra.mxu0 0.0
        %2607 = vmatprep.subr.mxu0 0.0
        %2608 = vmatpush1.msra.mxu0 0.0
        %2609 = vmatprep.subr.mxu0 0.0
        %2610 = vmatpush1.msra.mxu0 0.0
        %2611 = vmatprep.subr.mxu0 0.0
        %2612 = vmatpush1.msra.mxu0 0.0
        %2613 = vmatprep.subr.mxu0 0.0
        %2614 = vmatpush1.msra.mxu0 0.0
        %2615 = vmatprep.subr.mxu0 0.0
        %2616 = vmatpush1.msra.mxu0 0.0
        %2617 = vmatprep.subr.mxu0 0.0
        %2618 = vmatpush1.msra.mxu0 0.0
        %2619 = vmatprep.subr.mxu0 0.0
        %2620 = vmatpush1.msra.mxu0 0.0
        %2621 = vmatprep.subr.mxu0 0.0
        %2622 = vmatpush1.msra.mxu0 0.0
        %2623 = vmatprep.mubr.f32.mxu0 0.0
        %2624 = vmatmul.mubr.f32.gmra.mrb[0].mxu0 %v2486
        %v2625 = vpop.f32.mrb[0].mxu0
        %v2626 = vadd.f32 0.0, %v2625
        %v2627 = vpop.f32.mrb[0].mxu0
        %2628 = vdwg.mxu0
        %2630 = vrot.lane.b32.xlu0 %v2555, 120
        %v2631 = vpop.permute.xlu0 %2630
        %2633 = vrot.lane.b32.xlu0 %v2555, 112
        %v2634 = vpop.permute.xlu0 %2633
        %2636 = vrot.lane.b32.xlu0 %v2555, 104
        %v2637 = vpop.permute.xlu0 %2636
        %v2639 = vsub.f32 0.0, %v2555
        %v2640 = vsub.f32 0.0, %v2631
        %v2641 = vsub.f32 0.0, %v2634
        %v2642 = vsub.f32 0.0, %v2637
        %2647 = vrot.lane.b32.xlu0 %v2639, 124
        %v2648 = vpop.permute.xlu0 %2647
        %2649 = vrot.lane.b32.xlu0 %v2640, 124
        %v2650 = vpop.permute.xlu0 %2649
        %2651 = vrot.lane.b32.xlu0 %v2641, 124
        %v2652 = vpop.permute.xlu0 %2651
        %2653 = vrot.lane.b32.xlu0 %v2642, 124
        %v2654 = vpop.permute.xlu0 %2653
        %2659 = vrot.lane.b32.xlu0 %v2555, 4
        %v2660 = vpop.permute.xlu0 %2659
        %2661 = vrot.lane.b32.xlu0 %v2631, 4
        %v2662 = vpop.permute.xlu0 %2661
        %2663 = vrot.lane.b32.xlu0 %v2634, 4
        %v2664 = vpop.permute.xlu0 %2663
        %2665 = vrot.lane.b32.xlu0 %v2637, 4
        %v2666 = vpop.permute.xlu0 %2665
        %v2671 = vsel %vm1458, %v2648, %v2660
        %v2672 = vsel %vm1458, %v2650, %v2662
        %v2673 = vsel %vm1458, %v2652, %v2664
        %v2674 = vsel %vm1458, %v2654, %v2666
        %v2675 = vmul.f32 %v2555, %v568
        %v2676 = vmul.f32 %v2631, %v569
        %v2677 = vmul.f32 %v2634, %v570
        %v2678 = vmul.f32 %v2637, %v571
        %v2679 = vmul.f32 %v2671, %v572
        %v2680 = vmul.f32 %v2672, %v573
        %v2681 = vmul.f32 %v2673, %v574
        %v2682 = vmul.f32 %v2674, %v575
        %v2683 = vadd.f32 %v2675, %v2679
        %v2684 = vadd.f32 %v2676, %v2680
        %v2685 = vadd.f32 %v2677, %v2681
        %v2686 = vadd.f32 %v2678, %v2682
        %2687 = vrot.lane.b32.xlu0 %v2639, 92
        %v2688 = vpop.permute.xlu0 %2687
        %2690 = vrot.lane.b32.xlu0 %v2555, 100
        %v2691 = vpop.permute.xlu0 %2690
        %v2693 = vsel %vm1458, %v2688, %v2691
        %v2694 = vmul.f32 %v2555, %v1484
        %v2695 = vmul.f32 %v2693, %v577
        %2697 = vrot.lane.b32.xlu0 %v2695, 32
        %v2698 = vpop.permute.xlu0 %2697
        %v2700 = vadd.f32 %v2694, %v2698
        %2702 = vrot.lane.b32.xlu0 %v2700, 96
        %v2703 = vpop.permute.xlu0 %2702
        %v2705 = vsel %vm857, %v2683, 0
        %v2708 = vsel %vm857, %v2684, 0
        %v2711 = vsel %vm857, %v2685, 0
        %v2714 = vsel %vm857, %v2686, 0
        %v2716 = vsel %vm857, %v2703, 0
        %2718 = vmatprep.subr.mxu0 0.0
        %2719 = vmatpush1.xpose.msra.mxu0 %v2716
        %2720 = vmatprep.subr.mxu0 0.0
        %2721 = vmatpush1.xpose.msra.mxu0 0.0
        %2722 = vmatprep.subr.mxu0 0.0
        %2723 = vmatpush1.xpose.msra.mxu0 0.0
        %2724 = vmatprep.subr.mxu0 0.0
        %2725 = vmatpush1.xpose.msra.mxu0 0.0
        %2726 = vmatprep.subr.mxu0 0.0
        %2727 = vmatpush1.xpose.msra.mxu0 0.0
        %2728 = vmatprep.subr.mxu0 0.0
        %2729 = vmatpush1.xpose.msra.mxu0 0.0
        %2730 = vmatprep.subr.mxu0 0.0
        %2731 = vmatpush1.xpose.msra.mxu0 0.0
        %2732 = vmatprep.subr.mxu0 0.0
        %2733 = vmatpush1.xpose.msra.mxu0 0.0
        %2734 = vmatprep.subr.mxu0 0.0
        %2735 = vmatpush1.xpose.msra.mxu0 0.0
        %2736 = vmatprep.subr.mxu0 0.0
        %2737 = vmatpush1.xpose.msra.mxu0 0.0
        %2738 = vmatprep.subr.mxu0 0.0
        %2739 = vmatpush1.xpose.msra.mxu0 0.0
        %2740 = vmatprep.subr.mxu0 0.0
        %2741 = vmatpush1.xpose.msra.mxu0 0.0
        %2742 = vmatprep.subr.mxu0 0.0
        %2743 = vmatpush1.xpose.msra.mxu0 0.0
        %2744 = vmatprep.subr.mxu0 0.0
        %2745 = vmatpush1.xpose.msra.mxu0 0.0
        %2746 = vmatprep.subr.mxu0 0.0
        %2747 = vmatpush1.xpose.msra.mxu0 0.0
        %2748 = vmatprep.subr.mxu0 0.0
        %2749 = vmatpush1.xpose.msra.mxu0 0.0
        %2750 = vmatprep.subr.mxu0 0.0
        %2751 = vmatpush1.xpose.msra.mxu0 0.0
        %2752 = vmatprep.subr.mxu0 0.0
        %2753 = vmatpush1.xpose.msra.mxu0 0.0
        %2754 = vmatprep.subr.mxu0 0.0
        %2755 = vmatpush1.xpose.msra.mxu0 0.0
        %2756 = vmatprep.subr.mxu0 0.0
        %2757 = vmatpush1.xpose.msra.mxu0 0.0
        %2758 = vmatprep.subr.mxu0 0.0
        %2759 = vmatpush1.xpose.msra.mxu0 0.0
        %2760 = vmatprep.subr.mxu0 0.0
        %2761 = vmatpush1.xpose.msra.mxu0 0.0
        %2762 = vmatprep.subr.mxu0 0.0
        %2763 = vmatpush1.xpose.msra.mxu0 0.0
        %2764 = vmatprep.subr.mxu0 0.0
        %2765 = vmatpush1.xpose.msra.mxu0 0.0
        %2766 = vmatprep.subr.mxu0 0.0
        %2767 = vmatpush1.xpose.msra.mxu0 0.0
        %2768 = vmatprep.subr.mxu0 0.0
        %2769 = vmatpush1.xpose.msra.mxu0 0.0
        %2770 = vmatprep.subr.mxu0 0.0
        %2771 = vmatpush1.xpose.msra.mxu0 0.0
        %2772 = vmatprep.subr.mxu0 0.0
        %2773 = vmatpush1.xpose.msra.mxu0 0.0
        %2774 = vmatprep.subr.mxu0 0.0
        %2775 = vmatpush1.xpose.msra.mxu0 0.0
        %2776 = vmatprep.subr.mxu0 0.0
        %2777 = vmatpush1.xpose.msra.mxu0 0.0
        %2778 = vmatprep.subr.mxu0 0.0
        %2779 = vmatpush1.xpose.msra.mxu0 0.0
        %2780 = vmatprep.subr.mxu0 0.0
        %2781 = vmatpush1.xpose.msra.mxu0 0.0
        %2782 = vmatprep.mubr.f32.mxu0 0.0
        %2783 = vmatmul.mubr.f32.gmra.mrb[0].mxu0 %v2705
        %v2784 = vpop.f32.mrb[0].mxu0
        %v2785 = vadd.f32 0.0, %v2784
        %v2786 = vpop.f32.mrb[0].mxu0
        %2787 = vmatprep.mubr.f32.mxu0 0.0
        %2788 = vmatmul.mubr.f32.gmra.mrb[0].mxu0 %v2708
        %v2789 = vpop.f32.mrb[0].mxu0
        %v2790 = vadd.f32 0.0, %v2789
        %v2791 = vpop.f32.mrb[0].mxu0
        %2792 = vmatprep.mubr.f32.mxu0 0.0
        %2793 = vmatmul.mubr.f32.gmra.mrb[0].mxu0 %v2711
        %v2794 = vpop.f32.mrb[0].mxu0
        %v2795 = vadd.f32 0.0, %v2794
        %v2796 = vpop.f32.mrb[0].mxu0
        %2797 = vmatprep.mubr.f32.mxu0 0.0
        %2798 = vmatmul.mubr.f32.gmra.mrb[0].mxu0 %v2714
        %v2799 = vpop.f32.mrb[0].mxu0
        %v2800 = vadd.f32 0.0, %v2799
        %v2801 = vpop.f32.mrb[0].mxu0
        %2802 = vdwg.mxu0
        %v2803 = vsel %vm857, %v2785, -inf
        %2804 = vmax.xlane.f32.xlu0 %v2803
        %v2805 = vpop.xlane.xlu0 %2804
        %v2806 = vsel %vm857, %v2790, -inf
        %2807 = vmax.xlane.f32.xlu0 %v2806
        %v2808 = vpop.xlane.xlu0 %2807
        %v2809 = vsel %vm857, %v2795, -inf
        %2810 = vmax.xlane.f32.xlu0 %v2809
        %v2811 = vpop.xlane.xlu0 %2810
        %v2812 = vsel %vm857, %v2800, -inf
        %2813 = vmax.xlane.f32.xlu0 %v2812
        %v2814 = vpop.xlane.xlu0 %2813
        %v2815 = vsub.f32 %v2785, %v2805
        %v2816 = vsub.f32 %v2790, %v2808
        %v2817 = vsub.f32 %v2795, %v2811
        %v2818 = vsub.f32 %v2800, %v2814
        %v2819 = vmul.f32 %v2815, 1.442695
        %v2820 = vpow.pop %v2819
        %v2821 = vmul.f32 %v2816, 1.442695
        %v2822 = vpow.pop %v2821
        %v2823 = vmul.f32 %v2817, 1.442695
        %v2824 = vpow.pop %v2823
        %v2825 = vmul.f32 %v2818, 1.442695
        %v2826 = vpow.pop %v2825
        %v2827 = vsel %vm857, %v2820, 0.0
        %2828 = vadd.xlane.f32.xlu0 %v2827
        %v2829 = vpop.xlane.xlu0 %2828
        %v2830 = vsel %vm857, %v2822, 0.0
        %2831 = vadd.xlane.f32.xlu0 %v2830
        %v2832 = vpop.xlane.xlu0 %2831
        %v2833 = vsel %vm857, %v2824, 0.0
        %2834 = vadd.xlane.f32.xlu0 %v2833
        %v2835 = vpop.xlane.xlu0 %2834
        %v2836 = vsel %vm857, %v2826, 0.0
        %2837 = vadd.xlane.f32.xlu0 %v2836
        %v2838 = vpop.xlane.xlu0 %2837
        %v2839 = vrcp.pop %v2829
        %v2840 = vrcp.pop %v2832
        %v2841 = vrcp.pop %v2835
        %v2842 = vrcp.pop %v2838
        %v2843 = vmul.f32 %v2820, %v2839
        %v2844 = vmul.f32 %v2822, %v2840
        %v2845 = vmul.f32 %v2824, %v2841
        %v2846 = vmul.f32 %v2826, %v2842
        %2847 = vrot.lane.b32.xlu0 %v2555, 88
        %v2848 = vpop.permute.xlu0 %2847
        %v2851 = vsel %vm857, %v2843, 0
        %v2854 = vsel %vm857, %v2844, 0
        %v2857 = vsel %vm857, %v2845, 0
        %v2860 = vsel %vm857, %v2846, 0
        %2862 = vmatprep.subr.mxu0 0.0
        %2863 = vmatpush1.msra.mxu0 %v2848
        %2864 = vmatprep.subr.mxu0 0.0
        %2865 = vmatpush1.msra.mxu0 0.0
        %2866 = vmatprep.subr.mxu0 0.0
        %2867 = vmatpush1.msra.mxu0 0.0
        %2868 = vmatprep.subr.mxu0 0.0
        %2869 = vmatpush1.msra.mxu0 0.0
        %2870 = vmatprep.subr.mxu0 0.0
        %2871 = vmatpush1.msra.mxu0 0.0
        %2872 = vmatprep.subr.mxu0 0.0
        %2873 = vmatpush1.msra.mxu0 0.0
        %2874 = vmatprep.subr.mxu0 0.0
        %2875 = vmatpush1.msra.mxu0 0.0
        %2876 = vmatprep.subr.mxu0 0.0
        %2877 = vmatpush1.msra.mxu0 0.0
        %2878 = vmatprep.subr.mxu0 0.0
        %2879 = vmatpush1.msra.mxu0 0.0
        %2880 = vmatprep.subr.mxu0 0.0
        %2881 = vmatpush1.msra.mxu0 0.0
        %2882 = vmatprep.subr.mxu0 0.0
        %2883 = vmatpush1.msra.mxu0 0.0
        %2884 = vmatprep.subr.mxu0 0.0
        %2885 = vmatpush1.msra.mxu0 0.0
        %2886 = vmatprep.subr.mxu0 0.0
        %2887 = vmatpush1.msra.mxu0 0.0
        %2888 = vmatprep.subr.mxu0 0.0
        %2889 = vmatpush1.msra.mxu0 0.0
        %2890 = vmatprep.subr.mxu0 0.0
        %2891 = vmatpush1.msra.mxu0 0.0
        %2892 = vmatprep.subr.mxu0 0.0
        %2893 = vmatpush1.msra.mxu0 0.0
        %2894 = vmatprep.subr.mxu0 0.0
        %2895 = vmatpush1.msra.mxu0 0.0
        %2896 = vmatprep.subr.mxu0 0.0
        %2897 = vmatpush1.msra.mxu0 0.0
        %2898 = vmatprep.subr.mxu0 0.0
        %2899 = vmatpush1.msra.mxu0 0.0
        %2900 = vmatprep.subr.mxu0 0.0
        %2901 = vmatpush1.msra.mxu0 0.0
        %2902 = vmatprep.subr.mxu0 0.0
        %2903 = vmatpush1.msra.mxu0 0.0
        %2904 = vmatprep.subr.mxu0 0.0
        %2905 = vmatpush1.msra.mxu0 0.0
        %2906 = vmatprep.subr.mxu0 0.0
        %2907 = vmatpush1.msra.mxu0 0.0
        %2908 = vmatprep.subr.mxu0 0.0
        %2909 = vmatpush1.msra.mxu0 0.0
        %2910 = vmatprep.subr.mxu0 0.0
        %2911 = vmatpush1.msra.mxu0 0.0
        %2912 = vmatprep.subr.mxu0 0.0
        %2913 = vmatpush1.msra.mxu0 0.0
        %2914 = vmatprep.subr.mxu0 0.0
        %2915 = vmatpush1.msra.mxu0 0.0
        %2916 = vmatprep.subr.mxu0 0.0
        %2917 = vmatpush1.msra.mxu0 0.0
        %2918 = vmatprep.subr.mxu0 0.0
        %2919 = vmatpush1.msra.mxu0 0.0
        %2920 = vmatprep.subr.mxu0 0.0
        %2921 = vmatpush1.msra.mxu0 0.0
        %2922 = vmatprep.subr.mxu0 0.0
        %2923 = vmatpush1.msra.mxu0 0.0
        %2924 = vmatprep.subr.mxu0 0.0
        %2925 = vmatpush1.msra.mxu0 0.0
        %2926 = vmatprep.mubr.f32.mxu0 0.0
        %2927 = vmatmul.mubr.f32.gmra.mrb[0].mxu0 %v2851
        %v2928 = vpop.f32.mrb[0].mxu0
        %v2929 = vadd.f32 0.0, %v2928
        %v2930 = vpop.f32.mrb[0].mxu0
        %2931 = vmatprep.mubr.f32.mxu0 0.0
        %2932 = vmatmul.mubr.f32.gmra.mrb[0].mxu0 %v2854
        %v2933 = vpop.f32.mrb[0].mxu0
        %v2934 = vadd.f32 0.0, %v2933
        %v2935 = vpop.f32.mrb[0].mxu0
        %2936 = vmatprep.mubr.f32.mxu0 0.0
        %2937 = vmatmul.mubr.f32.gmra.mrb[0].mxu0 %v2857
        %v2938 = vpop.f32.mrb[0].mxu0
        %v2939 = vadd.f32 0.0, %v2938
        %v2940 = vpop.f32.mrb[0].mxu0
        %2941 = vmatprep.mubr.f32.mxu0 0.0
        %2942 = vmatmul.mubr.f32.gmra.mrb[0].mxu0 %v2860
        %v2943 = vpop.f32.mrb[0].mxu0
        %v2944 = vadd.f32 0.0, %v2943
        %v2945 = vpop.f32.mrb[0].mxu0
        %2946 = vdwg.mxu0
        %2948 = vrot.lane.b32.xlu0 %v2934, 8
        %v2949 = vpop.permute.xlu0 %2948
        %2952 = vrot.lane.b32.xlu0 %v2939, 16
        %v2953 = vpop.permute.xlu0 %2952
        %2956 = vrot.lane.b32.xlu0 %v2944, 24
        %v2957 = vpop.permute.xlu0 %2956
        %v2959 = vsel %vm857, %v2929, %v2949
        %v2960 = vsel %vm957, %v2959, %v2953
        %v2961 = vsel %vm1119, %v2960, %v2957
        %v2962 = vxor.u32 %v2557, 2147483648
        %v2963 = vxor.u32 %v2626, 2147483648
        %v2964 = vmul.f32 %v2962, 1.442695
        %v2965 = vpow.pop %v2964
        %v2966 = vmul.f32 %v2963, 1.442695
        %v2967 = vpow.pop %v2966
        %v2968 = vadd.f32 %v2965, 1.0
        %v2969 = vadd.f32 %v2967, 1.0
        %v2970 = vrcp.pop %v2968
        %v2971 = vmul.f32 1.0, %v2970
        %v2972 = vrcp.pop %v2969
        %v2973 = vmul.f32 1.0, %v2972
        %v2974 = vmul.f32 %v2557, %v2971
        %v2975 = vmul.f32 %v2626, %v2973
        %v2976 = vmul.f32 %v2974, %v2555
        %v2977 = vmul.f32 %v2975, %v2557
        %2980 = vrot.lane.b32.xlu0 %v2976, 112
        %v2981 = vpop.permute.xlu0 %2980
        %2982 = vrot.lane.b32.xlu0 %v2977, 112
        %v2983 = vpop.permute.xlu0 %2982
        %v2984 = vsel %vm1776, %v2981, %v2983
        %v2986 = vsel %vm582, %v2961, %v2984
        %s2987 = scalar_lea.vmem %s15, 160
        %v2988 = vld [vmem:[%s2987] sm:$0xff]
        %v2989 = vld [vmem:[%s2987 + $0x8] sm:$0xff]
        %v2990 = vld [vmem:[%s2987 + $0x10] sm:$0xff]
        %v2991 = vld [vmem:[%s2987 + $0x18] sm:$0xff]
        %v2992 = vld [vmem:[%s2987 + $0x20] sm:$0xff]
        %v2993 = vld [vmem:[%s2987 + $0x28] sm:$0xff]
        %v2994 = vld [vmem:[%s2987 + $0x30] sm:$0xff]
        %v2995 = vld [vmem:[%s2987 + $0x38] sm:$0xff]
        %v2996 = vld [vmem:[%s2987 + $0x40] sm:$0xff]
        %v2997 = vld [vmem:[%s2987 + $0x48] sm:$0xff]
        %v2998 = vld [vmem:[%s2987 + $0x50] sm:$0xff]
        %v2999 = vld [vmem:[%s2987 + $0x58] sm:$0xff]
        %v3000 = vld [vmem:[%s2987 + $0x60] sm:$0xff]
        %v3001 = vld [vmem:[%s2987 + $0x68] sm:$0xff]
        %v3002 = vld [vmem:[%s2987 + $0x70] sm:$0xff]
        %v3003 = vld [vmem:[%s2987 + $0x78] sm:$0xff]
        %v3004 = vld [vmem:[%s2987 + $0x80] sm:$0xff]
        %v3005 = vld [vmem:[%s2987 + $0x88] sm:$0xff]
        %v3006 = vld [vmem:[%s2987 + $0x90] sm:$0xff]
        %v3007 = vld [vmem:[%s2987 + $0x98] sm:$0xff]
        %v3008 = vsel %vm582, %v2983, 0
        %3010 = vmatprep.subr.mxu0 0.0
        %3011 = vmatpush1.msra.mxu0 %v2988
        %3012 = vmatprep.subr.mxu0 0.0
        %3013 = vmatpush1.msra.mxu0 %v2989
        %3014 = vmatprep.subr.mxu0 0.0
        %3015 = vmatpush1.msra.mxu0 %v2990
        %3016 = vmatprep.subr.mxu0 0.0
        %3017 = vmatpush1.msra.mxu0 %v2991
        %3018 = vmatprep.subr.mxu0 0.0
        %3019 = vmatpush1.msra.mxu0 %v2992
        %3020 = vmatprep.subr.mxu0 0.0
        %3021 = vmatpush1.msra.mxu0 %v2993
        %3022 = vmatprep.subr.mxu0 0.0
        %3023 = vmatpush1.msra.mxu0 %v2994
        %3024 = vmatprep.subr.mxu0 0.0
        %3025 = vmatpush1.msra.mxu0 %v2995
        %3026 = vmatprep.subr.mxu0 0.0
        %3027 = vmatpush1.msra.mxu0 %v2996
        %3028 = vmatprep.subr.mxu0 0.0
        %3029 = vmatpush1.msra.mxu0 %v2997
        %3030 = vmatprep.subr.mxu0 0.0
        %3031 = vmatpush1.msra.mxu0 %v2998
        %3032 = vmatprep.subr.mxu0 0.0
        %3033 = vmatpush1.msra.mxu0 %v2999
        %3034 = vmatprep.subr.mxu0 0.0
        %3035 = vmatpush1.msra.mxu0 %v3000
        %3036 = vmatprep.subr.mxu0 0.0
        %3037 = vmatpush1.msra.mxu0 %v3001
        %3038 = vmatprep.subr.mxu0 0.0
        %3039 = vmatpush1.msra.mxu0 %v3002
        %3040 = vmatprep.subr.mxu0 0.0
        %3041 = vmatpush1.msra.mxu0 %v3003
        %3042 = vmatprep.subr.mxu0 0.0
        %3043 = vmatpush1.msra.mxu0 %v3004
        %3044 = vmatprep.subr.mxu0 0.0
        %3045 = vmatpush1.msra.mxu0 %v3005
        %3046 = vmatprep.subr.mxu0 0.0
        %3047 = vmatpush1.msra.mxu0 %v3006
        %3048 = vmatprep.subr.mxu0 0.0
        %3049 = vmatpush1.msra.mxu0 %v3007
        %3050 = vmatprep.subr.mxu0 0.0
        %3051 = vmatpush1.msra.mxu0 0.0
        %3052 = vmatprep.subr.mxu0 0.0
        %3053 = vmatpush1.msra.mxu0 0.0
        %3054 = vmatprep.subr.mxu0 0.0
        %3055 = vmatpush1.msra.mxu0 0.0
        %3056 = vmatprep.subr.mxu0 0.0
        %3057 = vmatpush1.msra.mxu0 0.0
        %3058 = vmatprep.subr.mxu0 0.0
        %3059 = vmatpush1.msra.mxu0 0.0
        %3060 = vmatprep.subr.mxu0 0.0
        %3061 = vmatpush1.msra.mxu0 0.0
        %3062 = vmatprep.subr.mxu0 0.0
        %3063 = vmatpush1.msra.mxu0 0.0
        %3064 = vmatprep.subr.mxu0 0.0
        %3065 = vmatpush1.msra.mxu0 0.0
        %3066 = vmatprep.subr.mxu0 0.0
        %3067 = vmatpush1.msra.mxu0 0.0
        %3068 = vmatprep.subr.mxu0 0.0
        %3069 = vmatpush1.msra.mxu0 0.0
        %3070 = vmatprep.subr.mxu0 0.0
        %3071 = vmatpush1.msra.mxu0 0.0
        %3072 = vmatprep.subr.mxu0 0.0
        %3073 = vmatpush1.msra.mxu0 0.0
        %3074 = vmatprep.mubr.f32.mxu0 %v3008
        %3075 = vmatmul.mubr.f32.gmra.mrb[0].mxu0 %v2986
        %v3076 = vpop.f32.mrb[0].mxu0
        %v3077 = vadd.f32 %v2438, %v3076
        %v3078 = vpop.f32.mrb[0].mxu0
        %3079 = vdwg.mxu0
        %3080 = vst.msk [vmem:[%s544] sm:$0xff] %vm582, %v3077
        %s3081 = sand.u32 %s389, 1
        %s3082 = scalar_lea.sflag [#allocation3], %s3081
        %s3083 = sand.u32 %s389, 1
        %s3084 = smul.addr %s3083, 8
        %s3085 = scalar_lea.vmem [#allocation2], %s3084
        // Predicated region
        $region85: #{tpu_custom_call.1} parent=83 // pred_check
          %p3086 = pneg %p399
        $region86: #{tpu_custom_call.1} parent=83 // pred_check_branch
          %3088 = sbr.rel (%p3086) target = $region88
        $region87: #{tpu_custom_call.1} parent=83 // pred_region
          %s3090 = ssub.s32 128, 128
          %3091 = vsyncadd %s3082, %s3090
          %s3092 = smul.addr %s30, 128
          %s3093 = scalar_lea.hbm %s16, %s3092
          %s3095 = sshll.u32 %s3085, 4
          %s3096 = int_to_ptr.vmem [resolvable:$true] %s3095
          %3098 = dma.vmem_to_hbm [thread:$0]  %s3096, 128, %s3093, %s3082
        $region88: #{tpu_custom_call.1} parent=83 // pred_fallthru
          _
      $region84: #{tpu_custom_call.1} parent=5 // pred_fallthru
        _
      %p3099 = scmp.le.s32.totalorder 2, %s25
      // Predicated region
      $region89: #{tpu_custom_call.1} parent=5 // pred_check
        %p3100 = pneg %p3099
      $region90: #{tpu_custom_call.1} parent=5 // pred_check_branch
        %3102 = sbr.rel (%p3100) target = $region92
      $region91: #{tpu_custom_call.1} parent=5 // pred_region
        %s3103 = ssub.s32 %s25, 2
        // Predicated region
        $region93: #{tpu_custom_call.1} parent=91 // pred_check
          %p3104 = pneg %p405
        $region94: #{tpu_custom_call.1} parent=91 // pred_check_branch
          %3106 = sbr.rel (%p3104) target = $region96
        $region95: #{tpu_custom_call.1} parent=91 // pred_region
          %s3107 = sand.u32 %s390, 1
          %s3108 = scalar_lea.sflag [#allocation3], %s3107
          %s3109 = sand.u32 %s390, 1
          %s3110 = smul.addr %s3109, 8
          %s3111 = scalar_lea.vmem [#allocation2], %s3110
          %3112 = dma.done %s3108, 128
        $region96: #{tpu_custom_call.1} parent=91 // pred_fallthru
          _
      $region92: #{tpu_custom_call.1} parent=5 // pred_fallthru
        _
    $region6: #{tpu_custom_call.1} parent=1 // loop_footer
      %s29 = sadd.s32 1, %s25
    $region7: #{tpu_custom_call.1} parent=1 // loop_footer_branch
      %24 = sbr.rel target = $region3
    $region8: #{tpu_custom_call.1} parent=1 // loop_exit
      _
    %3113 = vsyncpa [#allocation3], 1
    %s3114 = scalar_lea.sflag [#allocation3], 1
    %3115 = vsyncpa %s3114, 1

</llo_original>
